<compile_context>
chip_gen: v7x
topology: tpu7x:2x2x1
jax: 0.10.0
libtpu: 0.0.40
codegen_flags: <defaults>
</compile_context>

<pallas_src>
import functools

import jax
import jax.numpy as jnp
from jax import lax
from jax.experimental import pallas as pl
from jax.experimental.pallas import tpu as pltpu

LRELU_SLOPE = 0.2
BN_EPS = 1e-5
LANE = 128


def _round_up(x, m):
    return (x + m - 1) // m * m


def _default_max_tm():
    """v7x has two TensorCores per chip: keep a 2-way M split for layer 1 so
    both cores get work.  Single-TC chips (v5e/v6e) run the whole 512-row
    first layer in a single grid step (no megacore to shard across; each
    extra step is ~0.35 us of pure pipeline overhead)."""
    try:
        kind = jax.devices()[0].device_kind.lower()
    except Exception:  # pragma: no cover - defensive; default to single step
        kind = ""
    return 256 if "v7" in kind else 512


MAX_TM = _default_max_tm()


# ----------------------------- Pallas kernels ------------------------------ #
def _conv_kernel(x_ref, w_ref, b_ref, y_ref, *, apply_lrelu):
    """Y = X @ W + b (bf16 MXU operands, fp32 accumulate), optional LeakyReLU."""
    y = jnp.dot(x_ref[...], w_ref[...],
                preferred_element_type=jnp.float32) + b_ref[...]
    if apply_lrelu:
        y = jnp.where(y > 0, y, LRELU_SLOPE * y)
    y_ref[...] = y.astype(y_ref.dtype)


def _conv_bn_lrelu_kernel(x_ref, w_ref, b_ref, g_ref, beta_ref, o_ref, *,
                          n_pad, inv_m):
    """Fused conv + bias + train-mode BatchNorm + LeakyReLU in ONE call.

    The whole (Mp, Cp) Y tile is resident, so statistics + normalization
    happen with no intermediate HBM traffic.  Padding rows of X are exactly
    zero, hence their conv output is exactly `b`; their contribution to the
    statistics is subtracted analytically.  Variance uses the two-pass form
    (sum of centered squares) and is clamped at zero.
    """
    b = b_ref[...]                                          # (1, Cp) f32
    y = jnp.dot(x_ref[...], w_ref[...],
                preferred_element_type=jnp.float32) + b     # (Mp, Cp) f32

    s = jnp.sum(y, axis=0, keepdims=True) - n_pad * b       # valid-row sum
    mean = s * inv_m
    d = y - mean
    db = b - mean
    ss = jnp.sum(d * d, axis=0, keepdims=True) - n_pad * (db * db)
    var = jnp.maximum(ss * inv_m, 0.0)

    scale = lax.rsqrt(var + BN_EPS) * g_ref[...]
    z = d * scale + beta_ref[...]
    z = jnp.where(z > 0, z, LRELU_SLOPE * z)
    o_ref[...] = z.astype(o_ref.dtype)


# -------------------------------- JAX glue --------------------------------- #
def _im2col(x, k, stride, pad):
    """x: (N, H, W, C) -> (N*Ho*Wo, k*k*C); patch feature order (kh, kw, cin)."""
    N, H, W, C = x.shape
    xp = jnp.pad(x, ((0, 0), (pad, pad), (pad, pad), (0, 0)))
    Ho = (H + 2 * pad - k) // stride + 1
    Wo = (W + 2 * pad - k) // stride + 1
    cols = []
    for kh in range(k):
        for kw in range(k):
            cols.append(xp[:, kh:kh + stride * Ho:stride,
                           kw:kw + stride * Wo:stride, :])
    X = jnp.concatenate(cols, axis=-1)                      # (N, Ho, Wo, k*k*C)
    return X.reshape(N * Ho * Wo, k * k * C), (N, Ho, Wo)


def conv_block(x, w, b, gamma, beta, *, stride, use_bn, use_lrelu,
               out_dtype, k=4, pad=1):
    """x: (N, H, W, Cin); w: (k, k, Cin, Cout). Returns (N, Ho, Wo, Cout)."""
    Cin, Cout = w.shape[2], w.shape[3]
    X, (N, Ho, Wo) = _im2col(x.astype(jnp.bfloat16), k, stride, pad)
    M, Kc = X.shape

    Kp = _round_up(Kc, LANE)          # lane-aligned contraction dim
    Cp = _round_up(Cout, LANE)        # lane-dense output width

    Wp = jnp.pad(w.reshape(Kc, Cout).astype(jnp.bfloat16),
                 ((0, Kp - Kc), (0, Cp - Cout)))
    bp = jnp.pad(b.astype(jnp.float32), (0, Cp - Cout)).reshape(1, Cp)

    if use_bn:
        # Single fused call (gm == 1): every BN layer at these shapes has
        # Mp <= 128 and Cp == 128, so the full fp32 Y tile fits in VMEM.
        Mp = _round_up(M, 16)
        Xp = jnp.pad(X, ((0, Mp - M), (0, Kp - Kc)))
        gp = jnp.pad(gamma.astype(jnp.float32), (0, Cp - Cout)).reshape(1, Cp)
        bep = jnp.pad(beta.astype(jnp.float32), (0, Cp - Cout)).reshape(1, Cp)

        kern = functools.partial(_conv_bn_lrelu_kernel,
                                 n_pad=float(Mp - M), inv_m=1.0 / float(M))
        out = pl.pallas_call(
            kern,
            out_shape=jax.ShapeDtypeStruct((Mp, Cp), out_dtype),
        )(Xp, Wp, bp, gp, bep)
    else:
        TM = min(MAX_TM, _round_up(M, 16))
        Mp = _round_up(M, TM)
        gm = Mp // TM
        Xp = jnp.pad(X, ((0, Mp - M), (0, Kp - Kc)))

        kern = functools.partial(_conv_kernel, apply_lrelu=use_lrelu)
        out = pl.pallas_call(
            kern,
            out_shape=jax.ShapeDtypeStruct((Mp, Cp), out_dtype),
            grid=(gm,),
            in_specs=[pl.BlockSpec((TM, Kp), lambda i: (i, 0)),
                      pl.BlockSpec((Kp, Cp), lambda i: (0, 0)),
                      pl.BlockSpec((1, Cp), lambda i: (0, 0))],
            out_specs=pl.BlockSpec((TM, Cp), lambda i: (i, 0)),
            compiler_params=pltpu.CompilerParams(
                dimension_semantics=("parallel",)),
        )(Xp, Wp, bp)

    return out[:M, :Cout].reshape(N, Ho, Wo, Cout)


# --------------------------- Parameter construction ------------------------ #
def init_discriminator_params(key, in_ch, ndf=8, n_layers=3):
    """Mirror the torch __init__ layer structure (deterministic synthetic init)."""
    specs = [(in_ch, ndf, 2, False, True)]                      # block1
    nf_mult = 1
    for n in range(1, n_layers):                                # block2
        nf_mult_prev, nf_mult = nf_mult, min(2 ** n, 8)
        specs.append((ndf * nf_mult_prev, ndf * nf_mult, 2, True, True))
    nf_mult_prev, nf_mult = nf_mult, min(2 ** n_layers, 8)      # block3
    specs.append((ndf * nf_mult_prev, ndf * nf_mult, 1, True, True))
    specs.append((ndf * nf_mult, 1, 1, False, False))           # final conv

    params = []
    for cin, cout, stride, use_bn, use_lrelu in specs:
        key, k1, k2, k3, k4 = jax.random.split(key, 5)
        params.append(dict(
            w=0.05 * jax.random.normal(k1, (4, 4, cin, cout), jnp.float32),
            b=0.05 * jax.random.normal(k2, (cout,), jnp.float32),
            gamma=1.0 + 0.1 * jax.random.normal(k3, (cout,), jnp.float32),
            beta=0.1 * jax.random.normal(k4, (cout,), jnp.float32),
            stride=stride, use_bn=use_bn, use_lrelu=use_lrelu))
    return params


def discriminator_forward(x_nchw, params):
    x = jnp.transpose(x_nchw, (0, 2, 3, 1))        # NCHW -> NHWC
    n_total = len(params)
    for li, p in enumerate(params):
        last = li == n_total - 1
        x = conv_block(x, p["w"], p["b"], p["gamma"], p["beta"],
                       stride=p["stride"], use_bn=p["use_bn"],
                       use_lrelu=p["use_lrelu"],
                       out_dtype=jnp.float32 if last else jnp.bfloat16)
    return jnp.transpose(x, (0, 3, 1, 2)).astype(jnp.float32)   # NHWC -> NCHW


# ------------------------ Pure-JAX reference (sanity) ----------------------- #
def reference_forward(x_nchw, params):
    x = jnp.transpose(x_nchw, (0, 2, 3, 1))
    for p in params:
        y = lax.conv_general_dilated(
            x, p["w"], window_strides=(p["stride"], p["stride"]),
            padding=((1, 1), (1, 1)),
            dimension_numbers=("NHWC", "HWIO", "NHWC")) + p["b"]
        if p["use_bn"]:
            mean = jnp.mean(y, axis=(0, 1, 2), keepdims=True)
            var = jnp.mean((y - mean) ** 2, axis=(0, 1, 2), keepdims=True)
            y = (y - mean) * lax.rsqrt(var + BN_EPS) * p["gamma"] + p["beta"]
        if p["use_lrelu"]:
            y = jnp.where(y > 0, y, LRELU_SLOPE * y)
        x = y
    return jnp.transpose(x, (0, 3, 1, 2))


if __name__ == "__main__":
    key = jax.random.PRNGKey(0)
    kx, kp = jax.random.split(key)

    # Small shapes: batch=2, in_ch=4, spatial=32 (minimum spatial keeping the
    # final 4x4/s1/p1 convs non-empty), ndf=8, n_layers=3.
    N, in_ch, H, W = 2, 4, 32, 32
    x = jax.random.normal(kx, (N, in_ch, H, W), jnp.float32)
    params = init_discriminator_params(kp, in_ch=in_ch, ndf=8, n_layers=3)

    fwd = jax.jit(lambda xx: discriminator_forward(xx, params))
    out = jax.block_until_ready(fwd(x))
    assert out.shape == (N, 1, 2, 2), out.shape

    ref = reference_forward(x, params)
    max_err = float(jnp.max(jnp.abs(out - ref)))
    # bf16 MXU operands + bf16 inter-layer activations => looser tolerance vs.
    # the pure-fp32 reference (accumulation stays fp32).
    if not jnp.allclose(out, ref, rtol=5e-2, atol=5e-2):
        raise AssertionError(f"Pallas vs reference mismatch, max abs err {max_err}")

    print("KERNEL_OK")
</pallas_src>

<mosaic_0001>
module attributes {stable_mosaic.version = 11 : i64} {
  func.func @_conv_kernel(%arg0: i32, %arg1: memref<512x128xbf16, #tpu.memory_space<vmem>>, %arg2: memref<128x128xbf16, #tpu.memory_space<vmem>>, %arg3: memref<1x128xf32, #tpu.memory_space<vmem>>, %arg4: memref<512x128xbf16, #tpu.memory_space<vmem>>) attributes {dimension_semantics = [#tpu.dimension_semantics<parallel>], iteration_bounds = array<i64: 1>, scalar_prefetch = 0 : i64, scratch_operands = 0 : i64, tpu.core_type = #tpu.core_type<tc>, window_params = [{transform_indices = @transform_0, window_bounds = array<i64: 512, 128>}, {pipeline_mode = #tpu.pipeline_mode<synchronous>, transform_indices = @transform_1, window_bounds = array<i64: 128, 128>}, {pipeline_mode = #tpu.pipeline_mode<synchronous>, transform_indices = @transform_2, window_bounds = array<i64: 1, 128>}, {transform_indices = @transform_3, window_bounds = array<i64: 512, 128>}]} {
    %c0 = arith.constant 0 : index
    %c0_0 = arith.constant 0 : index
    %0 = vector.load %arg1[%c0, %c0_0] : memref<512x128xbf16, #tpu.memory_space<vmem>>, vector<512x128xbf16>
    %c0_1 = arith.constant 0 : index
    %c0_2 = arith.constant 0 : index
    %1 = vector.load %arg2[%c0_1, %c0_2] : memref<128x128xbf16, #tpu.memory_space<vmem>>, vector<128x128xbf16>
    %cst = arith.constant dense<0.000000e+00> : vector<512x128xf32>
    %2 = tpu.matmul %0, %1, %cst {dimension_numbers = #tpu.dot_dimension_numbers<[1], [0], [0], [1], [0, 0, 1, 1], [], []>} : vector<512x128xbf16>, vector<128x128xbf16>, vector<512x128xf32> -> vector<512x128xf32>
    %c0_3 = arith.constant 0 : index
    %c0_4 = arith.constant 0 : index
    %3 = vector.load %arg3[%c0_3, %c0_4] : memref<1x128xf32, #tpu.memory_space<vmem>>, vector<1x128xf32>
    %4 = vector.broadcast %3 : vector<1x128xf32> to vector<512x128xf32>
    %5 = arith.addf %2, %4 : vector<512x128xf32>
    %cst_5 = arith.constant 0.000000e+00 : f32
    %6 = vector.broadcast %cst_5 : f32 to vector<512x128xf32>
    %7 = arith.cmpf ogt, %5, %6 : vector<512x128xf32>
    %cst_6 = arith.constant 2.000000e-01 : f32
    %8 = vector.broadcast %cst_6 : f32 to vector<512x128xf32>
    %9 = arith.mulf %8, %5 : vector<512x128xf32>
    %10 = arith.select %7, %5, %9 : vector<512x128xi1>, vector<512x128xf32>
    %11 = arith.truncf %10 : vector<512x128xf32> to vector<512x128xbf16>
    %c0_7 = arith.constant 0 : index
    %c0_8 = arith.constant 0 : index
    %12 = vector.load %arg4[%c0_7, %c0_8] : memref<512x128xbf16, #tpu.memory_space<vmem>>, vector<512x128xbf16>
    tpu.vector_store %arg4[%c0_7, %c0_8], %11 {strides = array<i32>} : memref<512x128xbf16, #tpu.memory_space<vmem>>, vector<512x128xbf16>,
    return
  }
  func.func @transform_0(%arg0: i32) -> (i32, i32) {
    %c0_i32 = arith.constant 0 : i32
    %c0_i32_0 = arith.constant 0 : i32
    return %arg0, %c0_i32 : i32, i32
  }
  func.func @transform_1(%arg0: i32) -> (i32, i32) {
    %c0_i32 = arith.constant 0 : i32
    %c0_i32_0 = arith.constant 0 : i32
    %c0_i32_1 = arith.constant 0 : i32
    return %c0_i32, %c0_i32_0 : i32, i32
  }
  func.func @transform_2(%arg0: i32) -> (i32, i32) {
    %c0_i32 = arith.constant 0 : i32
    %c0_i32_0 = arith.constant 0 : i32
    %c0_i32_1 = arith.constant 0 : i32
    return %c0_i32, %c0_i32_0 : i32, i32
  }
  func.func @transform_3(%arg0: i32) -> (i32, i32) {
    %c0_i32 = arith.constant 0 : i32
    %c0_i32_0 = arith.constant 0 : i32
    return %arg0, %c0_i32 : i32, i32
  }
}

module attributes {stable_mosaic.version = 11 : i64} {
  func.func @_conv_bn_lrelu_kernel(%arg0: memref<128x128xbf16, #tpu.memory_space<vmem>>, %arg1: memref<128x128xbf16, #tpu.memory_space<vmem>>, %arg2: memref<1x128xf32, #tpu.memory_space<vmem>>, %arg3: memref<1x128xf32, #tpu.memory_space<vmem>>, %arg4: memref<1x128xf32, #tpu.memory_space<vmem>>, %arg5: memref<128x128xbf16, #tpu.memory_space<vmem>>) attributes {dimension_semantics = [], scalar_prefetch = 0 : i64, scratch_operands = 0 : i64, tpu.core_type = #tpu.core_type<tc>} {
    %c0 = arith.constant 0 : index
    %c0_0 = arith.constant 0 : index
    %0 = vector.load %arg2[%c0, %c0_0] : memref<1x128xf32, #tpu.memory_space<vmem>>, vector<1x128xf32>
    %c0_1 = arith.constant 0 : index
    %c0_2 = arith.constant 0 : index
    %1 = vector.load %arg0[%c0_1, %c0_2] : memref<128x128xbf16, #tpu.memory_space<vmem>>, vector<128x128xbf16>
    %c0_3 = arith.constant 0 : index
    %c0_4 = arith.constant 0 : index
    %2 = vector.load %arg1[%c0_3, %c0_4] : memref<128x128xbf16, #tpu.memory_space<vmem>>, vector<128x128xbf16>
    %cst = arith.constant dense<0.000000e+00> : vector<128x128xf32>
    %3 = tpu.matmul %1, %2, %cst {dimension_numbers = #tpu.dot_dimension_numbers<[1], [0], [0], [1], [0, 0, 1, 1], [], []>} : vector<128x128xbf16>, vector<128x128xbf16>, vector<128x128xf32> -> vector<128x128xf32>
    %4 = vector.broadcast %0 : vector<1x128xf32> to vector<128x128xf32>
    %5 = arith.addf %3, %4 : vector<128x128xf32>
    %cst_5 = arith.constant dense<0.000000e+00> : vector<128xf32>
    %6 = vector.multi_reduction <add>, %5, %cst_5 [0] : vector<128x128xf32> to vector<128xf32>
    %7 = vector.shape_cast %6 : vector<128xf32> to vector<1x128xf32>
    %cst_6 = arith.constant 0.000000e+00 : f32
    %8 = vector.broadcast %cst_6 : f32 to vector<1x128xf32>
    %9 = arith.mulf %8, %0 : vector<1x128xf32>
    %10 = arith.subf %7, %9 : vector<1x128xf32>
    %cst_7 = arith.constant 7.812500e-03 : f32
    %11 = vector.broadcast %cst_7 : f32 to vector<1x128xf32>
    %12 = arith.mulf %10, %11 : vector<1x128xf32>
    %13 = vector.broadcast %12 : vector<1x128xf32> to vector<128x128xf32>
    %14 = arith.subf %5, %13 : vector<128x128xf32>
    %15 = arith.subf %0, %12 : vector<1x128xf32>
    %16 = arith.mulf %14, %14 : vector<128x128xf32>
    %cst_8 = arith.constant dense<0.000000e+00> : vector<128xf32>
    %17 = vector.multi_reduction <add>, %16, %cst_8 [0] : vector<128x128xf32> to vector<128xf32>
    %18 = vector.shape_cast %17 : vector<128xf32> to vector<1x128xf32>
    %19 = arith.mulf %15, %15 : vector<1x128xf32>
    %cst_9 = arith.constant 0.000000e+00 : f32
    %20 = vector.broadcast %cst_9 : f32 to vector<1x128xf32>
    %21 = arith.mulf %20, %19 : vector<1x128xf32>
    %22 = arith.subf %18, %21 : vector<1x128xf32>
    %cst_10 = arith.constant 7.812500e-03 : f32
    %23 = vector.broadcast %cst_10 : f32 to vector<1x128xf32>
    %24 = arith.mulf %22, %23 : vector<1x128xf32>
    %cst_11 = arith.constant 0.000000e+00 : f32
    %25 = vector.broadcast %cst_11 : f32 to vector<1x128xf32>
    %26 = arith.maximumf %24, %25 : vector<1x128xf32>
    %cst_12 = arith.constant 9.99999974E-6 : f32
    %27 = vector.broadcast %cst_12 : f32 to vector<1x128xf32>
    %28 = arith.addf %26, %27 : vector<1x128xf32>
    %29 = math.rsqrt %28 : vector<1x128xf32>
    %c0_13 = arith.constant 0 : index
    %c0_14 = arith.constant 0 : index
    %30 = vector.load %arg3[%c0_13, %c0_14] : memref<1x128xf32, #tpu.memory_space<vmem>>, vector<1x128xf32>
    %31 = arith.mulf %29, %30 : vector<1x128xf32>
    %32 = vector.broadcast %31 : vector<1x128xf32> to vector<128x128xf32>
    %33 = arith.mulf %14, %32 : vector<128x128xf32>
    %c0_15 = arith.constant 0 : index
    %c0_16 = arith.constant 0 : index
    %34 = vector.load %arg4[%c0_15, %c0_16] : memref<1x128xf32, #tpu.memory_space<vmem>>, vector<1x128xf32>
    %35 = vector.broadcast %34 : vector<1x128xf32> to vector<128x128xf32>
    %36 = arith.addf %33, %35 : vector<128x128xf32>
    %cst_17 = arith.constant 0.000000e+00 : f32
    %37 = vector.broadcast %cst_17 : f32 to vector<128x128xf32>
    %38 = arith.cmpf ogt, %36, %37 : vector<128x128xf32>
    %cst_18 = arith.constant 2.000000e-01 : f32
    %39 = vector.broadcast %cst_18 : f32 to vector<128x128xf32>
    %40 = arith.mulf %39, %36 : vector<128x128xf32>
    %41 = arith.select %38, %36, %40 : vector<128x128xi1>, vector<128x128xf32>
    %42 = arith.truncf %41 : vector<128x128xf32> to vector<128x128xbf16>
    %c0_19 = arith.constant 0 : index
    %c0_20 = arith.constant 0 : index
    %43 = vector.load %arg5[%c0_19, %c0_20] : memref<128x128xbf16, #tpu.memory_space<vmem>>, vector<128x128xbf16>
    tpu.vector_store %arg5[%c0_19, %c0_20], %42 {strides = array<i32>} : memref<128x128xbf16, #tpu.memory_space<vmem>>, vector<128x128xbf16>,
    return
  }
}

module attributes {stable_mosaic.version = 11 : i64} {
  func.func @_conv_bn_lrelu_kernel(%arg0: memref<32x256xbf16, #tpu.memory_space<vmem>>, %arg1: memref<256x128xbf16, #tpu.memory_space<vmem>>, %arg2: memref<1x128xf32, #tpu.memory_space<vmem>>, %arg3: memref<1x128xf32, #tpu.memory_space<vmem>>, %arg4: memref<1x128xf32, #tpu.memory_space<vmem>>, %arg5: memref<32x128xbf16, #tpu.memory_space<vmem>>) attributes {dimension_semantics = [], scalar_prefetch = 0 : i64, scratch_operands = 0 : i64, tpu.core_type = #tpu.core_type<tc>} {
    %c0 = arith.constant 0 : index
    %c0_0 = arith.constant 0 : index
    %0 = vector.load %arg2[%c0, %c0_0] : memref<1x128xf32, #tpu.memory_space<vmem>>, vector<1x128xf32>
    %c0_1 = arith.constant 0 : index
    %c0_2 = arith.constant 0 : index
    %1 = vector.load %arg0[%c0_1, %c0_2] : memref<32x256xbf16, #tpu.memory_space<vmem>>, vector<32x256xbf16>
    %c0_3 = arith.constant 0 : index
    %c0_4 = arith.constant 0 : index
    %2 = vector.load %arg1[%c0_3, %c0_4] : memref<256x128xbf16, #tpu.memory_space<vmem>>, vector<256x128xbf16>
    %cst = arith.constant dense<0.000000e+00> : vector<32x128xf32>
    %3 = tpu.matmul %1, %2, %cst {dimension_numbers = #tpu.dot_dimension_numbers<[1], [0], [0], [1], [0, 0, 1, 1], [], []>} : vector<32x256xbf16>, vector<256x128xbf16>, vector<32x128xf32> -> vector<32x128xf32>
    %4 = vector.broadcast %0 : vector<1x128xf32> to vector<32x128xf32>
    %5 = arith.addf %3, %4 : vector<32x128xf32>
    %cst_5 = arith.constant dense<0.000000e+00> : vector<128xf32>
    %6 = vector.multi_reduction <add>, %5, %cst_5 [0] : vector<32x128xf32> to vector<128xf32>
    %7 = vector.shape_cast %6 : vector<128xf32> to vector<1x128xf32>
    %cst_6 = arith.constant 0.000000e+00 : f32
    %8 = vector.broadcast %cst_6 : f32 to vector<1x128xf32>
    %9 = arith.mulf %8, %0 : vector<1x128xf32>
    %10 = arith.subf %7, %9 : vector<1x128xf32>
    %cst_7 = arith.constant 3.125000e-02 : f32
    %11 = vector.broadcast %cst_7 : f32 to vector<1x128xf32>
    %12 = arith.mulf %10, %11 : vector<1x128xf32>
    %13 = vector.broadcast %12 : vector<1x128xf32> to vector<32x128xf32>
    %14 = arith.subf %5, %13 : vector<32x128xf32>
    %15 = arith.subf %0, %12 : vector<1x128xf32>
    %16 = arith.mulf %14, %14 : vector<32x128xf32>
    %cst_8 = arith.constant dense<0.000000e+00> : vector<128xf32>
    %17 = vector.multi_reduction <add>, %16, %cst_8 [0] : vector<32x128xf32> to vector<128xf32>
    %18 = vector.shape_cast %17 : vector<128xf32> to vector<1x128xf32>
    %19 = arith.mulf %15, %15 : vector<1x128xf32>
    %cst_9 = arith.constant 0.000000e+00 : f32
    %20 = vector.broadcast %cst_9 : f32 to vector<1x128xf32>
    %21 = arith.mulf %20, %19 : vector<1x128xf32>
    %22 = arith.subf %18, %21 : vector<1x128xf32>
    %cst_10 = arith.constant 3.125000e-02 : f32
    %23 = vector.broadcast %cst_10 : f32 to vector<1x128xf32>
    %24 = arith.mulf %22, %23 : vector<1x128xf32>
    %cst_11 = arith.constant 0.000000e+00 : f32
    %25 = vector.broadcast %cst_11 : f32 to vector<1x128xf32>
    %26 = arith.maximumf %24, %25 : vector<1x128xf32>
    %cst_12 = arith.constant 9.99999974E-6 : f32
    %27 = vector.broadcast %cst_12 : f32 to vector<1x128xf32>
    %28 = arith.addf %26, %27 : vector<1x128xf32>
    %29 = math.rsqrt %28 : vector<1x128xf32>
    %c0_13 = arith.constant 0 : index
    %c0_14 = arith.constant 0 : index
    %30 = vector.load %arg3[%c0_13, %c0_14] : memref<1x128xf32, #tpu.memory_space<vmem>>, vector<1x128xf32>
    %31 = arith.mulf %29, %30 : vector<1x128xf32>
    %32 = vector.broadcast %31 : vector<1x128xf32> to vector<32x128xf32>
    %33 = arith.mulf %14, %32 : vector<32x128xf32>
    %c0_15 = arith.constant 0 : index
    %c0_16 = arith.constant 0 : index
    %34 = vector.load %arg4[%c0_15, %c0_16] : memref<1x128xf32, #tpu.memory_space<vmem>>, vector<1x128xf32>
    %35 = vector.broadcast %34 : vector<1x128xf32> to vector<32x128xf32>
    %36 = arith.addf %33, %35 : vector<32x128xf32>
    %cst_17 = arith.constant 0.000000e+00 : f32
    %37 = vector.broadcast %cst_17 : f32 to vector<32x128xf32>
    %38 = arith.cmpf ogt, %36, %37 : vector<32x128xf32>
    %cst_18 = arith.constant 2.000000e-01 : f32
    %39 = vector.broadcast %cst_18 : f32 to vector<32x128xf32>
    %40 = arith.mulf %39, %36 : vector<32x128xf32>
    %41 = arith.select %38, %36, %40 : vector<32x128xi1>, vector<32x128xf32>
    %42 = arith.truncf %41 : vector<32x128xf32> to vector<32x128xbf16>
    %c0_19 = arith.constant 0 : index
    %c0_20 = arith.constant 0 : index
    %43 = vector.load %arg5[%c0_19, %c0_20] : memref<32x128xbf16, #tpu.memory_space<vmem>>, vector<32x128xbf16>
    tpu.vector_store %arg5[%c0_19, %c0_20], %42 {strides = array<i32>} : memref<32x128xbf16, #tpu.memory_space<vmem>>, vector<32x128xbf16>,
    return
  }
}

module attributes {stable_mosaic.version = 11 : i64} {
  func.func @_conv_bn_lrelu_kernel(%arg0: memref<32x512xbf16, #tpu.memory_space<vmem>>, %arg1: memref<512x128xbf16, #tpu.memory_space<vmem>>, %arg2: memref<1x128xf32, #tpu.memory_space<vmem>>, %arg3: memref<1x128xf32, #tpu.memory_space<vmem>>, %arg4: memref<1x128xf32, #tpu.memory_space<vmem>>, %arg5: memref<32x128xbf16, #tpu.memory_space<vmem>>) attributes {dimension_semantics = [], scalar_prefetch = 0 : i64, scratch_operands = 0 : i64, tpu.core_type = #tpu.core_type<tc>} {
    %c0 = arith.constant 0 : index
    %c0_0 = arith.constant 0 : index
    %0 = vector.load %arg2[%c0, %c0_0] : memref<1x128xf32, #tpu.memory_space<vmem>>, vector<1x128xf32>
    %c0_1 = arith.constant 0 : index
    %c0_2 = arith.constant 0 : index
    %1 = vector.load %arg0[%c0_1, %c0_2] : memref<32x512xbf16, #tpu.memory_space<vmem>>, vector<32x512xbf16>
    %c0_3 = arith.constant 0 : index
    %c0_4 = arith.constant 0 : index
    %2 = vector.load %arg1[%c0_3, %c0_4] : memref<512x128xbf16, #tpu.memory_space<vmem>>, vector<512x128xbf16>
    %cst = arith.constant dense<0.000000e+00> : vector<32x128xf32>
    %3 = tpu.matmul %1, %2, %cst {dimension_numbers = #tpu.dot_dimension_numbers<[1], [0], [0], [1], [0, 0, 1, 1], [], []>} : vector<32x512xbf16>, vector<512x128xbf16>, vector<32x128xf32> -> vector<32x128xf32>
    %4 = vector.broadcast %0 : vector<1x128xf32> to vector<32x128xf32>
    %5 = arith.addf %3, %4 : vector<32x128xf32>
    %cst_5 = arith.constant dense<0.000000e+00> : vector<128xf32>
    %6 = vector.multi_reduction <add>, %5, %cst_5 [0] : vector<32x128xf32> to vector<128xf32>
    %7 = vector.shape_cast %6 : vector<128xf32> to vector<1x128xf32>
    %cst_6 = arith.constant 1.400000e+01 : f32
    %8 = vector.broadcast %cst_6 : f32 to vector<1x128xf32>
    %9 = arith.mulf %8, %0 : vector<1x128xf32>
    %10 = arith.subf %7, %9 : vector<1x128xf32>
    %cst_7 = arith.constant 0.055555556 : f32
    %11 = vector.broadcast %cst_7 : f32 to vector<1x128xf32>
    %12 = arith.mulf %10, %11 : vector<1x128xf32>
    %13 = vector.broadcast %12 : vector<1x128xf32> to vector<32x128xf32>
    %14 = arith.subf %5, %13 : vector<32x128xf32>
    %15 = arith.subf %0, %12 : vector<1x128xf32>
    %16 = arith.mulf %14, %14 : vector<32x128xf32>
    %cst_8 = arith.constant dense<0.000000e+00> : vector<128xf32>
    %17 = vector.multi_reduction <add>, %16, %cst_8 [0] : vector<32x128xf32> to vector<128xf32>
    %18 = vector.shape_cast %17 : vector<128xf32> to vector<1x128xf32>
    %19 = arith.mulf %15, %15 : vector<1x128xf32>
    %cst_9 = arith.constant 1.400000e+01 : f32
    %20 = vector.broadcast %cst_9 : f32 to vector<1x128xf32>
    %21 = arith.mulf %20, %19 : vector<1x128xf32>
    %22 = arith.subf %18, %21 : vector<1x128xf32>
    %cst_10 = arith.constant 0.055555556 : f32
    %23 = vector.broadcast %cst_10 : f32 to vector<1x128xf32>
    %24 = arith.mulf %22, %23 : vector<1x128xf32>
    %cst_11 = arith.constant 0.000000e+00 : f32
    %25 = vector.broadcast %cst_11 : f32 to vector<1x128xf32>
    %26 = arith.maximumf %24, %25 : vector<1x128xf32>
    %cst_12 = arith.constant 9.99999974E-6 : f32
    %27 = vector.broadcast %cst_12 : f32 to vector<1x128xf32>
    %28 = arith.addf %26, %27 : vector<1x128xf32>
    %29 = math.rsqrt %28 : vector<1x128xf32>
    %c0_13 = arith.constant 0 : index
    %c0_14 = arith.constant 0 : index
    %30 = vector.load %arg3[%c0_13, %c0_14] : memref<1x128xf32, #tpu.memory_space<vmem>>, vector<1x128xf32>
    %31 = arith.mulf %29, %30 : vector<1x128xf32>
    %32 = vector.broadcast %31 : vector<1x128xf32> to vector<32x128xf32>
    %33 = arith.mulf %14, %32 : vector<32x128xf32>
    %c0_15 = arith.constant 0 : index
    %c0_16 = arith.constant 0 : index
    %34 = vector.load %arg4[%c0_15, %c0_16] : memref<1x128xf32, #tpu.memory_space<vmem>>, vector<1x128xf32>
    %35 = vector.broadcast %34 : vector<1x128xf32> to vector<32x128xf32>
    %36 = arith.addf %33, %35 : vector<32x128xf32>
    %cst_17 = arith.constant 0.000000e+00 : f32
    %37 = vector.broadcast %cst_17 : f32 to vector<32x128xf32>
    %38 = arith.cmpf ogt, %36, %37 : vector<32x128xf32>
    %cst_18 = arith.constant 2.000000e-01 : f32
    %39 = vector.broadcast %cst_18 : f32 to vector<32x128xf32>
    %40 = arith.mulf %39, %36 : vector<32x128xf32>
    %41 = arith.select %38, %36, %40 : vector<32x128xi1>, vector<32x128xf32>
    %42 = arith.truncf %41 : vector<32x128xf32> to vector<32x128xbf16>
    %c0_19 = arith.constant 0 : index
    %c0_20 = arith.constant 0 : index
    %43 = vector.load %arg5[%c0_19, %c0_20] : memref<32x128xbf16, #tpu.memory_space<vmem>>, vector<32x128xbf16>
    tpu.vector_store %arg5[%c0_19, %c0_20], %42 {strides = array<i32>} : memref<32x128xbf16, #tpu.memory_space<vmem>>, vector<32x128xbf16>,
    return
  }
}

module attributes {stable_mosaic.version = 11 : i64} {
  func.func @_conv_kernel(%arg0: i32, %arg1: memref<16x1024xbf16, #tpu.memory_space<vmem>>, %arg2: memref<1024x128xbf16, #tpu.memory_space<vmem>>, %arg3: memref<1x128xf32, #tpu.memory_space<vmem>>, %arg4: memref<16x128xf32, #tpu.memory_space<vmem>>) attributes {dimension_semantics = [#tpu.dimension_semantics<parallel>], iteration_bounds = array<i64: 1>, scalar_prefetch = 0 : i64, scratch_operands = 0 : i64, tpu.core_type = #tpu.core_type<tc>, window_params = [{transform_indices = @transform_0, window_bounds = array<i64: 16, 1024>}, {pipeline_mode = #tpu.pipeline_mode<synchronous>, transform_indices = @transform_1, window_bounds = array<i64: 1024, 128>}, {pipeline_mode = #tpu.pipeline_mode<synchronous>, transform_indices = @transform_2, window_bounds = array<i64: 1, 128>}, {transform_indices = @transform_3, window_bounds = array<i64: 16, 128>}]} {
    %c0 = arith.constant 0 : index
    %c0_0 = arith.constant 0 : index
    %0 = vector.load %arg1[%c0, %c0_0] : memref<16x1024xbf16, #tpu.memory_space<vmem>>, vector<16x1024xbf16>
    %c0_1 = arith.constant 0 : index
    %c0_2 = arith.constant 0 : index
    %1 = vector.load %arg2[%c0_1, %c0_2] : memref<1024x128xbf16, #tpu.memory_space<vmem>>, vector<1024x128xbf16>
    %cst = arith.constant dense<0.000000e+00> : vector<16x128xf32>
    %2 = tpu.matmul %0, %1, %cst {dimension_numbers = #tpu.dot_dimension_numbers<[1], [0], [0], [1], [0, 0, 1, 1], [], []>} : vector<16x1024xbf16>, vector<1024x128xbf16>, vector<16x128xf32> -> vector<16x128xf32>
    %c0_3 = arith.constant 0 : index
    %c0_4 = arith.constant 0 : index
    %3 = vector.load %arg3[%c0_3, %c0_4] : memref<1x128xf32, #tpu.memory_space<vmem>>, vector<1x128xf32>
    %4 = vector.broadcast %3 : vector<1x128xf32> to vector<16x128xf32>
    %5 = arith.addf %2, %4 : vector<16x128xf32>
    %c0_5 = arith.constant 0 : index
    %c0_6 = arith.constant 0 : index
    %6 = vector.load %arg4[%c0_5, %c0_6] : memref<16x128xf32, #tpu.memory_space<vmem>>, vector<16x128xf32>
    tpu.vector_store %arg4[%c0_5, %c0_6], %5 {strides = array<i32>} : memref<16x128xf32, #tpu.memory_space<vmem>>, vector<16x128xf32>,
    return
  }
  func.func @transform_0(%arg0: i32) -> (i32, i32) {
    %c0_i32 = arith.constant 0 : i32
    %c0_i32_0 = arith.constant 0 : i32
    return %arg0, %c0_i32 : i32, i32
  }
  func.func @transform_1(%arg0: i32) -> (i32, i32) {
    %c0_i32 = arith.constant 0 : i32
    %c0_i32_0 = arith.constant 0 : i32
    %c0_i32_1 = arith.constant 0 : i32
    return %c0_i32, %c0_i32_0 : i32, i32
  }
  func.func @transform_2(%arg0: i32) -> (i32, i32) {
    %c0_i32 = arith.constant 0 : i32
    %c0_i32_0 = arith.constant 0 : i32
    %c0_i32_1 = arith.constant 0 : i32
    return %c0_i32, %c0_i32_0 : i32, i32
  }
  func.func @transform_3(%arg0: i32) -> (i32, i32) {
    %c0_i32 = arith.constant 0 : i32
    %c0_i32_0 = arith.constant 0 : i32
    return %arg0, %c0_i32 : i32, i32
  }
}

</mosaic_0001>

<llo_original>
// kernel: _lambda_.5
$region0: #{_lambda_.5}
  #allocation0 [shape = 'u32[]', space=smem, size = 0x4, offset = 0x4, fixed_abs, tag = 'smem constant byte address 0x4 - core index']
  #allocation1 [shape = 'u32[144,128]{1,0:T(1,128)}', space=vmem, size = 0x12000, scoped, tag = 'internal scratch']
  %s0 = inlined_call_operand.vmem [shape: bf16[512,128], index: 0, kind: input, shape index: {}]
  %s1 = inlined_call_operand.vmem [shape: bf16[128,128], index: 1, kind: input, shape index: {}]
  %s2 = inlined_call_operand.vmem [shape: f32[1,128], index: 2, kind: input, shape index: {}]
  %s3 = inlined_call_operand.vmem [shape: bf16[512,128], index: 3, kind: output, shape index: {}]
  %s4 = sld [smem:[#allocation0]]
  $region22: #{_lambda_.5} parent=0
    _
  %s6 = ssub.s32 1, %s4
  %s7 = scalar_select 0, %s6, %s4
  // Predicated region
  $region2: #{_lambda_.5} parent=0 // pred_check
    _
  $region3: #{_lambda_.5} parent=0 // pred_check_branch
    %9 = sbr.rel (0) target = $region5
  $region4: #{_lambda_.5} parent=0 // pred_region
    _
  $region5: #{_lambda_.5} parent=0 // pred_fallthru
    _
  // Predicated region
  $region6: #{_lambda_.5} parent=0 // pred_check
    _
  $region7: #{_lambda_.5} parent=0 // pred_check_branch
    %11 = sbr.rel (0) target = $region9
  $region8: #{_lambda_.5} parent=0 // pred_region
    _
  $region9: #{_lambda_.5} parent=0 // pred_fallthru
    _
  // Predicated region
  $region10: #{_lambda_.5} parent=0 // pred_check
    _
  $region11: #{_lambda_.5} parent=0 // pred_check_branch
    %13 = sbr.rel (0) target = $region13
  $region12: #{_lambda_.5} parent=0 // pred_region
    _
  $region13: #{_lambda_.5} parent=0 // pred_fallthru
    _
  %v15 = vld [vmem:[%s0] sm:$0xf]
  %v16 = vld [vmem:[%s0 + $0x4] sm:$0xf]
  %v17 = vld [vmem:[%s0 + $0x8] sm:$0xf]
  %v18 = vld [vmem:[%s0 + $0xc] sm:$0xf]
  %v19 = vld [vmem:[%s0 + $0x10] sm:$0xf]
  %v20 = vld [vmem:[%s0 + $0x14] sm:$0xf]
  %v21 = vld [vmem:[%s0 + $0x18] sm:$0xf]
  %v22 = vld [vmem:[%s0 + $0x1c] sm:$0xf]
  %v23 = vld [vmem:[%s0 + $0x20] sm:$0xf]
  %v24 = vld [vmem:[%s0 + $0x24] sm:$0xf]
  %v25 = vld [vmem:[%s0 + $0x28] sm:$0xf]
  %v26 = vld [vmem:[%s0 + $0x2c] sm:$0xf]
  %v27 = vld [vmem:[%s0 + $0x30] sm:$0xf]
  %v28 = vld [vmem:[%s0 + $0x34] sm:$0xf]
  %v29 = vld [vmem:[%s0 + $0x38] sm:$0xf]
  %v30 = vld [vmem:[%s0 + $0x3c] sm:$0xf]
  %v31 = vld [vmem:[%s0 + $0x40] sm:$0xf]
  %v32 = vld [vmem:[%s0 + $0x44] sm:$0xf]
  %v33 = vld [vmem:[%s0 + $0x48] sm:$0xf]
  %v34 = vld [vmem:[%s0 + $0x4c] sm:$0xf]
  %v35 = vld [vmem:[%s0 + $0x50] sm:$0xf]
  %v36 = vld [vmem:[%s0 + $0x54] sm:$0xf]
  %v37 = vld [vmem:[%s0 + $0x58] sm:$0xf]
  %v38 = vld [vmem:[%s0 + $0x5c] sm:$0xf]
  %v39 = vld [vmem:[%s0 + $0x60] sm:$0xf]
  %v40 = vld [vmem:[%s0 + $0x64] sm:$0xf]
  %v41 = vld [vmem:[%s0 + $0x68] sm:$0xf]
  %v42 = vld [vmem:[%s0 + $0x6c] sm:$0xf]
  %v43 = vld [vmem:[%s0 + $0x70] sm:$0xf]
  %v44 = vld [vmem:[%s0 + $0x74] sm:$0xf]
  %v45 = vld [vmem:[%s0 + $0x78] sm:$0xf]
  %v46 = vld [vmem:[%s0 + $0x7c] sm:$0xf]
  %v47 = vld [vmem:[%s0 + $0x80] sm:$0xf]
  %v48 = vld [vmem:[%s0 + $0x84] sm:$0xf]
  %v49 = vld [vmem:[%s0 + $0x88] sm:$0xf]
  %v50 = vld [vmem:[%s0 + $0x8c] sm:$0xf]
  %v51 = vld [vmem:[%s0 + $0x90] sm:$0xf]
  %v52 = vld [vmem:[%s0 + $0x94] sm:$0xf]
  %v53 = vld [vmem:[%s0 + $0x98] sm:$0xf]
  %v54 = vld [vmem:[%s0 + $0x9c] sm:$0xf]
  %v55 = vld [vmem:[%s0 + $0xa0] sm:$0xf]
  %v56 = vld [vmem:[%s0 + $0xa4] sm:$0xf]
  %v57 = vld [vmem:[%s0 + $0xa8] sm:$0xf]
  %v58 = vld [vmem:[%s0 + $0xac] sm:$0xf]
  %v59 = vld [vmem:[%s0 + $0xb0] sm:$0xf]
  %v60 = vld [vmem:[%s0 + $0xb4] sm:$0xf]
  %v61 = vld [vmem:[%s0 + $0xb8] sm:$0xf]
  %v62 = vld [vmem:[%s0 + $0xbc] sm:$0xf]
  %v63 = vld [vmem:[%s0 + $0xc0] sm:$0xf]
  %v64 = vld [vmem:[%s0 + $0xc4] sm:$0xf]
  %v65 = vld [vmem:[%s0 + $0xc8] sm:$0xf]
  %v66 = vld [vmem:[%s0 + $0xcc] sm:$0xf]
  %v67 = vld [vmem:[%s0 + $0xd0] sm:$0xf]
  %v68 = vld [vmem:[%s0 + $0xd4] sm:$0xf]
  %v69 = vld [vmem:[%s0 + $0xd8] sm:$0xf]
  %v70 = vld [vmem:[%s0 + $0xdc] sm:$0xf]
  %v71 = vld [vmem:[%s0 + $0xe0] sm:$0xf]
  %v72 = vld [vmem:[%s0 + $0xe4] sm:$0xf]
  %v73 = vld [vmem:[%s0 + $0xe8] sm:$0xf]
  %v74 = vld [vmem:[%s0 + $0xec] sm:$0xf]
  %v75 = vld [vmem:[%s0 + $0xf0] sm:$0xf]
  %v76 = vld [vmem:[%s0 + $0xf4] sm:$0xf]
  %v77 = vld [vmem:[%s0 + $0xf8] sm:$0xf]
  %v78 = vld [vmem:[%s0 + $0xfc] sm:$0xf]
  %v79 = vld [vmem:[%s1] sm:$0xf]
  %v80 = vld [vmem:[%s1 + $0x4] sm:$0xf]
  %v81 = vld [vmem:[%s1 + $0x8] sm:$0xf]
  %v82 = vld [vmem:[%s1 + $0xc] sm:$0xf]
  %v83 = vld [vmem:[%s1 + $0x10] sm:$0xf]
  %v84 = vld [vmem:[%s1 + $0x14] sm:$0xf]
  %v85 = vld [vmem:[%s1 + $0x18] sm:$0xf]
  %v86 = vld [vmem:[%s1 + $0x1c] sm:$0xf]
  %v87 = vld [vmem:[%s1 + $0x20] sm:$0xf]
  %v88 = vld [vmem:[%s1 + $0x24] sm:$0xf]
  %v89 = vld [vmem:[%s1 + $0x28] sm:$0xf]
  %v90 = vld [vmem:[%s1 + $0x2c] sm:$0xf]
  %v91 = vld [vmem:[%s1 + $0x30] sm:$0xf]
  %v92 = vld [vmem:[%s1 + $0x34] sm:$0xf]
  %v93 = vld [vmem:[%s1 + $0x38] sm:$0xf]
  %v94 = vld [vmem:[%s1 + $0x3c] sm:$0xf]
  %v95 = vld [vmem:[%s2] sm:$0x1]
  %v97 = vlaneseq
  %v98 = vshrl.u32 %v97, 7
  %v99 = vsub.s32 0, %v98
  %v100 = vrot.slane %v95, %v99
  %v166 = vunpack.c.l.b16 %v15
  %v167 = vunpack.c.l.b16 %v16
  %v168 = vunpack.c.l.b16 %v17
  %v169 = vunpack.c.l.b16 %v18
  %v170 = vunpack.c.l.b16 %v19
  %v171 = vunpack.c.l.b16 %v20
  %v172 = vunpack.c.l.b16 %v21
  %v173 = vunpack.c.l.b16 %v22
  %v174 = vunpack.c.l.b16 %v23
  %v175 = vunpack.c.l.b16 %v24
  %v176 = vunpack.c.l.b16 %v25
  %v177 = vunpack.c.l.b16 %v26
  %v178 = vunpack.c.l.b16 %v27
  %v179 = vunpack.c.l.b16 %v28
  %v180 = vunpack.c.l.b16 %v29
  %v181 = vunpack.c.l.b16 %v30
  %v182 = vunpack.c.l.b16 %v31
  %v183 = vunpack.c.l.b16 %v32
  %v184 = vunpack.c.l.b16 %v33
  %v185 = vunpack.c.l.b16 %v34
  %v186 = vunpack.c.l.b16 %v35
  %v187 = vunpack.c.l.b16 %v36
  %v188 = vunpack.c.l.b16 %v37
  %v189 = vunpack.c.l.b16 %v38
  %v190 = vunpack.c.l.b16 %v39
  %v191 = vunpack.c.l.b16 %v40
  %v192 = vunpack.c.l.b16 %v41
  %v193 = vunpack.c.l.b16 %v42
  %v194 = vunpack.c.l.b16 %v43
  %v195 = vunpack.c.l.b16 %v44
  %v196 = vunpack.c.l.b16 %v45
  %v197 = vunpack.c.l.b16 %v46
  %v198 = vunpack.c.l.b16 %v47
  %v199 = vunpack.c.l.b16 %v48
  %v200 = vunpack.c.l.b16 %v49
  %v201 = vunpack.c.l.b16 %v50
  %v202 = vunpack.c.l.b16 %v51
  %v203 = vunpack.c.l.b16 %v52
  %v204 = vunpack.c.l.b16 %v53
  %v205 = vunpack.c.l.b16 %v54
  %v206 = vunpack.c.l.b16 %v55
  %v207 = vunpack.c.l.b16 %v56
  %v208 = vunpack.c.l.b16 %v57
  %v209 = vunpack.c.l.b16 %v58
  %v210 = vunpack.c.l.b16 %v59
  %v211 = vunpack.c.l.b16 %v60
  %v212 = vunpack.c.l.b16 %v61
  %v213 = vunpack.c.l.b16 %v62
  %v214 = vunpack.c.l.b16 %v63
  %v215 = vunpack.c.l.b16 %v64
  %v216 = vunpack.c.l.b16 %v65
  %v217 = vunpack.c.l.b16 %v66
  %v218 = vunpack.c.l.b16 %v67
  %v219 = vunpack.c.l.b16 %v68
  %v220 = vunpack.c.l.b16 %v69
  %v221 = vunpack.c.l.b16 %v70
  %v222 = vunpack.c.l.b16 %v71
  %v223 = vunpack.c.l.b16 %v72
  %v224 = vunpack.c.l.b16 %v73
  %v225 = vunpack.c.l.b16 %v74
  %v226 = vunpack.c.l.b16 %v75
  %v227 = vunpack.c.l.b16 %v76
  %v228 = vunpack.c.l.b16 %v77
  %v229 = vunpack.c.l.b16 %v78
  %v230 = vpack.c.b16 %v167, %v166
  %v231 = vpack.c.b16 %v169, %v168
  %v232 = vpack.c.b16 %v171, %v170
  %v233 = vpack.c.b16 %v173, %v172
  %v234 = vpack.c.b16 %v175, %v174
  %v235 = vpack.c.b16 %v177, %v176
  %v236 = vpack.c.b16 %v179, %v178
  %v237 = vpack.c.b16 %v181, %v180
  %v238 = vpack.c.b16 %v183, %v182
  %v239 = vpack.c.b16 %v185, %v184
  %v240 = vpack.c.b16 %v187, %v186
  %v241 = vpack.c.b16 %v189, %v188
  %v242 = vpack.c.b16 %v191, %v190
  %v243 = vpack.c.b16 %v193, %v192
  %v244 = vpack.c.b16 %v195, %v194
  %v245 = vpack.c.b16 %v197, %v196
  %v246 = vpack.c.b16 %v199, %v198
  %v247 = vpack.c.b16 %v201, %v200
  %v248 = vpack.c.b16 %v203, %v202
  %v249 = vpack.c.b16 %v205, %v204
  %v250 = vpack.c.b16 %v207, %v206
  %v251 = vpack.c.b16 %v209, %v208
  %v252 = vpack.c.b16 %v211, %v210
  %v253 = vpack.c.b16 %v213, %v212
  %v254 = vpack.c.b16 %v215, %v214
  %v255 = vpack.c.b16 %v217, %v216
  %v256 = vpack.c.b16 %v219, %v218
  %v257 = vpack.c.b16 %v221, %v220
  %v258 = vpack.c.b16 %v223, %v222
  %v259 = vpack.c.b16 %v225, %v224
  %v260 = vpack.c.b16 %v227, %v226
  %v261 = vpack.c.b16 %v229, %v228
  %v310 = vunpack.c.l.b16 %v79
  %v311 = vunpack.c.l.b16 %v80
  %v312 = vunpack.c.l.b16 %v81
  %v313 = vunpack.c.l.b16 %v82
  %v314 = vunpack.c.l.b16 %v83
  %v315 = vunpack.c.l.b16 %v84
  %v316 = vunpack.c.l.b16 %v85
  %v317 = vunpack.c.l.b16 %v86
  %v318 = vunpack.c.l.b16 %v87
  %v319 = vunpack.c.l.b16 %v88
  %v320 = vunpack.c.l.b16 %v89
  %v321 = vunpack.c.l.b16 %v90
  %v322 = vunpack.c.l.b16 %v91
  %v323 = vunpack.c.l.b16 %v92
  %v324 = vunpack.c.l.b16 %v93
  %v325 = vunpack.c.l.b16 %v94
  %v326 = vpack.c.b16 %v311, %v310
  %v327 = vpack.c.b16 %v313, %v312
  %v328 = vpack.c.b16 %v315, %v314
  %v329 = vpack.c.b16 %v317, %v316
  %v330 = vpack.c.b16 %v319, %v318
  %v331 = vpack.c.b16 %v321, %v320
  %v332 = vpack.c.b16 %v323, %v322
  %v333 = vpack.c.b16 %v325, %v324
  %342 = vmatprep.subr.bf16.mxu0 0
  %343 = vmatpush1.bf16.msra.mxu0 %v326
  %344 = vmatprep.subr.bf16.mxu0 0
  %345 = vmatpush1.bf16.msra.mxu0 %v327
  %346 = vmatprep.subr.bf16.mxu0 0
  %347 = vmatpush1.bf16.msra.mxu0 %v328
  %348 = vmatprep.subr.bf16.mxu0 0
  %349 = vmatpush1.bf16.msra.mxu0 %v329
  %350 = vmatprep.subr.bf16.mxu0 0
  %351 = vmatpush1.bf16.msra.mxu0 %v330
  %352 = vmatprep.subr.bf16.mxu0 0
  %353 = vmatpush1.bf16.msra.mxu0 %v331
  %354 = vmatprep.subr.bf16.mxu0 0
  %355 = vmatpush1.bf16.msra.mxu0 %v332
  %356 = vmatprep.subr.bf16.mxu0 0
  %357 = vmatpush1.bf16.msra.mxu0 %v333
  %358 = vmatprep.subr.bf16.mxu0 0
  %359 = vmatpush1.bf16.msra.mxu0 0
  %360 = vmatprep.subr.bf16.mxu0 0
  %361 = vmatpush1.bf16.msra.mxu0 0
  %362 = vmatprep.subr.bf16.mxu0 0
  %363 = vmatpush1.bf16.msra.mxu0 0
  %364 = vmatprep.subr.bf16.mxu0 0
  %365 = vmatpush1.bf16.msra.mxu0 0
  %366 = vmatprep.subr.bf16.mxu0 0
  %367 = vmatpush1.bf16.msra.mxu0 0
  %368 = vmatprep.subr.bf16.mxu0 0
  %369 = vmatpush1.bf16.msra.mxu0 0
  %370 = vmatprep.subr.bf16.mxu0 0
  %371 = vmatpush1.bf16.msra.mxu0 0
  %372 = vmatprep.subr.bf16.mxu0 0
  %373 = vmatpush1.bf16.msra.mxu0 0
  %374 = vmatprep.mubr.bf16.mxu0 0
  %375 = vmatmul.mubr.bf16.gmra.mrb[0].mxu0 %v230
  %v376 = vpop.f32.mrb[0].mxu0
  %v377 = vadd.f32 %v100, %v376
  %v378 = vpop.f32.mrb[0].mxu0
  %v379 = vpop.f32.mrb[0].mxu0
  %v380 = vadd.f32 %v100, %v379
  %v381 = vpop.f32.mrb[0].mxu0
  %382 = vmatprep.mubr.bf16.mxu0 0
  %383 = vmatmul.mubr.bf16.gmra.mrb[0].mxu0 %v231
  %v384 = vpop.f32.mrb[0].mxu0
  %v385 = vadd.f32 %v100, %v384
  %v386 = vpop.f32.mrb[0].mxu0
  %v387 = vpop.f32.mrb[0].mxu0
  %v388 = vadd.f32 %v100, %v387
  %v389 = vpop.f32.mrb[0].mxu0
  %390 = vmatprep.mubr.bf16.mxu0 0
  %391 = vmatmul.mubr.bf16.gmra.mrb[0].mxu0 %v232
  %v392 = vpop.f32.mrb[0].mxu0
  %v393 = vadd.f32 %v100, %v392
  %v394 = vpop.f32.mrb[0].mxu0
  %v395 = vpop.f32.mrb[0].mxu0
  %v396 = vadd.f32 %v100, %v395
  %v397 = vpop.f32.mrb[0].mxu0
  %398 = vmatprep.mubr.bf16.mxu0 0
  %399 = vmatmul.mubr.bf16.gmra.mrb[0].mxu0 %v233
  %v400 = vpop.f32.mrb[0].mxu0
  %v401 = vadd.f32 %v100, %v400
  %v402 = vpop.f32.mrb[0].mxu0
  %v403 = vpop.f32.mrb[0].mxu0
  %v404 = vadd.f32 %v100, %v403
  %v405 = vpop.f32.mrb[0].mxu0
  %406 = vmatprep.mubr.bf16.mxu0 0
  %407 = vmatmul.mubr.bf16.gmra.mrb[0].mxu0 %v234
  %v408 = vpop.f32.mrb[0].mxu0
  %v409 = vadd.f32 %v100, %v408
  %v410 = vpop.f32.mrb[0].mxu0
  %v411 = vpop.f32.mrb[0].mxu0
  %v412 = vadd.f32 %v100, %v411
  %v413 = vpop.f32.mrb[0].mxu0
  %414 = vmatprep.mubr.bf16.mxu0 0
  %415 = vmatmul.mubr.bf16.gmra.mrb[0].mxu0 %v235
  %v416 = vpop.f32.mrb[0].mxu0
  %v417 = vadd.f32 %v100, %v416
  %v418 = vpop.f32.mrb[0].mxu0
  %v419 = vpop.f32.mrb[0].mxu0
  %v420 = vadd.f32 %v100, %v419
  %v421 = vpop.f32.mrb[0].mxu0
  %422 = vmatprep.mubr.bf16.mxu0 0
  %423 = vmatmul.mubr.bf16.gmra.mrb[0].mxu0 %v236
  %v424 = vpop.f32.mrb[0].mxu0
  %v425 = vadd.f32 %v100, %v424
  %v426 = vpop.f32.mrb[0].mxu0
  %v427 = vpop.f32.mrb[0].mxu0
  %v428 = vadd.f32 %v100, %v427
  %v429 = vpop.f32.mrb[0].mxu0
  %430 = vmatprep.mubr.bf16.mxu0 0
  %431 = vmatmul.mubr.bf16.gmra.mrb[0].mxu0 %v237
  %v432 = vpop.f32.mrb[0].mxu0
  %v433 = vadd.f32 %v100, %v432
  %v434 = vpop.f32.mrb[0].mxu0
  %v435 = vpop.f32.mrb[0].mxu0
  %v436 = vadd.f32 %v100, %v435
  %v437 = vpop.f32.mrb[0].mxu0
  %438 = vmatprep.mubr.bf16.mxu0 0
  %439 = vmatmul.mubr.bf16.gmra.mrb[0].mxu0 %v238
  %v440 = vpop.f32.mrb[0].mxu0
  %v441 = vadd.f32 %v100, %v440
  %v442 = vpop.f32.mrb[0].mxu0
  %v443 = vpop.f32.mrb[0].mxu0
  %v444 = vadd.f32 %v100, %v443
  %v445 = vpop.f32.mrb[0].mxu0
  %446 = vmatprep.mubr.bf16.mxu0 0
  %447 = vmatmul.mubr.bf16.gmra.mrb[0].mxu0 %v239
  %v448 = vpop.f32.mrb[0].mxu0
  %v449 = vadd.f32 %v100, %v448
  %v450 = vpop.f32.mrb[0].mxu0
  %v451 = vpop.f32.mrb[0].mxu0
  %v452 = vadd.f32 %v100, %v451
  %v453 = vpop.f32.mrb[0].mxu0
  %454 = vmatprep.mubr.bf16.mxu0 0
  %455 = vmatmul.mubr.bf16.gmra.mrb[0].mxu0 %v240
  %v456 = vpop.f32.mrb[0].mxu0
  %v457 = vadd.f32 %v100, %v456
  %v458 = vpop.f32.mrb[0].mxu0
  %v459 = vpop.f32.mrb[0].mxu0
  %v460 = vadd.f32 %v100, %v459
  %v461 = vpop.f32.mrb[0].mxu0
  %462 = vmatprep.mubr.bf16.mxu0 0
  %463 = vmatmul.mubr.bf16.gmra.mrb[0].mxu0 %v241
  %v464 = vpop.f32.mrb[0].mxu0
  %v465 = vadd.f32 %v100, %v464
  %v466 = vpop.f32.mrb[0].mxu0
  %v467 = vpop.f32.mrb[0].mxu0
  %v468 = vadd.f32 %v100, %v467
  %v469 = vpop.f32.mrb[0].mxu0
  %470 = vmatprep.mubr.bf16.mxu0 0
  %471 = vmatmul.mubr.bf16.gmra.mrb[0].mxu0 %v242
  %v472 = vpop.f32.mrb[0].mxu0
  %v473 = vadd.f32 %v100, %v472
  %v474 = vpop.f32.mrb[0].mxu0
  %v475 = vpop.f32.mrb[0].mxu0
  %v476 = vadd.f32 %v100, %v475
  %v477 = vpop.f32.mrb[0].mxu0
  %478 = vmatprep.mubr.bf16.mxu0 0
  %479 = vmatmul.mubr.bf16.gmra.mrb[0].mxu0 %v243
  %v480 = vpop.f32.mrb[0].mxu0
  %v481 = vadd.f32 %v100, %v480
  %v482 = vpop.f32.mrb[0].mxu0
  %v483 = vpop.f32.mrb[0].mxu0
  %v484 = vadd.f32 %v100, %v483
  %v485 = vpop.f32.mrb[0].mxu0
  %486 = vmatprep.mubr.bf16.mxu0 0
  %487 = vmatmul.mubr.bf16.gmra.mrb[0].mxu0 %v244
  %v488 = vpop.f32.mrb[0].mxu0
  %v489 = vadd.f32 %v100, %v488
  %v490 = vpop.f32.mrb[0].mxu0
  %v491 = vpop.f32.mrb[0].mxu0
  %v492 = vadd.f32 %v100, %v491
  %v493 = vpop.f32.mrb[0].mxu0
  %494 = vmatprep.mubr.bf16.mxu0 0
  %495 = vmatmul.mubr.bf16.gmra.mrb[0].mxu0 %v245
  %v496 = vpop.f32.mrb[0].mxu0
  %v497 = vadd.f32 %v100, %v496
  %v498 = vpop.f32.mrb[0].mxu0
  %v499 = vpop.f32.mrb[0].mxu0
  %v500 = vadd.f32 %v100, %v499
  %v501 = vpop.f32.mrb[0].mxu0
  %502 = vmatprep.mubr.bf16.mxu0 0
  %503 = vmatmul.mubr.bf16.gmra.mrb[0].mxu0 %v246
  %v504 = vpop.f32.mrb[0].mxu0
  %v505 = vadd.f32 %v100, %v504
  %v506 = vpop.f32.mrb[0].mxu0
  %v507 = vpop.f32.mrb[0].mxu0
  %v508 = vadd.f32 %v100, %v507
  %v509 = vpop.f32.mrb[0].mxu0
  %510 = vmatprep.mubr.bf16.mxu0 0
  %511 = vmatmul.mubr.bf16.gmra.mrb[0].mxu0 %v247
  %v512 = vpop.f32.mrb[0].mxu0
  %v513 = vadd.f32 %v100, %v512
  %v514 = vpop.f32.mrb[0].mxu0
  %v515 = vpop.f32.mrb[0].mxu0
  %v516 = vadd.f32 %v100, %v515
  %v517 = vpop.f32.mrb[0].mxu0
  %518 = vmatprep.mubr.bf16.mxu0 0
  %519 = vmatmul.mubr.bf16.gmra.mrb[0].mxu0 %v248
  %v520 = vpop.f32.mrb[0].mxu0
  %v521 = vadd.f32 %v100, %v520
  %v522 = vpop.f32.mrb[0].mxu0
  %v523 = vpop.f32.mrb[0].mxu0
  %v524 = vadd.f32 %v100, %v523
  %v525 = vpop.f32.mrb[0].mxu0
  %526 = vmatprep.mubr.bf16.mxu0 0
  %527 = vmatmul.mubr.bf16.gmra.mrb[0].mxu0 %v249
  %v528 = vpop.f32.mrb[0].mxu0
  %v529 = vadd.f32 %v100, %v528
  %v530 = vpop.f32.mrb[0].mxu0
  %v531 = vpop.f32.mrb[0].mxu0
  %v532 = vadd.f32 %v100, %v531
  %v533 = vpop.f32.mrb[0].mxu0
  %534 = vmatprep.mubr.bf16.mxu0 0
  %535 = vmatmul.mubr.bf16.gmra.mrb[0].mxu0 %v250
  %v536 = vpop.f32.mrb[0].mxu0
  %v537 = vadd.f32 %v100, %v536
  %v538 = vpop.f32.mrb[0].mxu0
  %v539 = vpop.f32.mrb[0].mxu0
  %v540 = vadd.f32 %v100, %v539
  %v541 = vpop.f32.mrb[0].mxu0
  %542 = vmatprep.mubr.bf16.mxu0 0
  %543 = vmatmul.mubr.bf16.gmra.mrb[0].mxu0 %v251
  %v544 = vpop.f32.mrb[0].mxu0
  %v545 = vadd.f32 %v100, %v544
  %v546 = vpop.f32.mrb[0].mxu0
  %v547 = vpop.f32.mrb[0].mxu0
  %v548 = vadd.f32 %v100, %v547
  %v549 = vpop.f32.mrb[0].mxu0
  %550 = vmatprep.mubr.bf16.mxu0 0
  %551 = vmatmul.mubr.bf16.gmra.mrb[0].mxu0 %v252
  %v552 = vpop.f32.mrb[0].mxu0
  %v553 = vadd.f32 %v100, %v552
  %v554 = vpop.f32.mrb[0].mxu0
  %v555 = vpop.f32.mrb[0].mxu0
  %v556 = vadd.f32 %v100, %v555
  %v557 = vpop.f32.mrb[0].mxu0
  %558 = vmatprep.mubr.bf16.mxu0 0
  %559 = vmatmul.mubr.bf16.gmra.mrb[0].mxu0 %v253
  %v560 = vpop.f32.mrb[0].mxu0
  %v561 = vadd.f32 %v100, %v560
  %v562 = vpop.f32.mrb[0].mxu0
  %v563 = vpop.f32.mrb[0].mxu0
  %v564 = vadd.f32 %v100, %v563
  %v565 = vpop.f32.mrb[0].mxu0
  %566 = vmatprep.mubr.bf16.mxu0 0
  %567 = vmatmul.mubr.bf16.gmra.mrb[0].mxu0 %v254
  %v568 = vpop.f32.mrb[0].mxu0
  %v569 = vadd.f32 %v100, %v568
  %v570 = vpop.f32.mrb[0].mxu0
  %v571 = vpop.f32.mrb[0].mxu0
  %v572 = vadd.f32 %v100, %v571
  %v573 = vpop.f32.mrb[0].mxu0
  %574 = vmatprep.mubr.bf16.mxu0 0
  %575 = vmatmul.mubr.bf16.gmra.mrb[0].mxu0 %v255
  %v576 = vpop.f32.mrb[0].mxu0
  %v577 = vadd.f32 %v100, %v576
  %v578 = vpop.f32.mrb[0].mxu0
  %v579 = vpop.f32.mrb[0].mxu0
  %v580 = vadd.f32 %v100, %v579
  %v581 = vpop.f32.mrb[0].mxu0
  %582 = vmatprep.mubr.bf16.mxu0 0
  %583 = vmatmul.mubr.bf16.gmra.mrb[0].mxu0 %v256
  %v584 = vpop.f32.mrb[0].mxu0
  %v585 = vadd.f32 %v100, %v584
  %v586 = vpop.f32.mrb[0].mxu0
  %v587 = vpop.f32.mrb[0].mxu0
  %v588 = vadd.f32 %v100, %v587
  %v589 = vpop.f32.mrb[0].mxu0
  %590 = vmatprep.mubr.bf16.mxu0 0
  %591 = vmatmul.mubr.bf16.gmra.mrb[0].mxu0 %v257
  %v592 = vpop.f32.mrb[0].mxu0
  %v593 = vadd.f32 %v100, %v592
  %v594 = vpop.f32.mrb[0].mxu0
  %v595 = vpop.f32.mrb[0].mxu0
  %v596 = vadd.f32 %v100, %v595
  %v597 = vpop.f32.mrb[0].mxu0
  %598 = vmatprep.mubr.bf16.mxu0 0
  %599 = vmatmul.mubr.bf16.gmra.mrb[0].mxu0 %v258
  %v600 = vpop.f32.mrb[0].mxu0
  %v601 = vadd.f32 %v100, %v600
  %v602 = vpop.f32.mrb[0].mxu0
  %v603 = vpop.f32.mrb[0].mxu0
  %v604 = vadd.f32 %v100, %v603
  %v605 = vpop.f32.mrb[0].mxu0
  %606 = vmatprep.mubr.bf16.mxu0 0
  %607 = vmatmul.mubr.bf16.gmra.mrb[0].mxu0 %v259
  %v608 = vpop.f32.mrb[0].mxu0
  %v609 = vadd.f32 %v100, %v608
  %v610 = vpop.f32.mrb[0].mxu0
  %v611 = vpop.f32.mrb[0].mxu0
  %v612 = vadd.f32 %v100, %v611
  %v613 = vpop.f32.mrb[0].mxu0
  %614 = vmatprep.mubr.bf16.mxu0 0
  %615 = vmatmul.mubr.bf16.gmra.mrb[0].mxu0 %v260
  %v616 = vpop.f32.mrb[0].mxu0
  %v617 = vadd.f32 %v100, %v616
  %v618 = vpop.f32.mrb[0].mxu0
  %v619 = vpop.f32.mrb[0].mxu0
  %v620 = vadd.f32 %v100, %v619
  %v621 = vpop.f32.mrb[0].mxu0
  %622 = vmatprep.mubr.bf16.mxu0 0
  %623 = vmatmul.mubr.bf16.gmra.mrb[0].mxu0 %v261
  %v624 = vpop.f32.mrb[0].mxu0
  %v625 = vadd.f32 %v100, %v624
  %v626 = vpop.f32.mrb[0].mxu0
  %v627 = vpop.f32.mrb[0].mxu0
  %v628 = vadd.f32 %v100, %v627
  %v629 = vpop.f32.mrb[0].mxu0
  %630 = vdwg.mxu0
  %vm631 = vcmp.gt.f32.partialorder %v377, 0.0
  %vm632 = vcmp.gt.f32.partialorder %v380, 0.0
  %vm633 = vcmp.gt.f32.partialorder %v385, 0.0
  %vm634 = vcmp.gt.f32.partialorder %v388, 0.0
  %vm635 = vcmp.gt.f32.partialorder %v393, 0.0
  %vm636 = vcmp.gt.f32.partialorder %v396, 0.0
  %vm637 = vcmp.gt.f32.partialorder %v401, 0.0
  %vm638 = vcmp.gt.f32.partialorder %v404, 0.0
  %vm639 = vcmp.gt.f32.partialorder %v409, 0.0
  %vm640 = vcmp.gt.f32.partialorder %v412, 0.0
  %vm641 = vcmp.gt.f32.partialorder %v417, 0.0
  %vm642 = vcmp.gt.f32.partialorder %v420, 0.0
  %vm643 = vcmp.gt.f32.partialorder %v425, 0.0
  %vm644 = vcmp.gt.f32.partialorder %v428, 0.0
  %vm645 = vcmp.gt.f32.partialorder %v433, 0.0
  %vm646 = vcmp.gt.f32.partialorder %v436, 0.0
  %vm647 = vcmp.gt.f32.partialorder %v441, 0.0
  %vm648 = vcmp.gt.f32.partialorder %v444, 0.0
  %vm649 = vcmp.gt.f32.partialorder %v449, 0.0
  %vm650 = vcmp.gt.f32.partialorder %v452, 0.0
  %vm651 = vcmp.gt.f32.partialorder %v457, 0.0
  %vm652 = vcmp.gt.f32.partialorder %v460, 0.0
  %vm653 = vcmp.gt.f32.partialorder %v465, 0.0
  %vm654 = vcmp.gt.f32.partialorder %v468, 0.0
  %vm655 = vcmp.gt.f32.partialorder %v473, 0.0
  %vm656 = vcmp.gt.f32.partialorder %v476, 0.0
  %vm657 = vcmp.gt.f32.partialorder %v481, 0.0
  %vm658 = vcmp.gt.f32.partialorder %v484, 0.0
  %vm659 = vcmp.gt.f32.partialorder %v489, 0.0
  %vm660 = vcmp.gt.f32.partialorder %v492, 0.0
  %vm661 = vcmp.gt.f32.partialorder %v497, 0.0
  %vm662 = vcmp.gt.f32.partialorder %v500, 0.0
  %vm663 = vcmp.gt.f32.partialorder %v505, 0.0
  %vm664 = vcmp.gt.f32.partialorder %v508, 0.0
  %vm665 = vcmp.gt.f32.partialorder %v513, 0.0
  %vm666 = vcmp.gt.f32.partialorder %v516, 0.0
  %vm667 = vcmp.gt.f32.partialorder %v521, 0.0
  %vm668 = vcmp.gt.f32.partialorder %v524, 0.0
  %vm669 = vcmp.gt.f32.partialorder %v529, 0.0
  %vm670 = vcmp.gt.f32.partialorder %v532, 0.0
  %vm671 = vcmp.gt.f32.partialorder %v537, 0.0
  %vm672 = vcmp.gt.f32.partialorder %v540, 0.0
  %vm673 = vcmp.gt.f32.partialorder %v545, 0.0
  %vm674 = vcmp.gt.f32.partialorder %v548, 0.0
  %vm675 = vcmp.gt.f32.partialorder %v553, 0.0
  %vm676 = vcmp.gt.f32.partialorder %v556, 0.0
  %vm677 = vcmp.gt.f32.partialorder %v561, 0.0
  %vm678 = vcmp.gt.f32.partialorder %v564, 0.0
  %vm679 = vcmp.gt.f32.partialorder %v569, 0.0
  %vm680 = vcmp.gt.f32.partialorder %v572, 0.0
  %vm681 = vcmp.gt.f32.partialorder %v577, 0.0
  %vm682 = vcmp.gt.f32.partialorder %v580, 0.0
  %vm683 = vcmp.gt.f32.partialorder %v585, 0.0
  %vm684 = vcmp.gt.f32.partialorder %v588, 0.0
  %vm685 = vcmp.gt.f32.partialorder %v593, 0.0
  %vm686 = vcmp.gt.f32.partialorder %v596, 0.0
  %vm687 = vcmp.gt.f32.partialorder %v601, 0.0
  %vm688 = vcmp.gt.f32.partialorder %v604, 0.0
  %vm689 = vcmp.gt.f32.partialorder %v609, 0.0
  %vm690 = vcmp.gt.f32.partialorder %v612, 0.0
  %vm691 = vcmp.gt.f32.partialorder %v617, 0.0
  %vm692 = vcmp.gt.f32.partialorder %v620, 0.0
  %vm693 = vcmp.gt.f32.partialorder %v625, 0.0
  %vm694 = vcmp.gt.f32.partialorder %v628, 0.0
  %v695 = vmul.f32 %v377, 0.2
  %v696 = vmul.f32 %v380, 0.2
  %v697 = vmul.f32 %v385, 0.2
  %v698 = vmul.f32 %v388, 0.2
  %v699 = vmul.f32 %v393, 0.2
  %v700 = vmul.f32 %v396, 0.2
  %v701 = vmul.f32 %v401, 0.2
  %v702 = vmul.f32 %v404, 0.2
  %v703 = vmul.f32 %v409, 0.2
  %v704 = vmul.f32 %v412, 0.2
  %v705 = vmul.f32 %v417, 0.2
  %v706 = vmul.f32 %v420, 0.2
  %v707 = vmul.f32 %v425, 0.2
  %v708 = vmul.f32 %v428, 0.2
  %v709 = vmul.f32 %v433, 0.2
  %v710 = vmul.f32 %v436, 0.2
  %v711 = vmul.f32 %v441, 0.2
  %v712 = vmul.f32 %v444, 0.2
  %v713 = vmul.f32 %v449, 0.2
  %v714 = vmul.f32 %v452, 0.2
  %v715 = vmul.f32 %v457, 0.2
  %v716 = vmul.f32 %v460, 0.2
  %v717 = vmul.f32 %v465, 0.2
  %v718 = vmul.f32 %v468, 0.2
  %v719 = vmul.f32 %v473, 0.2
  %v720 = vmul.f32 %v476, 0.2
  %v721 = vmul.f32 %v481, 0.2
  %v722 = vmul.f32 %v484, 0.2
  %v723 = vmul.f32 %v489, 0.2
  %v724 = vmul.f32 %v492, 0.2
  %v725 = vmul.f32 %v497, 0.2
  %v726 = vmul.f32 %v500, 0.2
  %v727 = vmul.f32 %v505, 0.2
  %v728 = vmul.f32 %v508, 0.2
  %v729 = vmul.f32 %v513, 0.2
  %v730 = vmul.f32 %v516, 0.2
  %v731 = vmul.f32 %v521, 0.2
  %v732 = vmul.f32 %v524, 0.2
  %v733 = vmul.f32 %v529, 0.2
  %v734 = vmul.f32 %v532, 0.2
  %v735 = vmul.f32 %v537, 0.2
  %v736 = vmul.f32 %v540, 0.2
  %v737 = vmul.f32 %v545, 0.2
  %v738 = vmul.f32 %v548, 0.2
  %v739 = vmul.f32 %v553, 0.2
  %v740 = vmul.f32 %v556, 0.2
  %v741 = vmul.f32 %v561, 0.2
  %v742 = vmul.f32 %v564, 0.2
  %v743 = vmul.f32 %v569, 0.2
  %v744 = vmul.f32 %v572, 0.2
  %v745 = vmul.f32 %v577, 0.2
  %v746 = vmul.f32 %v580, 0.2
  %v747 = vmul.f32 %v585, 0.2
  %v748 = vmul.f32 %v588, 0.2
  %v749 = vmul.f32 %v593, 0.2
  %v750 = vmul.f32 %v596, 0.2
  %v751 = vmul.f32 %v601, 0.2
  %v752 = vmul.f32 %v604, 0.2
  %v753 = vmul.f32 %v609, 0.2
  %v754 = vmul.f32 %v612, 0.2
  %v755 = vmul.f32 %v617, 0.2
  %v756 = vmul.f32 %v620, 0.2
  %v757 = vmul.f32 %v625, 0.2
  %v758 = vmul.f32 %v628, 0.2
  %v759 = vsel %vm631, %v377, %v695
  %v760 = vsel %vm632, %v380, %v696
  %v761 = vsel %vm633, %v385, %v697
  %v762 = vsel %vm634, %v388, %v698
  %v763 = vsel %vm635, %v393, %v699
  %v764 = vsel %vm636, %v396, %v700
  %v765 = vsel %vm637, %v401, %v701
  %v766 = vsel %vm638, %v404, %v702
  %v767 = vsel %vm639, %v409, %v703
  %v768 = vsel %vm640, %v412, %v704
  %v769 = vsel %vm641, %v417, %v705
  %v770 = vsel %vm642, %v420, %v706
  %v771 = vsel %vm643, %v425, %v707
  %v772 = vsel %vm644, %v428, %v708
  %v773 = vsel %vm645, %v433, %v709
  %v774 = vsel %vm646, %v436, %v710
  %v775 = vsel %vm647, %v441, %v711
  %v776 = vsel %vm648, %v444, %v712
  %v777 = vsel %vm649, %v449, %v713
  %v778 = vsel %vm650, %v452, %v714
  %v779 = vsel %vm651, %v457, %v715
  %v780 = vsel %vm652, %v460, %v716
  %v781 = vsel %vm653, %v465, %v717
  %v782 = vsel %vm654, %v468, %v718
  %v783 = vsel %vm655, %v473, %v719
  %v784 = vsel %vm656, %v476, %v720
  %v785 = vsel %vm657, %v481, %v721
  %v786 = vsel %vm658, %v484, %v722
  %v787 = vsel %vm659, %v489, %v723
  %v788 = vsel %vm660, %v492, %v724
  %v789 = vsel %vm661, %v497, %v725
  %v790 = vsel %vm662, %v500, %v726
  %v791 = vsel %vm663, %v505, %v727
  %v792 = vsel %vm664, %v508, %v728
  %v793 = vsel %vm665, %v513, %v729
  %v794 = vsel %vm666, %v516, %v730
  %v795 = vsel %vm667, %v521, %v731
  %v796 = vsel %vm668, %v524, %v732
  %v797 = vsel %vm669, %v529, %v733
  %v798 = vsel %vm670, %v532, %v734
  %v799 = vsel %vm671, %v537, %v735
  %v800 = vsel %vm672, %v540, %v736
  %v801 = vsel %vm673, %v545, %v737
  %v802 = vsel %vm674, %v548, %v738
  %v803 = vsel %vm675, %v553, %v739
  %v804 = vsel %vm676, %v556, %v740
  %v805 = vsel %vm677, %v561, %v741
  %v806 = vsel %vm678, %v564, %v742
  %v807 = vsel %vm679, %v569, %v743
  %v808 = vsel %vm680, %v572, %v744
  %v809 = vsel %vm681, %v577, %v745
  %v810 = vsel %vm682, %v580, %v746
  %v811 = vsel %vm683, %v585, %v747
  %v812 = vsel %vm684, %v588, %v748
  %v813 = vsel %vm685, %v593, %v749
  %v814 = vsel %vm686, %v596, %v750
  %v815 = vsel %vm687, %v601, %v751
  %v816 = vsel %vm688, %v604, %v752
  %v817 = vsel %vm689, %v609, %v753
  %v818 = vsel %vm690, %v612, %v754
  %v819 = vsel %vm691, %v617, %v755
  %v820 = vsel %vm692, %v620, %v756
  %v821 = vsel %vm693, %v625, %v757
  %v822 = vsel %vm694, %v628, %v758
  %v823 = vpack.c.bf16 %v760, %v759
  %v824 = vpack.c.bf16 %v762, %v761
  %v825 = vpack.c.bf16 %v764, %v763
  %v826 = vpack.c.bf16 %v766, %v765
  %v827 = vpack.c.bf16 %v768, %v767
  %v828 = vpack.c.bf16 %v770, %v769
  %v829 = vpack.c.bf16 %v772, %v771
  %v830 = vpack.c.bf16 %v774, %v773
  %v831 = vpack.c.bf16 %v776, %v775
  %v832 = vpack.c.bf16 %v778, %v777
  %v833 = vpack.c.bf16 %v780, %v779
  %v834 = vpack.c.bf16 %v782, %v781
  %v835 = vpack.c.bf16 %v784, %v783
  %v836 = vpack.c.bf16 %v786, %v785
  %v837 = vpack.c.bf16 %v788, %v787
  %v838 = vpack.c.bf16 %v790, %v789
  %v839 = vpack.c.bf16 %v792, %v791
  %v840 = vpack.c.bf16 %v794, %v793
  %v841 = vpack.c.bf16 %v796, %v795
  %v842 = vpack.c.bf16 %v798, %v797
  %v843 = vpack.c.bf16 %v800, %v799
  %v844 = vpack.c.bf16 %v802, %v801
  %v845 = vpack.c.bf16 %v804, %v803
  %v846 = vpack.c.bf16 %v806, %v805
  %v847 = vpack.c.bf16 %v808, %v807
  %v848 = vpack.c.bf16 %v810, %v809
  %v849 = vpack.c.bf16 %v812, %v811
  %v850 = vpack.c.bf16 %v814, %v813
  %v851 = vpack.c.bf16 %v816, %v815
  %v852 = vpack.c.bf16 %v818, %v817
  %v853 = vpack.c.bf16 %v820, %v819
  %v854 = vpack.c.bf16 %v822, %v821
  %v887 = vunpack.c.l.b16 %v823
  %v888 = vunpack.c.h.b16 %v823
  %v889 = vunpack.c.l.b16 %v824
  %v890 = vunpack.c.h.b16 %v824
  %v891 = vunpack.c.l.b16 %v825
  %v892 = vunpack.c.h.b16 %v825
  %v893 = vunpack.c.l.b16 %v826
  %v894 = vunpack.c.h.b16 %v826
  %v895 = vunpack.c.l.b16 %v827
  %v896 = vunpack.c.h.b16 %v827
  %v897 = vunpack.c.l.b16 %v828
  %v898 = vunpack.c.h.b16 %v828
  %v899 = vunpack.c.l.b16 %v829
  %v900 = vunpack.c.h.b16 %v829
  %v901 = vunpack.c.l.b16 %v830
  %v902 = vunpack.c.h.b16 %v830
  %v903 = vunpack.c.l.b16 %v831
  %v904 = vunpack.c.h.b16 %v831
  %v905 = vunpack.c.l.b16 %v832
  %v906 = vunpack.c.h.b16 %v832
  %v907 = vunpack.c.l.b16 %v833
  %v908 = vunpack.c.h.b16 %v833
  %v909 = vunpack.c.l.b16 %v834
  %v910 = vunpack.c.h.b16 %v834
  %v911 = vunpack.c.l.b16 %v835
  %v912 = vunpack.c.h.b16 %v835
  %v913 = vunpack.c.l.b16 %v836
  %v914 = vunpack.c.h.b16 %v836
  %v915 = vunpack.c.l.b16 %v837
  %v916 = vunpack.c.h.b16 %v837
  %v917 = vunpack.c.l.b16 %v838
  %v918 = vunpack.c.h.b16 %v838
  %v919 = vunpack.c.l.b16 %v839
  %v920 = vunpack.c.h.b16 %v839
  %v921 = vunpack.c.l.b16 %v840
  %v922 = vunpack.c.h.b16 %v840
  %v923 = vunpack.c.l.b16 %v841
  %v924 = vunpack.c.h.b16 %v841
  %v925 = vunpack.c.l.b16 %v842
  %v926 = vunpack.c.h.b16 %v842
  %v927 = vunpack.c.l.b16 %v843
  %v928 = vunpack.c.h.b16 %v843
  %v929 = vunpack.c.l.b16 %v844
  %v930 = vunpack.c.h.b16 %v844
  %v931 = vunpack.c.l.b16 %v845
  %v932 = vunpack.c.h.b16 %v845
  %v933 = vunpack.c.l.b16 %v846
  %v934 = vunpack.c.h.b16 %v846
  %v935 = vunpack.c.l.b16 %v847
  %v936 = vunpack.c.h.b16 %v847
  %v937 = vunpack.c.l.b16 %v848
  %v938 = vunpack.c.h.b16 %v848
  %v939 = vunpack.c.l.b16 %v849
  %v940 = vunpack.c.h.b16 %v849
  %v941 = vunpack.c.l.b16 %v850
  %v942 = vunpack.c.h.b16 %v850
  %v943 = vunpack.c.l.b16 %v851
  %v944 = vunpack.c.h.b16 %v851
  %v945 = vunpack.c.l.b16 %v852
  %v946 = vunpack.c.h.b16 %v852
  %v947 = vunpack.c.l.b16 %v853
  %v948 = vunpack.c.h.b16 %v853
  %v949 = vunpack.c.l.b16 %v854
  %v950 = vunpack.c.h.b16 %v854
  %v951 = vpack.c.b16 %v887, %v887
  %v952 = vpack.c.b16 %v888, %v888
  %v953 = vpack.c.b16 %v889, %v889
  %v954 = vpack.c.b16 %v890, %v890
  %v955 = vpack.c.b16 %v891, %v891
  %v956 = vpack.c.b16 %v892, %v892
  %v957 = vpack.c.b16 %v893, %v893
  %v958 = vpack.c.b16 %v894, %v894
  %v959 = vpack.c.b16 %v895, %v895
  %v960 = vpack.c.b16 %v896, %v896
  %v961 = vpack.c.b16 %v897, %v897
  %v962 = vpack.c.b16 %v898, %v898
  %v963 = vpack.c.b16 %v899, %v899
  %v964 = vpack.c.b16 %v900, %v900
  %v965 = vpack.c.b16 %v901, %v901
  %v966 = vpack.c.b16 %v902, %v902
  %v967 = vpack.c.b16 %v903, %v903
  %v968 = vpack.c.b16 %v904, %v904
  %v969 = vpack.c.b16 %v905, %v905
  %v970 = vpack.c.b16 %v906, %v906
  %v971 = vpack.c.b16 %v907, %v907
  %v972 = vpack.c.b16 %v908, %v908
  %v973 = vpack.c.b16 %v909, %v909
  %v974 = vpack.c.b16 %v910, %v910
  %v975 = vpack.c.b16 %v911, %v911
  %v976 = vpack.c.b16 %v912, %v912
  %v977 = vpack.c.b16 %v913, %v913
  %v978 = vpack.c.b16 %v914, %v914
  %v979 = vpack.c.b16 %v915, %v915
  %v980 = vpack.c.b16 %v916, %v916
  %v981 = vpack.c.b16 %v917, %v917
  %v982 = vpack.c.b16 %v918, %v918
  %v983 = vpack.c.b16 %v919, %v919
  %v984 = vpack.c.b16 %v920, %v920
  %v985 = vpack.c.b16 %v921, %v921
  %v986 = vpack.c.b16 %v922, %v922
  %v987 = vpack.c.b16 %v923, %v923
  %v988 = vpack.c.b16 %v924, %v924
  %v989 = vpack.c.b16 %v925, %v925
  %v990 = vpack.c.b16 %v926, %v926
  %v991 = vpack.c.b16 %v927, %v927
  %v992 = vpack.c.b16 %v928, %v928
  %v993 = vpack.c.b16 %v929, %v929
  %v994 = vpack.c.b16 %v930, %v930
  %v995 = vpack.c.b16 %v931, %v931
  %v996 = vpack.c.b16 %v932, %v932
  %v997 = vpack.c.b16 %v933, %v933
  %v998 = vpack.c.b16 %v934, %v934
  %v999 = vpack.c.b16 %v935, %v935
  %v1000 = vpack.c.b16 %v936, %v936
  %v1001 = vpack.c.b16 %v937, %v937
  %v1002 = vpack.c.b16 %v938, %v938
  %v1003 = vpack.c.b16 %v939, %v939
  %v1004 = vpack.c.b16 %v940, %v940
  %v1005 = vpack.c.b16 %v941, %v941
  %v1006 = vpack.c.b16 %v942, %v942
  %v1007 = vpack.c.b16 %v943, %v943
  %v1008 = vpack.c.b16 %v944, %v944
  %v1009 = vpack.c.b16 %v945, %v945
  %v1010 = vpack.c.b16 %v946, %v946
  %v1011 = vpack.c.b16 %v947, %v947
  %v1012 = vpack.c.b16 %v948, %v948
  %v1013 = vpack.c.b16 %v949, %v949
  %v1014 = vpack.c.b16 %v950, %v950
  %1079 = vst [vmem:[%s3] sm:$0xf] %v951
  %1080 = vst [vmem:[%s3 + $0x4] sm:$0xf] %v952
  %1081 = vst [vmem:[%s3 + $0x8] sm:$0xf] %v953
  %1082 = vst [vmem:[%s3 + $0xc] sm:$0xf] %v954
  %1083 = vst [vmem:[%s3 + $0x10] sm:$0xf] %v955
  %1084 = vst [vmem:[%s3 + $0x14] sm:$0xf] %v956
  %1085 = vst [vmem:[%s3 + $0x18] sm:$0xf] %v957
  %1086 = vst [vmem:[%s3 + $0x1c] sm:$0xf] %v958
  %1087 = vst [vmem:[%s3 + $0x20] sm:$0xf] %v959
  %1088 = vst [vmem:[%s3 + $0x24] sm:$0xf] %v960
  %1089 = vst [vmem:[%s3 + $0x28] sm:$0xf] %v961
  %1090 = vst [vmem:[%s3 + $0x2c] sm:$0xf] %v962
  %1091 = vst [vmem:[%s3 + $0x30] sm:$0xf] %v963
  %1092 = vst [vmem:[%s3 + $0x34] sm:$0xf] %v964
  %1093 = vst [vmem:[%s3 + $0x38] sm:$0xf] %v965
  %1094 = vst [vmem:[%s3 + $0x3c] sm:$0xf] %v966
  %1095 = vst [vmem:[%s3 + $0x40] sm:$0xf] %v967
  %1096 = vst [vmem:[%s3 + $0x44] sm:$0xf] %v968
  %1097 = vst [vmem:[%s3 + $0x48] sm:$0xf] %v969
  %1098 = vst [vmem:[%s3 + $0x4c] sm:$0xf] %v970
  %1099 = vst [vmem:[%s3 + $0x50] sm:$0xf] %v971
  %1100 = vst [vmem:[%s3 + $0x54] sm:$0xf] %v972
  %1101 = vst [vmem:[%s3 + $0x58] sm:$0xf] %v973
  %1102 = vst [vmem:[%s3 + $0x5c] sm:$0xf] %v974
  %1103 = vst [vmem:[%s3 + $0x60] sm:$0xf] %v975
  %1104 = vst [vmem:[%s3 + $0x64] sm:$0xf] %v976
  %1105 = vst [vmem:[%s3 + $0x68] sm:$0xf] %v977
  %1106 = vst [vmem:[%s3 + $0x6c] sm:$0xf] %v978
  %1107 = vst [vmem:[%s3 + $0x70] sm:$0xf] %v979
  %1108 = vst [vmem:[%s3 + $0x74] sm:$0xf] %v980
  %1109 = vst [vmem:[%s3 + $0x78] sm:$0xf] %v981
  %1110 = vst [vmem:[%s3 + $0x7c] sm:$0xf] %v982
  %1111 = vst [vmem:[%s3 + $0x80] sm:$0xf] %v983
  %1112 = vst [vmem:[%s3 + $0x84] sm:$0xf] %v984
  %1113 = vst [vmem:[%s3 + $0x88] sm:$0xf] %v985
  %1114 = vst [vmem:[%s3 + $0x8c] sm:$0xf] %v986
  %1115 = vst [vmem:[%s3 + $0x90] sm:$0xf] %v987
  %1116 = vst [vmem:[%s3 + $0x94] sm:$0xf] %v988
  %1117 = vst [vmem:[%s3 + $0x98] sm:$0xf] %v989
  %1118 = vst [vmem:[%s3 + $0x9c] sm:$0xf] %v990
  %1119 = vst [vmem:[%s3 + $0xa0] sm:$0xf] %v991
  %1120 = vst [vmem:[%s3 + $0xa4] sm:$0xf] %v992
  %1121 = vst [vmem:[%s3 + $0xa8] sm:$0xf] %v993
  %1122 = vst [vmem:[%s3 + $0xac] sm:$0xf] %v994
  %1123 = vst [vmem:[%s3 + $0xb0] sm:$0xf] %v995
  %1124 = vst [vmem:[%s3 + $0xb4] sm:$0xf] %v996
  %1125 = vst [vmem:[%s3 + $0xb8] sm:$0xf] %v997
  %1126 = vst [vmem:[%s3 + $0xbc] sm:$0xf] %v998
  %1127 = vst [vmem:[%s3 + $0xc0] sm:$0xf] %v999
  %1128 = vst [vmem:[%s3 + $0xc4] sm:$0xf] %v1000
  %1129 = vst [vmem:[%s3 + $0xc8] sm:$0xf] %v1001
  %1130 = vst [vmem:[%s3 + $0xcc] sm:$0xf] %v1002
  %1131 = vst [vmem:[%s3 + $0xd0] sm:$0xf] %v1003
  %1132 = vst [vmem:[%s3 + $0xd4] sm:$0xf] %v1004
  %1133 = vst [vmem:[%s3 + $0xd8] sm:$0xf] %v1005
  %1134 = vst [vmem:[%s3 + $0xdc] sm:$0xf] %v1006
  %1135 = vst [vmem:[%s3 + $0xe0] sm:$0xf] %v1007
  %1136 = vst [vmem:[%s3 + $0xe4] sm:$0xf] %v1008
  %1137 = vst [vmem:[%s3 + $0xe8] sm:$0xf] %v1009
  %1138 = vst [vmem:[%s3 + $0xec] sm:$0xf] %v1010
  %1139 = vst [vmem:[%s3 + $0xf0] sm:$0xf] %v1011
  %1140 = vst [vmem:[%s3 + $0xf4] sm:$0xf] %v1012
  %1141 = vst [vmem:[%s3 + $0xf8] sm:$0xf] %v1013
  %1142 = vst [vmem:[%s3 + $0xfc] sm:$0xf] %v1014
  // Predicated region
  $region14: #{_lambda_.5} parent=0 // pred_check
    _
  $region15: #{_lambda_.5} parent=0 // pred_check_branch
    %1144 = sbr.rel (0) target = $region17
  $region16: #{_lambda_.5} parent=0 // pred_region
    _
  $region17: #{_lambda_.5} parent=0 // pred_fallthru
    _
  // Predicated region
  $region18: #{_lambda_.5} parent=0 // pred_check
    _
  $region19: #{_lambda_.5} parent=0 // pred_check_branch
    %1146 = sbr.rel (0) target = $region21
  $region20: #{_lambda_.5} parent=0 // pred_region
    _
  $region21: #{_lambda_.5} parent=0 // pred_fallthru
    _

// kernel: _lambda_.6
$region0: #{_lambda_.6}
  #allocation0 [shape = 'u32[]', space=smem, size = 0x4, offset = 0x4, fixed_abs, tag = 'smem constant byte address 0x4 - core index']
  #allocation1 [shape = 'u32[144,128]{1,0:T(1,128)}', space=vmem, size = 0x12000, scoped, tag = 'internal scratch']
  %s0 = inlined_call_operand.vmem [shape: bf16[128,128], index: 0, kind: input, shape index: {}]
  %s1 = inlined_call_operand.vmem [shape: bf16[128,128], index: 1, kind: input, shape index: {}]
  %s2 = inlined_call_operand.vmem [shape: f32[1,128], index: 2, kind: input, shape index: {}]
  %s3 = inlined_call_operand.vmem [shape: f32[1,128], index: 3, kind: input, shape index: {}]
  %s4 = inlined_call_operand.vmem [shape: f32[1,128], index: 4, kind: input, shape index: {}]
  %s5 = inlined_call_operand.vmem [shape: bf16[128,128], index: 5, kind: output, shape index: {}]
  %s6 = sld [smem:[#allocation0]]
  $region30: #{_lambda_.6} parent=0
    _
  %s8 = ssub.s32 1, %s6
  %s9 = scalar_select 0, %s8, %s6
  // Predicated region
  $region2: #{_lambda_.6} parent=0 // pred_check
    _
  $region3: #{_lambda_.6} parent=0 // pred_check_branch
    %11 = sbr.rel (0) target = $region5
  $region4: #{_lambda_.6} parent=0 // pred_region
    _
  $region5: #{_lambda_.6} parent=0 // pred_fallthru
    _
  // Predicated region
  $region6: #{_lambda_.6} parent=0 // pred_check
    _
  $region7: #{_lambda_.6} parent=0 // pred_check_branch
    %13 = sbr.rel (0) target = $region9
  $region8: #{_lambda_.6} parent=0 // pred_region
    _
  $region9: #{_lambda_.6} parent=0 // pred_fallthru
    _
  // Predicated region
  $region10: #{_lambda_.6} parent=0 // pred_check
    _
  $region11: #{_lambda_.6} parent=0 // pred_check_branch
    %15 = sbr.rel (0) target = $region13
  $region12: #{_lambda_.6} parent=0 // pred_region
    _
  $region13: #{_lambda_.6} parent=0 // pred_fallthru
    _
  // Predicated region
  $region14: #{_lambda_.6} parent=0 // pred_check
    _
  $region15: #{_lambda_.6} parent=0 // pred_check_branch
    %17 = sbr.rel (0) target = $region17
  $region16: #{_lambda_.6} parent=0 // pred_region
    _
  $region17: #{_lambda_.6} parent=0 // pred_fallthru
    _
  // Predicated region
  $region18: #{_lambda_.6} parent=0 // pred_check
    _
  $region19: #{_lambda_.6} parent=0 // pred_check_branch
    %19 = sbr.rel (0) target = $region21
  $region20: #{_lambda_.6} parent=0 // pred_region
    _
  $region21: #{_lambda_.6} parent=0 // pred_fallthru
    _
  %v21 = vld [vmem:[%s2] sm:$0x1]
  %v22 = vld [vmem:[%s0] sm:$0xf]
  %v23 = vld [vmem:[%s0 + $0x4] sm:$0xf]
  %v24 = vld [vmem:[%s0 + $0x8] sm:$0xf]
  %v25 = vld [vmem:[%s0 + $0xc] sm:$0xf]
  %v26 = vld [vmem:[%s0 + $0x10] sm:$0xf]
  %v27 = vld [vmem:[%s0 + $0x14] sm:$0xf]
  %v28 = vld [vmem:[%s0 + $0x18] sm:$0xf]
  %v29 = vld [vmem:[%s0 + $0x1c] sm:$0xf]
  %v30 = vld [vmem:[%s0 + $0x20] sm:$0xf]
  %v31 = vld [vmem:[%s0 + $0x24] sm:$0xf]
  %v32 = vld [vmem:[%s0 + $0x28] sm:$0xf]
  %v33 = vld [vmem:[%s0 + $0x2c] sm:$0xf]
  %v34 = vld [vmem:[%s0 + $0x30] sm:$0xf]
  %v35 = vld [vmem:[%s0 + $0x34] sm:$0xf]
  %v36 = vld [vmem:[%s0 + $0x38] sm:$0xf]
  %v37 = vld [vmem:[%s0 + $0x3c] sm:$0xf]
  %v38 = vld [vmem:[%s1] sm:$0xf]
  %v39 = vld [vmem:[%s1 + $0x4] sm:$0xf]
  %v40 = vld [vmem:[%s1 + $0x8] sm:$0xf]
  %v41 = vld [vmem:[%s1 + $0xc] sm:$0xf]
  %v42 = vld [vmem:[%s1 + $0x10] sm:$0xf]
  %v43 = vld [vmem:[%s1 + $0x14] sm:$0xf]
  %v44 = vld [vmem:[%s1 + $0x18] sm:$0xf]
  %v45 = vld [vmem:[%s1 + $0x1c] sm:$0xf]
  %v46 = vld [vmem:[%s1 + $0x20] sm:$0xf]
  %v47 = vld [vmem:[%s1 + $0x24] sm:$0xf]
  %v48 = vld [vmem:[%s1 + $0x28] sm:$0xf]
  %v49 = vld [vmem:[%s1 + $0x2c] sm:$0xf]
  %v50 = vld [vmem:[%s1 + $0x30] sm:$0xf]
  %v51 = vld [vmem:[%s1 + $0x34] sm:$0xf]
  %v52 = vld [vmem:[%s1 + $0x38] sm:$0xf]
  %v53 = vld [vmem:[%s1 + $0x3c] sm:$0xf]
  %v55 = vlaneseq
  %v56 = vshrl.u32 %v55, 7
  %v57 = vsub.s32 0, %v56
  %v58 = vrot.slane %v21, %v57
  %v76 = vunpack.c.l.b16 %v22
  %v77 = vunpack.c.l.b16 %v23
  %v78 = vunpack.c.l.b16 %v24
  %v79 = vunpack.c.l.b16 %v25
  %v80 = vunpack.c.l.b16 %v26
  %v81 = vunpack.c.l.b16 %v27
  %v82 = vunpack.c.l.b16 %v28
  %v83 = vunpack.c.l.b16 %v29
  %v84 = vunpack.c.l.b16 %v30
  %v85 = vunpack.c.l.b16 %v31
  %v86 = vunpack.c.l.b16 %v32
  %v87 = vunpack.c.l.b16 %v33
  %v88 = vunpack.c.l.b16 %v34
  %v89 = vunpack.c.l.b16 %v35
  %v90 = vunpack.c.l.b16 %v36
  %v91 = vunpack.c.l.b16 %v37
  %v92 = vpack.c.b16 %v77, %v76
  %v93 = vpack.c.b16 %v79, %v78
  %v94 = vpack.c.b16 %v81, %v80
  %v95 = vpack.c.b16 %v83, %v82
  %v96 = vpack.c.b16 %v85, %v84
  %v97 = vpack.c.b16 %v87, %v86
  %v98 = vpack.c.b16 %v89, %v88
  %v99 = vpack.c.b16 %v91, %v90
  %v124 = vunpack.c.l.b16 %v38
  %v125 = vunpack.c.l.b16 %v39
  %v126 = vunpack.c.l.b16 %v40
  %v127 = vunpack.c.l.b16 %v41
  %v128 = vunpack.c.l.b16 %v42
  %v129 = vunpack.c.l.b16 %v43
  %v130 = vunpack.c.l.b16 %v44
  %v131 = vunpack.c.l.b16 %v45
  %v132 = vunpack.c.l.b16 %v46
  %v133 = vunpack.c.l.b16 %v47
  %v134 = vunpack.c.l.b16 %v48
  %v135 = vunpack.c.l.b16 %v49
  %v136 = vunpack.c.l.b16 %v50
  %v137 = vunpack.c.l.b16 %v51
  %v138 = vunpack.c.l.b16 %v52
  %v139 = vunpack.c.l.b16 %v53
  %v140 = vpack.c.b16 %v125, %v124
  %v141 = vpack.c.b16 %v127, %v126
  %v142 = vpack.c.b16 %v129, %v128
  %v143 = vpack.c.b16 %v131, %v130
  %v144 = vpack.c.b16 %v133, %v132
  %v145 = vpack.c.b16 %v135, %v134
  %v146 = vpack.c.b16 %v137, %v136
  %v147 = vpack.c.b16 %v139, %v138
  %156 = vmatprep.subr.bf16.mxu0 0
  %157 = vmatpush1.bf16.msra.mxu0 %v140
  %158 = vmatprep.subr.bf16.mxu0 0
  %159 = vmatpush1.bf16.msra.mxu0 %v141
  %160 = vmatprep.subr.bf16.mxu0 0
  %161 = vmatpush1.bf16.msra.mxu0 %v142
  %162 = vmatprep.subr.bf16.mxu0 0
  %163 = vmatpush1.bf16.msra.mxu0 %v143
  %164 = vmatprep.subr.bf16.mxu0 0
  %165 = vmatpush1.bf16.msra.mxu0 %v144
  %166 = vmatprep.subr.bf16.mxu0 0
  %167 = vmatpush1.bf16.msra.mxu0 %v145
  %168 = vmatprep.subr.bf16.mxu0 0
  %169 = vmatpush1.bf16.msra.mxu0 %v146
  %170 = vmatprep.subr.bf16.mxu0 0
  %171 = vmatpush1.bf16.msra.mxu0 %v147
  %172 = vmatprep.subr.bf16.mxu0 0
  %173 = vmatpush1.bf16.msra.mxu0 0
  %174 = vmatprep.subr.bf16.mxu0 0
  %175 = vmatpush1.bf16.msra.mxu0 0
  %176 = vmatprep.subr.bf16.mxu0 0
  %177 = vmatpush1.bf16.msra.mxu0 0
  %178 = vmatprep.subr.bf16.mxu0 0
  %179 = vmatpush1.bf16.msra.mxu0 0
  %180 = vmatprep.subr.bf16.mxu0 0
  %181 = vmatpush1.bf16.msra.mxu0 0
  %182 = vmatprep.subr.bf16.mxu0 0
  %183 = vmatpush1.bf16.msra.mxu0 0
  %184 = vmatprep.subr.bf16.mxu0 0
  %185 = vmatpush1.bf16.msra.mxu0 0
  %186 = vmatprep.subr.bf16.mxu0 0
  %187 = vmatpush1.bf16.msra.mxu0 0
  %188 = vmatprep.mubr.bf16.mxu0 0
  %189 = vmatmul.mubr.bf16.gmra.mrb[0].mxu0 %v92
  %v190 = vpop.f32.mrb[0].mxu0
  %v191 = vadd.f32 %v58, %v190
  %v192 = vpop.f32.mrb[0].mxu0
  %v193 = vpop.f32.mrb[0].mxu0
  %v194 = vadd.f32 %v58, %v193
  %v195 = vpop.f32.mrb[0].mxu0
  %196 = vmatprep.mubr.bf16.mxu0 0
  %197 = vmatmul.mubr.bf16.gmra.mrb[0].mxu0 %v93
  %v198 = vpop.f32.mrb[0].mxu0
  %v199 = vadd.f32 %v58, %v198
  %v200 = vpop.f32.mrb[0].mxu0
  %v201 = vpop.f32.mrb[0].mxu0
  %v202 = vadd.f32 %v58, %v201
  %v203 = vpop.f32.mrb[0].mxu0
  %204 = vmatprep.mubr.bf16.mxu0 0
  %205 = vmatmul.mubr.bf16.gmra.mrb[0].mxu0 %v94
  %v206 = vpop.f32.mrb[0].mxu0
  %v207 = vadd.f32 %v58, %v206
  %v208 = vpop.f32.mrb[0].mxu0
  %v209 = vpop.f32.mrb[0].mxu0
  %v210 = vadd.f32 %v58, %v209
  %v211 = vpop.f32.mrb[0].mxu0
  %212 = vmatprep.mubr.bf16.mxu0 0
  %213 = vmatmul.mubr.bf16.gmra.mrb[0].mxu0 %v95
  %v214 = vpop.f32.mrb[0].mxu0
  %v215 = vadd.f32 %v58, %v214
  %v216 = vpop.f32.mrb[0].mxu0
  %v217 = vpop.f32.mrb[0].mxu0
  %v218 = vadd.f32 %v58, %v217
  %v219 = vpop.f32.mrb[0].mxu0
  %220 = vmatprep.mubr.bf16.mxu0 0
  %221 = vmatmul.mubr.bf16.gmra.mrb[0].mxu0 %v96
  %v222 = vpop.f32.mrb[0].mxu0
  %v223 = vadd.f32 %v58, %v222
  %v224 = vpop.f32.mrb[0].mxu0
  %v225 = vpop.f32.mrb[0].mxu0
  %v226 = vadd.f32 %v58, %v225
  %v227 = vpop.f32.mrb[0].mxu0
  %228 = vmatprep.mubr.bf16.mxu0 0
  %229 = vmatmul.mubr.bf16.gmra.mrb[0].mxu0 %v97
  %v230 = vpop.f32.mrb[0].mxu0
  %v231 = vadd.f32 %v58, %v230
  %v232 = vpop.f32.mrb[0].mxu0
  %v233 = vpop.f32.mrb[0].mxu0
  %v234 = vadd.f32 %v58, %v233
  %v235 = vpop.f32.mrb[0].mxu0
  %236 = vmatprep.mubr.bf16.mxu0 0
  %237 = vmatmul.mubr.bf16.gmra.mrb[0].mxu0 %v98
  %v238 = vpop.f32.mrb[0].mxu0
  %v239 = vadd.f32 %v58, %v238
  %v240 = vpop.f32.mrb[0].mxu0
  %v241 = vpop.f32.mrb[0].mxu0
  %v242 = vadd.f32 %v58, %v241
  %v243 = vpop.f32.mrb[0].mxu0
  %244 = vmatprep.mubr.bf16.mxu0 0
  %245 = vmatmul.mubr.bf16.gmra.mrb[0].mxu0 %v99
  %v246 = vpop.f32.mrb[0].mxu0
  %v247 = vadd.f32 %v58, %v246
  %v248 = vpop.f32.mrb[0].mxu0
  %v249 = vpop.f32.mrb[0].mxu0
  %v250 = vadd.f32 %v58, %v249
  %v251 = vpop.f32.mrb[0].mxu0
  %252 = vdwg.mxu0
  %v253 = vadd.f32 %v191, %v194
  %v254 = vadd.f32 %v253, %v199
  %v255 = vadd.f32 %v254, %v202
  %v256 = vadd.f32 %v255, %v207
  %v257 = vadd.f32 %v256, %v210
  %v258 = vadd.f32 %v257, %v215
  %v259 = vadd.f32 %v258, %v218
  %v260 = vadd.f32 %v259, %v223
  %v261 = vadd.f32 %v260, %v226
  %v262 = vadd.f32 %v261, %v231
  %v263 = vadd.f32 %v262, %v234
  %v264 = vadd.f32 %v263, %v239
  %v265 = vadd.f32 %v264, %v242
  %v266 = vadd.f32 %v265, %v247
  %v267 = vadd.f32 %v266, %v250
  %v268 = vrot.slane %v267, 4
  %v269 = vadd.f32 %v267, %v268
  %v270 = vrot.slane %v269, 2
  %v271 = vadd.f32 %v269, %v270
  %v272 = vrot.slane %v271, 1
  %v273 = vadd.f32 %v271, %v272
  %v274 = vmul.f32 %v21, 0.0
  %v275 = vsub.f32 %v273, %v274
  %v276 = vmul.f32 %v275, 0.0078125
  %v277 = vlaneseq
  %v278 = vshrl.u32 %v277, 7
  %v279 = vsub.s32 0, %v278
  %v280 = vrot.slane %v276, %v279
  %v281 = vsub.f32 %v191, %v280
  %v282 = vsub.f32 %v194, %v280
  %v283 = vsub.f32 %v199, %v280
  %v284 = vsub.f32 %v202, %v280
  %v285 = vsub.f32 %v207, %v280
  %v286 = vsub.f32 %v210, %v280
  %v287 = vsub.f32 %v215, %v280
  %v288 = vsub.f32 %v218, %v280
  %v289 = vsub.f32 %v223, %v280
  %v290 = vsub.f32 %v226, %v280
  %v291 = vsub.f32 %v231, %v280
  %v292 = vsub.f32 %v234, %v280
  %v293 = vsub.f32 %v239, %v280
  %v294 = vsub.f32 %v242, %v280
  %v295 = vsub.f32 %v247, %v280
  %v296 = vsub.f32 %v250, %v280
  %v297 = vsub.f32 %v21, %v276
  %v298 = vmul.f32 %v281, %v281
  %v299 = vmul.f32 %v282, %v282
  %v300 = vmul.f32 %v283, %v283
  %v301 = vmul.f32 %v284, %v284
  %v302 = vmul.f32 %v285, %v285
  %v303 = vmul.f32 %v286, %v286
  %v304 = vmul.f32 %v287, %v287
  %v305 = vmul.f32 %v288, %v288
  %v306 = vmul.f32 %v289, %v289
  %v307 = vmul.f32 %v290, %v290
  %v308 = vmul.f32 %v291, %v291
  %v309 = vmul.f32 %v292, %v292
  %v310 = vmul.f32 %v293, %v293
  %v311 = vmul.f32 %v294, %v294
  %v312 = vmul.f32 %v295, %v295
  %v313 = vmul.f32 %v296, %v296
  %v314 = vadd.f32 %v298, %v299
  %v315 = vadd.f32 %v314, %v300
  %v316 = vadd.f32 %v315, %v301
  %v317 = vadd.f32 %v316, %v302
  %v318 = vadd.f32 %v317, %v303
  %v319 = vadd.f32 %v318, %v304
  %v320 = vadd.f32 %v319, %v305
  %v321 = vadd.f32 %v320, %v306
  %v322 = vadd.f32 %v321, %v307
  %v323 = vadd.f32 %v322, %v308
  %v324 = vadd.f32 %v323, %v309
  %v325 = vadd.f32 %v324, %v310
  %v326 = vadd.f32 %v325, %v311
  %v327 = vadd.f32 %v326, %v312
  %v328 = vadd.f32 %v327, %v313
  %v329 = vrot.slane %v328, 4
  %v330 = vadd.f32 %v328, %v329
  %v331 = vrot.slane %v330, 2
  %v332 = vadd.f32 %v330, %v331
  %v333 = vrot.slane %v332, 1
  %v334 = vadd.f32 %v332, %v333
  %v335 = vmul.f32 %v297, %v297
  %v336 = vmul.f32 %v335, 0.0
  %v337 = vsub.f32 %v334, %v336
  %v338 = vmul.f32 %v337, 0.0078125
  %v339 = vmax.f32 %v338, 0.0
  %v340 = vadd.f32 %v339, 1e-05
  %v341 = vrsqrt.pop %v340
  %v342 = vld [vmem:[%s3] sm:$0x1]
  %v343 = vmul.f32 %v341, %v342
  %v344 = vlaneseq
  %v345 = vshrl.u32 %v344, 7
  %v346 = vsub.s32 0, %v345
  %v347 = vrot.slane %v343, %v346
  %v348 = vmul.f32 %v281, %v347
  %v349 = vmul.f32 %v282, %v347
  %v350 = vmul.f32 %v283, %v347
  %v351 = vmul.f32 %v284, %v347
  %v352 = vmul.f32 %v285, %v347
  %v353 = vmul.f32 %v286, %v347
  %v354 = vmul.f32 %v287, %v347
  %v355 = vmul.f32 %v288, %v347
  %v356 = vmul.f32 %v289, %v347
  %v357 = vmul.f32 %v290, %v347
  %v358 = vmul.f32 %v291, %v347
  %v359 = vmul.f32 %v292, %v347
  %v360 = vmul.f32 %v293, %v347
  %v361 = vmul.f32 %v294, %v347
  %v362 = vmul.f32 %v295, %v347
  %v363 = vmul.f32 %v296, %v347
  %v364 = vld [vmem:[%s4] sm:$0x1]
  %v366 = vlaneseq
  %v367 = vshrl.u32 %v366, 7
  %v368 = vsub.s32 0, %v367
  %v369 = vrot.slane %v364, %v368
  %v371 = vadd.f32 %v348, %v369
  %v372 = vadd.f32 %v349, %v369
  %v373 = vadd.f32 %v350, %v369
  %v374 = vadd.f32 %v351, %v369
  %v375 = vadd.f32 %v352, %v369
  %v376 = vadd.f32 %v353, %v369
  %v377 = vadd.f32 %v354, %v369
  %v378 = vadd.f32 %v355, %v369
  %v379 = vadd.f32 %v356, %v369
  %v380 = vadd.f32 %v357, %v369
  %v381 = vadd.f32 %v358, %v369
  %v382 = vadd.f32 %v359, %v369
  %v383 = vadd.f32 %v360, %v369
  %v384 = vadd.f32 %v361, %v369
  %v385 = vadd.f32 %v362, %v369
  %v386 = vadd.f32 %v363, %v369
  %vm387 = vcmp.gt.f32.partialorder %v371, 0.0
  %vm388 = vcmp.gt.f32.partialorder %v372, 0.0
  %vm389 = vcmp.gt.f32.partialorder %v373, 0.0
  %vm390 = vcmp.gt.f32.partialorder %v374, 0.0
  %vm391 = vcmp.gt.f32.partialorder %v375, 0.0
  %vm392 = vcmp.gt.f32.partialorder %v376, 0.0
  %vm393 = vcmp.gt.f32.partialorder %v377, 0.0
  %vm394 = vcmp.gt.f32.partialorder %v378, 0.0
  %vm395 = vcmp.gt.f32.partialorder %v379, 0.0
  %vm396 = vcmp.gt.f32.partialorder %v380, 0.0
  %vm397 = vcmp.gt.f32.partialorder %v381, 0.0
  %vm398 = vcmp.gt.f32.partialorder %v382, 0.0
  %vm399 = vcmp.gt.f32.partialorder %v383, 0.0
  %vm400 = vcmp.gt.f32.partialorder %v384, 0.0
  %vm401 = vcmp.gt.f32.partialorder %v385, 0.0
  %vm402 = vcmp.gt.f32.partialorder %v386, 0.0
  %v403 = vmul.f32 %v371, 0.2
  %v404 = vmul.f32 %v372, 0.2
  %v405 = vmul.f32 %v373, 0.2
  %v406 = vmul.f32 %v374, 0.2
  %v407 = vmul.f32 %v375, 0.2
  %v408 = vmul.f32 %v376, 0.2
  %v409 = vmul.f32 %v377, 0.2
  %v410 = vmul.f32 %v378, 0.2
  %v411 = vmul.f32 %v379, 0.2
  %v412 = vmul.f32 %v380, 0.2
  %v413 = vmul.f32 %v381, 0.2
  %v414 = vmul.f32 %v382, 0.2
  %v415 = vmul.f32 %v383, 0.2
  %v416 = vmul.f32 %v384, 0.2
  %v417 = vmul.f32 %v385, 0.2
  %v418 = vmul.f32 %v386, 0.2
  %v419 = vsel %vm387, %v371, %v403
  %v420 = vsel %vm388, %v372, %v404
  %v421 = vsel %vm389, %v373, %v405
  %v422 = vsel %vm390, %v374, %v406
  %v423 = vsel %vm391, %v375, %v407
  %v424 = vsel %vm392, %v376, %v408
  %v425 = vsel %vm393, %v377, %v409
  %v426 = vsel %vm394, %v378, %v410
  %v427 = vsel %vm395, %v379, %v411
  %v428 = vsel %vm396, %v380, %v412
  %v429 = vsel %vm397, %v381, %v413
  %v430 = vsel %vm398, %v382, %v414
  %v431 = vsel %vm399, %v383, %v415
  %v432 = vsel %vm400, %v384, %v416
  %v433 = vsel %vm401, %v385, %v417
  %v434 = vsel %vm402, %v386, %v418
  %v435 = vpack.c.bf16 %v420, %v419
  %v436 = vpack.c.bf16 %v422, %v421
  %v437 = vpack.c.bf16 %v424, %v423
  %v438 = vpack.c.bf16 %v426, %v425
  %v439 = vpack.c.bf16 %v428, %v427
  %v440 = vpack.c.bf16 %v430, %v429
  %v441 = vpack.c.bf16 %v432, %v431
  %v442 = vpack.c.bf16 %v434, %v433
  %v451 = vunpack.c.l.b16 %v435
  %v452 = vunpack.c.h.b16 %v435
  %v453 = vunpack.c.l.b16 %v436
  %v454 = vunpack.c.h.b16 %v436
  %v455 = vunpack.c.l.b16 %v437
  %v456 = vunpack.c.h.b16 %v437
  %v457 = vunpack.c.l.b16 %v438
  %v458 = vunpack.c.h.b16 %v438
  %v459 = vunpack.c.l.b16 %v439
  %v460 = vunpack.c.h.b16 %v439
  %v461 = vunpack.c.l.b16 %v440
  %v462 = vunpack.c.h.b16 %v440
  %v463 = vunpack.c.l.b16 %v441
  %v464 = vunpack.c.h.b16 %v441
  %v465 = vunpack.c.l.b16 %v442
  %v466 = vunpack.c.h.b16 %v442
  %v467 = vpack.c.b16 %v451, %v451
  %v468 = vpack.c.b16 %v452, %v452
  %v469 = vpack.c.b16 %v453, %v453
  %v470 = vpack.c.b16 %v454, %v454
  %v471 = vpack.c.b16 %v455, %v455
  %v472 = vpack.c.b16 %v456, %v456
  %v473 = vpack.c.b16 %v457, %v457
  %v474 = vpack.c.b16 %v458, %v458
  %v475 = vpack.c.b16 %v459, %v459
  %v476 = vpack.c.b16 %v460, %v460
  %v477 = vpack.c.b16 %v461, %v461
  %v478 = vpack.c.b16 %v462, %v462
  %v479 = vpack.c.b16 %v463, %v463
  %v480 = vpack.c.b16 %v464, %v464
  %v481 = vpack.c.b16 %v465, %v465
  %v482 = vpack.c.b16 %v466, %v466
  %499 = vst [vmem:[%s5] sm:$0xf] %v467
  %500 = vst [vmem:[%s5 + $0x4] sm:$0xf] %v468
  %501 = vst [vmem:[%s5 + $0x8] sm:$0xf] %v469
  %502 = vst [vmem:[%s5 + $0xc] sm:$0xf] %v470
  %503 = vst [vmem:[%s5 + $0x10] sm:$0xf] %v471
  %504 = vst [vmem:[%s5 + $0x14] sm:$0xf] %v472
  %505 = vst [vmem:[%s5 + $0x18] sm:$0xf] %v473
  %506 = vst [vmem:[%s5 + $0x1c] sm:$0xf] %v474
  %507 = vst [vmem:[%s5 + $0x20] sm:$0xf] %v475
  %508 = vst [vmem:[%s5 + $0x24] sm:$0xf] %v476
  %509 = vst [vmem:[%s5 + $0x28] sm:$0xf] %v477
  %510 = vst [vmem:[%s5 + $0x2c] sm:$0xf] %v478
  %511 = vst [vmem:[%s5 + $0x30] sm:$0xf] %v479
  %512 = vst [vmem:[%s5 + $0x34] sm:$0xf] %v480
  %513 = vst [vmem:[%s5 + $0x38] sm:$0xf] %v481
  %514 = vst [vmem:[%s5 + $0x3c] sm:$0xf] %v482
  // Predicated region
  $region22: #{_lambda_.6} parent=0 // pred_check
    _
  $region23: #{_lambda_.6} parent=0 // pred_check_branch
    %516 = sbr.rel (0) target = $region25
  $region24: #{_lambda_.6} parent=0 // pred_region
    _
  $region25: #{_lambda_.6} parent=0 // pred_fallthru
    _
  // Predicated region
  $region26: #{_lambda_.6} parent=0 // pred_check
    _
  $region27: #{_lambda_.6} parent=0 // pred_check_branch
    %518 = sbr.rel (0) target = $region29
  $region28: #{_lambda_.6} parent=0 // pred_region
    _
  $region29: #{_lambda_.6} parent=0 // pred_fallthru
    _

// kernel: _lambda_.7
$region0: #{_lambda_.7}
  #allocation0 [shape = 'u32[]', space=smem, size = 0x4, offset = 0x4, fixed_abs, tag = 'smem constant byte address 0x4 - core index']
  #allocation1 [shape = 'u32[144,128]{1,0:T(1,128)}', space=vmem, size = 0x12000, scoped, tag = 'internal scratch']
  %s0 = inlined_call_operand.vmem [shape: bf16[32,256], index: 0, kind: input, shape index: {}]
  %s1 = inlined_call_operand.vmem [shape: bf16[256,128], index: 1, kind: input, shape index: {}]
  %s2 = inlined_call_operand.vmem [shape: f32[1,128], index: 2, kind: input, shape index: {}]
  %s3 = inlined_call_operand.vmem [shape: f32[1,128], index: 3, kind: input, shape index: {}]
  %s4 = inlined_call_operand.vmem [shape: f32[1,128], index: 4, kind: input, shape index: {}]
  %s5 = inlined_call_operand.vmem [shape: bf16[32,128], index: 5, kind: output, shape index: {}]
  %s6 = sld [smem:[#allocation0]]
  $region30: #{_lambda_.7} parent=0
    _
  %s8 = ssub.s32 1, %s6
  %s9 = scalar_select 0, %s8, %s6
  // Predicated region
  $region2: #{_lambda_.7} parent=0 // pred_check
    _
  $region3: #{_lambda_.7} parent=0 // pred_check_branch
    %11 = sbr.rel (0) target = $region5
  $region4: #{_lambda_.7} parent=0 // pred_region
    _
  $region5: #{_lambda_.7} parent=0 // pred_fallthru
    _
  // Predicated region
  $region6: #{_lambda_.7} parent=0 // pred_check
    _
  $region7: #{_lambda_.7} parent=0 // pred_check_branch
    %13 = sbr.rel (0) target = $region9
  $region8: #{_lambda_.7} parent=0 // pred_region
    _
  $region9: #{_lambda_.7} parent=0 // pred_fallthru
    _
  // Predicated region
  $region10: #{_lambda_.7} parent=0 // pred_check
    _
  $region11: #{_lambda_.7} parent=0 // pred_check_branch
    %15 = sbr.rel (0) target = $region13
  $region12: #{_lambda_.7} parent=0 // pred_region
    _
  $region13: #{_lambda_.7} parent=0 // pred_fallthru
    _
  // Predicated region
  $region14: #{_lambda_.7} parent=0 // pred_check
    _
  $region15: #{_lambda_.7} parent=0 // pred_check_branch
    %17 = sbr.rel (0) target = $region17
  $region16: #{_lambda_.7} parent=0 // pred_region
    _
  $region17: #{_lambda_.7} parent=0 // pred_fallthru
    _
  // Predicated region
  $region18: #{_lambda_.7} parent=0 // pred_check
    _
  $region19: #{_lambda_.7} parent=0 // pred_check_branch
    %19 = sbr.rel (0) target = $region21
  $region20: #{_lambda_.7} parent=0 // pred_region
    _
  $region21: #{_lambda_.7} parent=0 // pred_fallthru
    _
  %v21 = vld [vmem:[%s2] sm:$0x1]
  %v22 = vld [vmem:[%s0] sm:$0xff]
  %v23 = vld [vmem:[%s0 + $0x8] sm:$0xff]
  %v24 = vld [vmem:[%s0 + $0x10] sm:$0xff]
  %v25 = vld [vmem:[%s0 + $0x18] sm:$0xff]
  %v26 = vld [vmem:[%s1] sm:$0xf]
  %v27 = vld [vmem:[%s1 + $0x4] sm:$0xf]
  %v28 = vld [vmem:[%s1 + $0x8] sm:$0xf]
  %v29 = vld [vmem:[%s1 + $0xc] sm:$0xf]
  %v30 = vld [vmem:[%s1 + $0x10] sm:$0xf]
  %v31 = vld [vmem:[%s1 + $0x14] sm:$0xf]
  %v32 = vld [vmem:[%s1 + $0x18] sm:$0xf]
  %v33 = vld [vmem:[%s1 + $0x1c] sm:$0xf]
  %v34 = vld [vmem:[%s1 + $0x20] sm:$0xf]
  %v35 = vld [vmem:[%s1 + $0x24] sm:$0xf]
  %v36 = vld [vmem:[%s1 + $0x28] sm:$0xf]
  %v37 = vld [vmem:[%s1 + $0x2c] sm:$0xf]
  %v38 = vld [vmem:[%s1 + $0x30] sm:$0xf]
  %v39 = vld [vmem:[%s1 + $0x34] sm:$0xf]
  %v40 = vld [vmem:[%s1 + $0x38] sm:$0xf]
  %v41 = vld [vmem:[%s1 + $0x3c] sm:$0xf]
  %v42 = vld [vmem:[%s1 + $0x40] sm:$0xf]
  %v43 = vld [vmem:[%s1 + $0x44] sm:$0xf]
  %v44 = vld [vmem:[%s1 + $0x48] sm:$0xf]
  %v45 = vld [vmem:[%s1 + $0x4c] sm:$0xf]
  %v46 = vld [vmem:[%s1 + $0x50] sm:$0xf]
  %v47 = vld [vmem:[%s1 + $0x54] sm:$0xf]
  %v48 = vld [vmem:[%s1 + $0x58] sm:$0xf]
  %v49 = vld [vmem:[%s1 + $0x5c] sm:$0xf]
  %v50 = vld [vmem:[%s1 + $0x60] sm:$0xf]
  %v51 = vld [vmem:[%s1 + $0x64] sm:$0xf]
  %v52 = vld [vmem:[%s1 + $0x68] sm:$0xf]
  %v53 = vld [vmem:[%s1 + $0x6c] sm:$0xf]
  %v54 = vld [vmem:[%s1 + $0x70] sm:$0xf]
  %v55 = vld [vmem:[%s1 + $0x74] sm:$0xf]
  %v56 = vld [vmem:[%s1 + $0x78] sm:$0xf]
  %v57 = vld [vmem:[%s1 + $0x7c] sm:$0xf]
  %v59 = vlaneseq
  %v60 = vshrl.u32 %v59, 7
  %v61 = vsub.s32 0, %v60
  %v62 = vrot.slane %v21, %v61
  %v68 = vunpack.c.l.b16 %v22
  %v69 = vunpack.c.h.b16 %v22
  %v70 = vunpack.c.l.b16 %v23
  %v71 = vunpack.c.h.b16 %v23
  %v72 = vunpack.c.l.b16 %v24
  %v73 = vunpack.c.h.b16 %v24
  %v74 = vunpack.c.l.b16 %v25
  %v75 = vunpack.c.h.b16 %v25
  %v76 = vpack.c.b16 %v70, %v68
  %v77 = vpack.c.b16 %v71, %v69
  %v78 = vpack.c.b16 %v74, %v72
  %v79 = vpack.c.b16 %v75, %v73
  %v116 = vunpack.c.l.b16 %v26
  %v117 = vunpack.c.l.b16 %v27
  %v118 = vunpack.c.l.b16 %v28
  %v119 = vunpack.c.l.b16 %v29
  %v120 = vunpack.c.l.b16 %v30
  %v121 = vunpack.c.l.b16 %v31
  %v122 = vunpack.c.l.b16 %v32
  %v123 = vunpack.c.l.b16 %v33
  %v124 = vunpack.c.l.b16 %v34
  %v125 = vunpack.c.l.b16 %v35
  %v126 = vunpack.c.l.b16 %v36
  %v127 = vunpack.c.l.b16 %v37
  %v128 = vunpack.c.l.b16 %v38
  %v129 = vunpack.c.l.b16 %v39
  %v130 = vunpack.c.l.b16 %v40
  %v131 = vunpack.c.l.b16 %v41
  %v132 = vunpack.c.l.b16 %v42
  %v133 = vunpack.c.l.b16 %v43
  %v134 = vunpack.c.l.b16 %v44
  %v135 = vunpack.c.l.b16 %v45
  %v136 = vunpack.c.l.b16 %v46
  %v137 = vunpack.c.l.b16 %v47
  %v138 = vunpack.c.l.b16 %v48
  %v139 = vunpack.c.l.b16 %v49
  %v140 = vunpack.c.l.b16 %v50
  %v141 = vunpack.c.l.b16 %v51
  %v142 = vunpack.c.l.b16 %v52
  %v143 = vunpack.c.l.b16 %v53
  %v144 = vunpack.c.l.b16 %v54
  %v145 = vunpack.c.l.b16 %v55
  %v146 = vunpack.c.l.b16 %v56
  %v147 = vunpack.c.l.b16 %v57
  %v148 = vpack.c.b16 %v117, %v116
  %v149 = vpack.c.b16 %v119, %v118
  %v150 = vpack.c.b16 %v121, %v120
  %v151 = vpack.c.b16 %v123, %v122
  %v152 = vpack.c.b16 %v125, %v124
  %v153 = vpack.c.b16 %v127, %v126
  %v154 = vpack.c.b16 %v129, %v128
  %v155 = vpack.c.b16 %v131, %v130
  %v156 = vpack.c.b16 %v133, %v132
  %v157 = vpack.c.b16 %v135, %v134
  %v158 = vpack.c.b16 %v137, %v136
  %v159 = vpack.c.b16 %v139, %v138
  %v160 = vpack.c.b16 %v141, %v140
  %v161 = vpack.c.b16 %v143, %v142
  %v162 = vpack.c.b16 %v145, %v144
  %v163 = vpack.c.b16 %v147, %v146
  %180 = vmatprep.subr.bf16.mxu0 0
  %181 = vmatpush1.bf16.msra.mxu0 %v148
  %182 = vmatprep.subr.bf16.mxu0 0
  %183 = vmatpush1.bf16.msra.mxu0 %v149
  %184 = vmatprep.subr.bf16.mxu0 0
  %185 = vmatpush1.bf16.msra.mxu0 %v150
  %186 = vmatprep.subr.bf16.mxu0 0
  %187 = vmatpush1.bf16.msra.mxu0 %v151
  %188 = vmatprep.subr.bf16.mxu0 0
  %189 = vmatpush1.bf16.msra.mxu0 %v152
  %190 = vmatprep.subr.bf16.mxu0 0
  %191 = vmatpush1.bf16.msra.mxu0 %v153
  %192 = vmatprep.subr.bf16.mxu0 0
  %193 = vmatpush1.bf16.msra.mxu0 %v154
  %194 = vmatprep.subr.bf16.mxu0 0
  %195 = vmatpush1.bf16.msra.mxu0 %v155
  %196 = vmatprep.subr.bf16.mxu0 0
  %197 = vmatpush1.bf16.msra.mxu0 %v156
  %198 = vmatprep.subr.bf16.mxu0 0
  %199 = vmatpush1.bf16.msra.mxu0 %v157
  %200 = vmatprep.subr.bf16.mxu0 0
  %201 = vmatpush1.bf16.msra.mxu0 %v158
  %202 = vmatprep.subr.bf16.mxu0 0
  %203 = vmatpush1.bf16.msra.mxu0 %v159
  %204 = vmatprep.subr.bf16.mxu0 0
  %205 = vmatpush1.bf16.msra.mxu0 %v160
  %206 = vmatprep.subr.bf16.mxu0 0
  %207 = vmatpush1.bf16.msra.mxu0 %v161
  %208 = vmatprep.subr.bf16.mxu0 0
  %209 = vmatpush1.bf16.msra.mxu0 %v162
  %210 = vmatprep.subr.bf16.mxu0 0
  %211 = vmatpush1.bf16.msra.mxu0 %v163
  %212 = vmatprep.mubr.bf16.mxu0 %v77
  %213 = vmatmul.mubr.bf16.gmra.mrb[0].mxu0 %v76
  %v214 = vpop.f32.mrb[0].mxu0
  %v215 = vadd.f32 %v62, %v214
  %v216 = vpop.f32.mrb[0].mxu0
  %v217 = vpop.f32.mrb[0].mxu0
  %v218 = vadd.f32 %v62, %v217
  %v219 = vpop.f32.mrb[0].mxu0
  %220 = vmatprep.mubr.bf16.mxu0 %v79
  %221 = vmatmul.mubr.bf16.gmra.mrb[0].mxu0 %v78
  %v222 = vpop.f32.mrb[0].mxu0
  %v223 = vadd.f32 %v62, %v222
  %v224 = vpop.f32.mrb[0].mxu0
  %v225 = vpop.f32.mrb[0].mxu0
  %v226 = vadd.f32 %v62, %v225
  %v227 = vpop.f32.mrb[0].mxu0
  %228 = vdwg.mxu0
  %v229 = vadd.f32 %v215, %v218
  %v230 = vadd.f32 %v229, %v223
  %v231 = vadd.f32 %v230, %v226
  %v232 = vrot.slane %v231, 4
  %v233 = vadd.f32 %v231, %v232
  %v234 = vrot.slane %v233, 2
  %v235 = vadd.f32 %v233, %v234
  %v236 = vrot.slane %v235, 1
  %v237 = vadd.f32 %v235, %v236
  %v238 = vmul.f32 %v21, 0.0
  %v239 = vsub.f32 %v237, %v238
  %v240 = vmul.f32 %v239, 0.03125
  %v241 = vlaneseq
  %v242 = vshrl.u32 %v241, 7
  %v243 = vsub.s32 0, %v242
  %v244 = vrot.slane %v240, %v243
  %v245 = vsub.f32 %v215, %v244
  %v246 = vsub.f32 %v218, %v244
  %v247 = vsub.f32 %v223, %v244
  %v248 = vsub.f32 %v226, %v244
  %v249 = vsub.f32 %v21, %v240
  %v250 = vmul.f32 %v245, %v245
  %v251 = vmul.f32 %v246, %v246
  %v252 = vmul.f32 %v247, %v247
  %v253 = vmul.f32 %v248, %v248
  %v254 = vadd.f32 %v250, %v251
  %v255 = vadd.f32 %v254, %v252
  %v256 = vadd.f32 %v255, %v253
  %v257 = vrot.slane %v256, 4
  %v258 = vadd.f32 %v256, %v257
  %v259 = vrot.slane %v258, 2
  %v260 = vadd.f32 %v258, %v259
  %v261 = vrot.slane %v260, 1
  %v262 = vadd.f32 %v260, %v261
  %v263 = vmul.f32 %v249, %v249
  %v264 = vmul.f32 %v263, 0.0
  %v265 = vsub.f32 %v262, %v264
  %v266 = vmul.f32 %v265, 0.03125
  %v267 = vmax.f32 %v266, 0.0
  %v268 = vadd.f32 %v267, 1e-05
  %v269 = vrsqrt.pop %v268
  %v270 = vld [vmem:[%s3] sm:$0x1]
  %v271 = vmul.f32 %v269, %v270
  %v272 = vlaneseq
  %v273 = vshrl.u32 %v272, 7
  %v274 = vsub.s32 0, %v273
  %v275 = vrot.slane %v271, %v274
  %v276 = vmul.f32 %v245, %v275
  %v277 = vmul.f32 %v246, %v275
  %v278 = vmul.f32 %v247, %v275
  %v279 = vmul.f32 %v248, %v275
  %v280 = vld [vmem:[%s4] sm:$0x1]
  %v282 = vlaneseq
  %v283 = vshrl.u32 %v282, 7
  %v284 = vsub.s32 0, %v283
  %v285 = vrot.slane %v280, %v284
  %v287 = vadd.f32 %v276, %v285
  %v288 = vadd.f32 %v277, %v285
  %v289 = vadd.f32 %v278, %v285
  %v290 = vadd.f32 %v279, %v285
  %vm291 = vcmp.gt.f32.partialorder %v287, 0.0
  %vm292 = vcmp.gt.f32.partialorder %v288, 0.0
  %vm293 = vcmp.gt.f32.partialorder %v289, 0.0
  %vm294 = vcmp.gt.f32.partialorder %v290, 0.0
  %v295 = vmul.f32 %v287, 0.2
  %v296 = vmul.f32 %v288, 0.2
  %v297 = vmul.f32 %v289, 0.2
  %v298 = vmul.f32 %v290, 0.2
  %v299 = vsel %vm291, %v287, %v295
  %v300 = vsel %vm292, %v288, %v296
  %v301 = vsel %vm293, %v289, %v297
  %v302 = vsel %vm294, %v290, %v298
  %v303 = vpack.c.bf16 %v300, %v299
  %v304 = vpack.c.bf16 %v302, %v301
  %v307 = vunpack.c.l.b16 %v303
  %v308 = vunpack.c.h.b16 %v303
  %v309 = vunpack.c.l.b16 %v304
  %v310 = vunpack.c.h.b16 %v304
  %v311 = vpack.c.b16 %v307, %v307
  %v312 = vpack.c.b16 %v308, %v308
  %v313 = vpack.c.b16 %v309, %v309
  %v314 = vpack.c.b16 %v310, %v310
  %319 = vst [vmem:[%s5] sm:$0xf] %v311
  %320 = vst [vmem:[%s5 + $0x4] sm:$0xf] %v312
  %321 = vst [vmem:[%s5 + $0x8] sm:$0xf] %v313
  %322 = vst [vmem:[%s5 + $0xc] sm:$0xf] %v314
  // Predicated region
  $region22: #{_lambda_.7} parent=0 // pred_check
    _
  $region23: #{_lambda_.7} parent=0 // pred_check_branch
    %324 = sbr.rel (0) target = $region25
  $region24: #{_lambda_.7} parent=0 // pred_region
    _
  $region25: #{_lambda_.7} parent=0 // pred_fallthru
    _
  // Predicated region
  $region26: #{_lambda_.7} parent=0 // pred_check
    _
  $region27: #{_lambda_.7} parent=0 // pred_check_branch
    %326 = sbr.rel (0) target = $region29
  $region28: #{_lambda_.7} parent=0 // pred_region
    _
  $region29: #{_lambda_.7} parent=0 // pred_fallthru
    _

// kernel: _lambda_.8
$region0: #{_lambda_.8}
  #allocation0 [shape = 'u32[]', space=smem, size = 0x4, offset = 0x4, fixed_abs, tag = 'smem constant byte address 0x4 - core index']
  #allocation1 [shape = 'u32[144,128]{1,0:T(1,128)}', space=vmem, size = 0x12000, scoped, tag = 'internal scratch']
  %s0 = inlined_call_operand.vmem [shape: bf16[32,512], index: 0, kind: input, shape index: {}]
  %s1 = inlined_call_operand.vmem [shape: bf16[512,128], index: 1, kind: input, shape index: {}]
  %s2 = inlined_call_operand.vmem [shape: f32[1,128], index: 2, kind: input, shape index: {}]
  %s3 = inlined_call_operand.vmem [shape: f32[1,128], index: 3, kind: input, shape index: {}]
  %s4 = inlined_call_operand.vmem [shape: f32[1,128], index: 4, kind: input, shape index: {}]
  %s5 = inlined_call_operand.vmem [shape: bf16[32,128], index: 5, kind: output, shape index: {}]
  %s6 = sld [smem:[#allocation0]]
  $region30: #{_lambda_.8} parent=0
    _
  %s8 = ssub.s32 1, %s6
  %s9 = scalar_select 0, %s8, %s6
  // Predicated region
  $region2: #{_lambda_.8} parent=0 // pred_check
    _
  $region3: #{_lambda_.8} parent=0 // pred_check_branch
    %11 = sbr.rel (0) target = $region5
  $region4: #{_lambda_.8} parent=0 // pred_region
    _
  $region5: #{_lambda_.8} parent=0 // pred_fallthru
    _
  // Predicated region
  $region6: #{_lambda_.8} parent=0 // pred_check
    _
  $region7: #{_lambda_.8} parent=0 // pred_check_branch
    %13 = sbr.rel (0) target = $region9
  $region8: #{_lambda_.8} parent=0 // pred_region
    _
  $region9: #{_lambda_.8} parent=0 // pred_fallthru
    _
  // Predicated region
  $region10: #{_lambda_.8} parent=0 // pred_check
    _
  $region11: #{_lambda_.8} parent=0 // pred_check_branch
    %15 = sbr.rel (0) target = $region13
  $region12: #{_lambda_.8} parent=0 // pred_region
    _
  $region13: #{_lambda_.8} parent=0 // pred_fallthru
    _
  // Predicated region
  $region14: #{_lambda_.8} parent=0 // pred_check
    _
  $region15: #{_lambda_.8} parent=0 // pred_check_branch
    %17 = sbr.rel (0) target = $region17
  $region16: #{_lambda_.8} parent=0 // pred_region
    _
  $region17: #{_lambda_.8} parent=0 // pred_fallthru
    _
  // Predicated region
  $region18: #{_lambda_.8} parent=0 // pred_check
    _
  $region19: #{_lambda_.8} parent=0 // pred_check_branch
    %19 = sbr.rel (0) target = $region21
  $region20: #{_lambda_.8} parent=0 // pred_region
    _
  $region21: #{_lambda_.8} parent=0 // pred_fallthru
    _
  %v21 = vld [vmem:[%s2] sm:$0x1]
  %v22 = vld [vmem:[%s0] sm:$0xff]
  %v23 = vld [vmem:[%s0 + $0x8] sm:$0xff]
  %v24 = vld [vmem:[%s0 + $0x10] sm:$0xff]
  %v25 = vld [vmem:[%s0 + $0x18] sm:$0xff]
  %v26 = vld [vmem:[%s0 + $0x20] sm:$0xff]
  %v27 = vld [vmem:[%s0 + $0x28] sm:$0xff]
  %v28 = vld [vmem:[%s0 + $0x30] sm:$0xff]
  %v29 = vld [vmem:[%s0 + $0x38] sm:$0xff]
  %v30 = vld [vmem:[%s1] sm:$0xf]
  %v31 = vld [vmem:[%s1 + $0x4] sm:$0xf]
  %v32 = vld [vmem:[%s1 + $0x8] sm:$0xf]
  %v33 = vld [vmem:[%s1 + $0xc] sm:$0xf]
  %v34 = vld [vmem:[%s1 + $0x10] sm:$0xf]
  %v35 = vld [vmem:[%s1 + $0x14] sm:$0xf]
  %v36 = vld [vmem:[%s1 + $0x18] sm:$0xf]
  %v37 = vld [vmem:[%s1 + $0x1c] sm:$0xf]
  %v38 = vld [vmem:[%s1 + $0x20] sm:$0xf]
  %v39 = vld [vmem:[%s1 + $0x24] sm:$0xf]
  %v40 = vld [vmem:[%s1 + $0x28] sm:$0xf]
  %v41 = vld [vmem:[%s1 + $0x2c] sm:$0xf]
  %v42 = vld [vmem:[%s1 + $0x30] sm:$0xf]
  %v43 = vld [vmem:[%s1 + $0x34] sm:$0xf]
  %v44 = vld [vmem:[%s1 + $0x38] sm:$0xf]
  %v45 = vld [vmem:[%s1 + $0x3c] sm:$0xf]
  %v46 = vld [vmem:[%s1 + $0x40] sm:$0xf]
  %v47 = vld [vmem:[%s1 + $0x44] sm:$0xf]
  %v48 = vld [vmem:[%s1 + $0x48] sm:$0xf]
  %v49 = vld [vmem:[%s1 + $0x4c] sm:$0xf]
  %v50 = vld [vmem:[%s1 + $0x50] sm:$0xf]
  %v51 = vld [vmem:[%s1 + $0x54] sm:$0xf]
  %v52 = vld [vmem:[%s1 + $0x58] sm:$0xf]
  %v53 = vld [vmem:[%s1 + $0x5c] sm:$0xf]
  %v54 = vld [vmem:[%s1 + $0x60] sm:$0xf]
  %v55 = vld [vmem:[%s1 + $0x64] sm:$0xf]
  %v56 = vld [vmem:[%s1 + $0x68] sm:$0xf]
  %v57 = vld [vmem:[%s1 + $0x6c] sm:$0xf]
  %v58 = vld [vmem:[%s1 + $0x70] sm:$0xf]
  %v59 = vld [vmem:[%s1 + $0x74] sm:$0xf]
  %v60 = vld [vmem:[%s1 + $0x78] sm:$0xf]
  %v61 = vld [vmem:[%s1 + $0x7c] sm:$0xf]
  %v62 = vld [vmem:[%s1 + $0x80] sm:$0xf]
  %v63 = vld [vmem:[%s1 + $0x84] sm:$0xf]
  %v64 = vld [vmem:[%s1 + $0x88] sm:$0xf]
  %v65 = vld [vmem:[%s1 + $0x8c] sm:$0xf]
  %v66 = vld [vmem:[%s1 + $0x90] sm:$0xf]
  %v67 = vld [vmem:[%s1 + $0x94] sm:$0xf]
  %v68 = vld [vmem:[%s1 + $0x98] sm:$0xf]
  %v69 = vld [vmem:[%s1 + $0x9c] sm:$0xf]
  %v70 = vld [vmem:[%s1 + $0xa0] sm:$0xf]
  %v71 = vld [vmem:[%s1 + $0xa4] sm:$0xf]
  %v72 = vld [vmem:[%s1 + $0xa8] sm:$0xf]
  %v73 = vld [vmem:[%s1 + $0xac] sm:$0xf]
  %v74 = vld [vmem:[%s1 + $0xb0] sm:$0xf]
  %v75 = vld [vmem:[%s1 + $0xb4] sm:$0xf]
  %v76 = vld [vmem:[%s1 + $0xb8] sm:$0xf]
  %v77 = vld [vmem:[%s1 + $0xbc] sm:$0xf]
  %v78 = vld [vmem:[%s1 + $0xc0] sm:$0xf]
  %v79 = vld [vmem:[%s1 + $0xc4] sm:$0xf]
  %v80 = vld [vmem:[%s1 + $0xc8] sm:$0xf]
  %v81 = vld [vmem:[%s1 + $0xcc] sm:$0xf]
  %v82 = vld [vmem:[%s1 + $0xd0] sm:$0xf]
  %v83 = vld [vmem:[%s1 + $0xd4] sm:$0xf]
  %v84 = vld [vmem:[%s1 + $0xd8] sm:$0xf]
  %v85 = vld [vmem:[%s1 + $0xdc] sm:$0xf]
  %v86 = vld [vmem:[%s1 + $0xe0] sm:$0xf]
  %v87 = vld [vmem:[%s1 + $0xe4] sm:$0xf]
  %v88 = vld [vmem:[%s1 + $0xe8] sm:$0xf]
  %v89 = vld [vmem:[%s1 + $0xec] sm:$0xf]
  %v90 = vld [vmem:[%s1 + $0xf0] sm:$0xf]
  %v91 = vld [vmem:[%s1 + $0xf4] sm:$0xf]
  %v92 = vld [vmem:[%s1 + $0xf8] sm:$0xf]
  %v93 = vld [vmem:[%s1 + $0xfc] sm:$0xf]
  %v95 = vlaneseq
  %v96 = vshrl.u32 %v95, 7
  %v97 = vsub.s32 0, %v96
  %v98 = vrot.slane %v21, %v97
  %v108 = vunpack.c.l.b16 %v22
  %v109 = vunpack.c.h.b16 %v22
  %v110 = vunpack.c.l.b16 %v23
  %v111 = vunpack.c.h.b16 %v23
  %v112 = vunpack.c.l.b16 %v24
  %v113 = vunpack.c.h.b16 %v24
  %v114 = vunpack.c.l.b16 %v25
  %v115 = vunpack.c.h.b16 %v25
  %v116 = vunpack.c.l.b16 %v26
  %v117 = vunpack.c.h.b16 %v26
  %v118 = vunpack.c.l.b16 %v27
  %v119 = vunpack.c.h.b16 %v27
  %v120 = vunpack.c.l.b16 %v28
  %v121 = vunpack.c.h.b16 %v28
  %v122 = vunpack.c.l.b16 %v29
  %v123 = vunpack.c.h.b16 %v29
  %v124 = vpack.c.b16 %v112, %v108
  %v125 = vpack.c.b16 %v113, %v109
  %v126 = vpack.c.b16 %v114, %v110
  %v127 = vpack.c.b16 %v115, %v111
  %v128 = vpack.c.b16 %v120, %v116
  %v129 = vpack.c.b16 %v121, %v117
  %v130 = vpack.c.b16 %v122, %v118
  %v131 = vpack.c.b16 %v123, %v119
  %v204 = vunpack.c.l.b16 %v30
  %v205 = vunpack.c.l.b16 %v31
  %v206 = vunpack.c.l.b16 %v32
  %v207 = vunpack.c.l.b16 %v33
  %v208 = vunpack.c.l.b16 %v34
  %v209 = vunpack.c.l.b16 %v35
  %v210 = vunpack.c.l.b16 %v36
  %v211 = vunpack.c.l.b16 %v37
  %v212 = vunpack.c.l.b16 %v38
  %v213 = vunpack.c.l.b16 %v39
  %v214 = vunpack.c.l.b16 %v40
  %v215 = vunpack.c.l.b16 %v41
  %v216 = vunpack.c.l.b16 %v42
  %v217 = vunpack.c.l.b16 %v43
  %v218 = vunpack.c.l.b16 %v44
  %v219 = vunpack.c.l.b16 %v45
  %v220 = vunpack.c.l.b16 %v46
  %v221 = vunpack.c.l.b16 %v47
  %v222 = vunpack.c.l.b16 %v48
  %v223 = vunpack.c.l.b16 %v49
  %v224 = vunpack.c.l.b16 %v50
  %v225 = vunpack.c.l.b16 %v51
  %v226 = vunpack.c.l.b16 %v52
  %v227 = vunpack.c.l.b16 %v53
  %v228 = vunpack.c.l.b16 %v54
  %v229 = vunpack.c.l.b16 %v55
  %v230 = vunpack.c.l.b16 %v56
  %v231 = vunpack.c.l.b16 %v57
  %v232 = vunpack.c.l.b16 %v58
  %v233 = vunpack.c.l.b16 %v59
  %v234 = vunpack.c.l.b16 %v60
  %v235 = vunpack.c.l.b16 %v61
  %v236 = vunpack.c.l.b16 %v62
  %v237 = vunpack.c.l.b16 %v63
  %v238 = vunpack.c.l.b16 %v64
  %v239 = vunpack.c.l.b16 %v65
  %v240 = vunpack.c.l.b16 %v66
  %v241 = vunpack.c.l.b16 %v67
  %v242 = vunpack.c.l.b16 %v68
  %v243 = vunpack.c.l.b16 %v69
  %v244 = vunpack.c.l.b16 %v70
  %v245 = vunpack.c.l.b16 %v71
  %v246 = vunpack.c.l.b16 %v72
  %v247 = vunpack.c.l.b16 %v73
  %v248 = vunpack.c.l.b16 %v74
  %v249 = vunpack.c.l.b16 %v75
  %v250 = vunpack.c.l.b16 %v76
  %v251 = vunpack.c.l.b16 %v77
  %v252 = vunpack.c.l.b16 %v78
  %v253 = vunpack.c.l.b16 %v79
  %v254 = vunpack.c.l.b16 %v80
  %v255 = vunpack.c.l.b16 %v81
  %v256 = vunpack.c.l.b16 %v82
  %v257 = vunpack.c.l.b16 %v83
  %v258 = vunpack.c.l.b16 %v84
  %v259 = vunpack.c.l.b16 %v85
  %v260 = vunpack.c.l.b16 %v86
  %v261 = vunpack.c.l.b16 %v87
  %v262 = vunpack.c.l.b16 %v88
  %v263 = vunpack.c.l.b16 %v89
  %v264 = vunpack.c.l.b16 %v90
  %v265 = vunpack.c.l.b16 %v91
  %v266 = vunpack.c.l.b16 %v92
  %v267 = vunpack.c.l.b16 %v93
  %v268 = vpack.c.b16 %v205, %v204
  %v269 = vpack.c.b16 %v207, %v206
  %v270 = vpack.c.b16 %v209, %v208
  %v271 = vpack.c.b16 %v211, %v210
  %v272 = vpack.c.b16 %v213, %v212
  %v273 = vpack.c.b16 %v215, %v214
  %v274 = vpack.c.b16 %v217, %v216
  %v275 = vpack.c.b16 %v219, %v218
  %v276 = vpack.c.b16 %v221, %v220
  %v277 = vpack.c.b16 %v223, %v222
  %v278 = vpack.c.b16 %v225, %v224
  %v279 = vpack.c.b16 %v227, %v226
  %v280 = vpack.c.b16 %v229, %v228
  %v281 = vpack.c.b16 %v231, %v230
  %v282 = vpack.c.b16 %v233, %v232
  %v283 = vpack.c.b16 %v235, %v234
  %v284 = vpack.c.b16 %v237, %v236
  %v285 = vpack.c.b16 %v239, %v238
  %v286 = vpack.c.b16 %v241, %v240
  %v287 = vpack.c.b16 %v243, %v242
  %v288 = vpack.c.b16 %v245, %v244
  %v289 = vpack.c.b16 %v247, %v246
  %v290 = vpack.c.b16 %v249, %v248
  %v291 = vpack.c.b16 %v251, %v250
  %v292 = vpack.c.b16 %v253, %v252
  %v293 = vpack.c.b16 %v255, %v254
  %v294 = vpack.c.b16 %v257, %v256
  %v295 = vpack.c.b16 %v259, %v258
  %v296 = vpack.c.b16 %v261, %v260
  %v297 = vpack.c.b16 %v263, %v262
  %v298 = vpack.c.b16 %v265, %v264
  %v299 = vpack.c.b16 %v267, %v266
  %332 = vmatprep.subr.bf16.mxu0 0
  %333 = vmatpush1.bf16.msra.mxu0 %v268
  %334 = vmatprep.subr.bf16.mxu0 0
  %335 = vmatpush1.bf16.msra.mxu0 %v269
  %336 = vmatprep.subr.bf16.mxu0 0
  %337 = vmatpush1.bf16.msra.mxu0 %v270
  %338 = vmatprep.subr.bf16.mxu0 0
  %339 = vmatpush1.bf16.msra.mxu0 %v271
  %340 = vmatprep.subr.bf16.mxu0 0
  %341 = vmatpush1.bf16.msra.mxu0 %v272
  %342 = vmatprep.subr.bf16.mxu0 0
  %343 = vmatpush1.bf16.msra.mxu0 %v273
  %344 = vmatprep.subr.bf16.mxu0 0
  %345 = vmatpush1.bf16.msra.mxu0 %v274
  %346 = vmatprep.subr.bf16.mxu0 0
  %347 = vmatpush1.bf16.msra.mxu0 %v275
  %348 = vmatprep.subr.bf16.mxu0 0
  %349 = vmatpush1.bf16.msra.mxu0 %v276
  %350 = vmatprep.subr.bf16.mxu0 0
  %351 = vmatpush1.bf16.msra.mxu0 %v277
  %352 = vmatprep.subr.bf16.mxu0 0
  %353 = vmatpush1.bf16.msra.mxu0 %v278
  %354 = vmatprep.subr.bf16.mxu0 0
  %355 = vmatpush1.bf16.msra.mxu0 %v279
  %356 = vmatprep.subr.bf16.mxu0 0
  %357 = vmatpush1.bf16.msra.mxu0 %v280
  %358 = vmatprep.subr.bf16.mxu0 0
  %359 = vmatpush1.bf16.msra.mxu0 %v281
  %360 = vmatprep.subr.bf16.mxu0 0
  %361 = vmatpush1.bf16.msra.mxu0 %v282
  %362 = vmatprep.subr.bf16.mxu0 0
  %363 = vmatpush1.bf16.msra.mxu0 %v283
  %364 = vmatprep.mubr.bf16.mxu0 %v125
  %365 = vmatmul.mubr.bf16.gmra.mrb[0].mxu0 %v124
  %v366 = vpop.f32.mrb[0].mxu0
  %v367 = vadd.f32 %v98, %v366
  %v368 = vpop.f32.mrb[0].mxu0
  %v369 = vpop.f32.mrb[0].mxu0
  %v370 = vadd.f32 %v98, %v369
  %v371 = vpop.f32.mrb[0].mxu0
  %372 = vmatprep.mubr.bf16.mxu0 %v129
  %373 = vmatmul.mubr.bf16.gmra.mrb[0].mxu0 %v128
  %v374 = vpop.f32.mrb[0].mxu0
  %v375 = vadd.f32 %v98, %v374
  %v376 = vpop.f32.mrb[0].mxu0
  %v377 = vpop.f32.mrb[0].mxu0
  %v378 = vadd.f32 %v98, %v377
  %v379 = vpop.f32.mrb[0].mxu0
  %380 = vdwg.mxu0
  %381 = vmatprep.subr.bf16.mxu0 0
  %382 = vmatpush1.bf16.msra.mxu0 %v284
  %383 = vmatprep.subr.bf16.mxu0 0
  %384 = vmatpush1.bf16.msra.mxu0 %v285
  %385 = vmatprep.subr.bf16.mxu0 0
  %386 = vmatpush1.bf16.msra.mxu0 %v286
  %387 = vmatprep.subr.bf16.mxu0 0
  %388 = vmatpush1.bf16.msra.mxu0 %v287
  %389 = vmatprep.subr.bf16.mxu0 0
  %390 = vmatpush1.bf16.msra.mxu0 %v288
  %391 = vmatprep.subr.bf16.mxu0 0
  %392 = vmatpush1.bf16.msra.mxu0 %v289
  %393 = vmatprep.subr.bf16.mxu0 0
  %394 = vmatpush1.bf16.msra.mxu0 %v290
  %395 = vmatprep.subr.bf16.mxu0 0
  %396 = vmatpush1.bf16.msra.mxu0 %v291
  %397 = vmatprep.subr.bf16.mxu0 0
  %398 = vmatpush1.bf16.msra.mxu0 %v292
  %399 = vmatprep.subr.bf16.mxu0 0
  %400 = vmatpush1.bf16.msra.mxu0 %v293
  %401 = vmatprep.subr.bf16.mxu0 0
  %402 = vmatpush1.bf16.msra.mxu0 %v294
  %403 = vmatprep.subr.bf16.mxu0 0
  %404 = vmatpush1.bf16.msra.mxu0 %v295
  %405 = vmatprep.subr.bf16.mxu0 0
  %406 = vmatpush1.bf16.msra.mxu0 %v296
  %407 = vmatprep.subr.bf16.mxu0 0
  %408 = vmatpush1.bf16.msra.mxu0 %v297
  %409 = vmatprep.subr.bf16.mxu0 0
  %410 = vmatpush1.bf16.msra.mxu0 %v298
  %411 = vmatprep.subr.bf16.mxu0 0
  %412 = vmatpush1.bf16.msra.mxu0 %v299
  %413 = vmatprep.mubr.bf16.mxu0 %v127
  %414 = vmatmul.mubr.bf16.gmra.mrb[0].mxu0 %v126
  %v415 = vpop.f32.mrb[0].mxu0
  %v416 = vadd.f32 %v367, %v415
  %v417 = vpop.f32.mrb[0].mxu0
  %v418 = vpop.f32.mrb[0].mxu0
  %v419 = vadd.f32 %v370, %v418
  %v420 = vpop.f32.mrb[0].mxu0
  %421 = vmatprep.mubr.bf16.mxu0 %v131
  %422 = vmatmul.mubr.bf16.gmra.mrb[0].mxu0 %v130
  %v423 = vpop.f32.mrb[0].mxu0
  %v424 = vadd.f32 %v375, %v423
  %v425 = vpop.f32.mrb[0].mxu0
  %v426 = vpop.f32.mrb[0].mxu0
  %v427 = vadd.f32 %v378, %v426
  %v428 = vpop.f32.mrb[0].mxu0
  %429 = vdwg.mxu0
  %v430 = vadd.f32 %v416, %v419
  %v431 = vadd.f32 %v430, %v424
  %v432 = vadd.f32 %v431, %v427
  %v433 = vrot.slane %v432, 4
  %v434 = vadd.f32 %v432, %v433
  %v435 = vrot.slane %v434, 2
  %v436 = vadd.f32 %v434, %v435
  %v437 = vrot.slane %v436, 1
  %v438 = vadd.f32 %v436, %v437
  %v439 = vmul.f32 %v21, 14.0
  %v440 = vsub.f32 %v438, %v439
  %v441 = vmul.f32 %v440, 0.055555556
  %v442 = vlaneseq
  %v443 = vshrl.u32 %v442, 7
  %v444 = vsub.s32 0, %v443
  %v445 = vrot.slane %v441, %v444
  %v446 = vsub.f32 %v416, %v445
  %v447 = vsub.f32 %v419, %v445
  %v448 = vsub.f32 %v424, %v445
  %v449 = vsub.f32 %v427, %v445
  %v450 = vsub.f32 %v21, %v441
  %v451 = vmul.f32 %v446, %v446
  %v452 = vmul.f32 %v447, %v447
  %v453 = vmul.f32 %v448, %v448
  %v454 = vmul.f32 %v449, %v449
  %v455 = vadd.f32 %v451, %v452
  %v456 = vadd.f32 %v455, %v453
  %v457 = vadd.f32 %v456, %v454
  %v458 = vrot.slane %v457, 4
  %v459 = vadd.f32 %v457, %v458
  %v460 = vrot.slane %v459, 2
  %v461 = vadd.f32 %v459, %v460
  %v462 = vrot.slane %v461, 1
  %v463 = vadd.f32 %v461, %v462
  %v464 = vmul.f32 %v450, %v450
  %v465 = vmul.f32 %v464, 14.0
  %v466 = vsub.f32 %v463, %v465
  %v467 = vmul.f32 %v466, 0.055555556
  %v468 = vmax.f32 %v467, 0.0
  %v469 = vadd.f32 %v468, 1e-05
  %v470 = vrsqrt.pop %v469
  %v471 = vld [vmem:[%s3] sm:$0x1]
  %v472 = vmul.f32 %v470, %v471
  %v473 = vlaneseq
  %v474 = vshrl.u32 %v473, 7
  %v475 = vsub.s32 0, %v474
  %v476 = vrot.slane %v472, %v475
  %v477 = vmul.f32 %v446, %v476
  %v478 = vmul.f32 %v447, %v476
  %v479 = vmul.f32 %v448, %v476
  %v480 = vmul.f32 %v449, %v476
  %v481 = vld [vmem:[%s4] sm:$0x1]
  %v483 = vlaneseq
  %v484 = vshrl.u32 %v483, 7
  %v485 = vsub.s32 0, %v484
  %v486 = vrot.slane %v481, %v485
  %v488 = vadd.f32 %v477, %v486
  %v489 = vadd.f32 %v478, %v486
  %v490 = vadd.f32 %v479, %v486
  %v491 = vadd.f32 %v480, %v486
  %vm492 = vcmp.gt.f32.partialorder %v488, 0.0
  %vm493 = vcmp.gt.f32.partialorder %v489, 0.0
  %vm494 = vcmp.gt.f32.partialorder %v490, 0.0
  %vm495 = vcmp.gt.f32.partialorder %v491, 0.0
  %v496 = vmul.f32 %v488, 0.2
  %v497 = vmul.f32 %v489, 0.2
  %v498 = vmul.f32 %v490, 0.2
  %v499 = vmul.f32 %v491, 0.2
  %v500 = vsel %vm492, %v488, %v496
  %v501 = vsel %vm493, %v489, %v497
  %v502 = vsel %vm494, %v490, %v498
  %v503 = vsel %vm495, %v491, %v499
  %v504 = vpack.c.bf16 %v501, %v500
  %v505 = vpack.c.bf16 %v503, %v502
  %v508 = vunpack.c.l.b16 %v504
  %v509 = vunpack.c.h.b16 %v504
  %v510 = vunpack.c.l.b16 %v505
  %v511 = vunpack.c.h.b16 %v505
  %v512 = vpack.c.b16 %v508, %v508
  %v513 = vpack.c.b16 %v509, %v509
  %v514 = vpack.c.b16 %v510, %v510
  %v515 = vpack.c.b16 %v511, %v511
  %520 = vst [vmem:[%s5] sm:$0xf] %v512
  %521 = vst [vmem:[%s5 + $0x4] sm:$0xf] %v513
  %522 = vst [vmem:[%s5 + $0x8] sm:$0xf] %v514
  %523 = vst [vmem:[%s5 + $0xc] sm:$0xf] %v515
  // Predicated region
  $region22: #{_lambda_.8} parent=0 // pred_check
    _
  $region23: #{_lambda_.8} parent=0 // pred_check_branch
    %525 = sbr.rel (0) target = $region25
  $region24: #{_lambda_.8} parent=0 // pred_region
    _
  $region25: #{_lambda_.8} parent=0 // pred_fallthru
    _
  // Predicated region
  $region26: #{_lambda_.8} parent=0 // pred_check
    _
  $region27: #{_lambda_.8} parent=0 // pred_check_branch
    %527 = sbr.rel (0) target = $region29
  $region28: #{_lambda_.8} parent=0 // pred_region
    _
  $region29: #{_lambda_.8} parent=0 // pred_fallthru
    _

// kernel: _lambda_.9
$region0: #{_lambda_.9}
  #allocation0 [shape = 'u32[]', space=smem, size = 0x4, offset = 0x4, fixed_abs, tag = 'smem constant byte address 0x4 - core index']
  #allocation1 [shape = 'u32[144,128]{1,0:T(1,128)}', space=vmem, size = 0x12000, scoped, tag = 'internal scratch']
  %s0 = inlined_call_operand.vmem [shape: bf16[16,1024], index: 0, kind: input, shape index: {}]
  %s1 = inlined_call_operand.vmem [shape: bf16[1024,128], index: 1, kind: input, shape index: {}]
  %s2 = inlined_call_operand.vmem [shape: f32[1,128], index: 2, kind: input, shape index: {}]
  %s3 = inlined_call_operand.vmem [shape: f32[16,128], index: 3, kind: output, shape index: {}]
  %s4 = sld [smem:[#allocation0]]
  $region22: #{_lambda_.9} parent=0
    _
  %s6 = ssub.s32 1, %s4
  %s7 = scalar_select 0, %s6, %s4
  // Predicated region
  $region2: #{_lambda_.9} parent=0 // pred_check
    _
  $region3: #{_lambda_.9} parent=0 // pred_check_branch
    %9 = sbr.rel (0) target = $region5
  $region4: #{_lambda_.9} parent=0 // pred_region
    _
  $region5: #{_lambda_.9} parent=0 // pred_fallthru
    _
  // Predicated region
  $region6: #{_lambda_.9} parent=0 // pred_check
    _
  $region7: #{_lambda_.9} parent=0 // pred_check_branch
    %11 = sbr.rel (0) target = $region9
  $region8: #{_lambda_.9} parent=0 // pred_region
    _
  $region9: #{_lambda_.9} parent=0 // pred_fallthru
    _
  // Predicated region
  $region10: #{_lambda_.9} parent=0 // pred_check
    _
  $region11: #{_lambda_.9} parent=0 // pred_check_branch
    %13 = sbr.rel (0) target = $region13
  $region12: #{_lambda_.9} parent=0 // pred_region
    _
  $region13: #{_lambda_.9} parent=0 // pred_fallthru
    _
  %v15 = vld [vmem:[%s0] sm:$0xff]
  %v16 = vld [vmem:[%s0 + $0x8] sm:$0xff]
  %v17 = vld [vmem:[%s0 + $0x10] sm:$0xff]
  %v18 = vld [vmem:[%s0 + $0x18] sm:$0xff]
  %v19 = vld [vmem:[%s0 + $0x20] sm:$0xff]
  %v20 = vld [vmem:[%s0 + $0x28] sm:$0xff]
  %v21 = vld [vmem:[%s0 + $0x30] sm:$0xff]
  %v22 = vld [vmem:[%s0 + $0x38] sm:$0xff]
  %v23 = vld [vmem:[%s1] sm:$0xf]
  %v24 = vld [vmem:[%s1 + $0x4] sm:$0xf]
  %v25 = vld [vmem:[%s1 + $0x8] sm:$0xf]
  %v26 = vld [vmem:[%s1 + $0xc] sm:$0xf]
  %v27 = vld [vmem:[%s1 + $0x10] sm:$0xf]
  %v28 = vld [vmem:[%s1 + $0x14] sm:$0xf]
  %v29 = vld [vmem:[%s1 + $0x18] sm:$0xf]
  %v30 = vld [vmem:[%s1 + $0x1c] sm:$0xf]
  %v31 = vld [vmem:[%s1 + $0x20] sm:$0xf]
  %v32 = vld [vmem:[%s1 + $0x24] sm:$0xf]
  %v33 = vld [vmem:[%s1 + $0x28] sm:$0xf]
  %v34 = vld [vmem:[%s1 + $0x2c] sm:$0xf]
  %v35 = vld [vmem:[%s1 + $0x30] sm:$0xf]
  %v36 = vld [vmem:[%s1 + $0x34] sm:$0xf]
  %v37 = vld [vmem:[%s1 + $0x38] sm:$0xf]
  %v38 = vld [vmem:[%s1 + $0x3c] sm:$0xf]
  %v39 = vld [vmem:[%s1 + $0x40] sm:$0xf]
  %v40 = vld [vmem:[%s1 + $0x44] sm:$0xf]
  %v41 = vld [vmem:[%s1 + $0x48] sm:$0xf]
  %v42 = vld [vmem:[%s1 + $0x4c] sm:$0xf]
  %v43 = vld [vmem:[%s1 + $0x50] sm:$0xf]
  %v44 = vld [vmem:[%s1 + $0x54] sm:$0xf]
  %v45 = vld [vmem:[%s1 + $0x58] sm:$0xf]
  %v46 = vld [vmem:[%s1 + $0x5c] sm:$0xf]
  %v47 = vld [vmem:[%s1 + $0x60] sm:$0xf]
  %v48 = vld [vmem:[%s1 + $0x64] sm:$0xf]
  %v49 = vld [vmem:[%s1 + $0x68] sm:$0xf]
  %v50 = vld [vmem:[%s1 + $0x6c] sm:$0xf]
  %v51 = vld [vmem:[%s1 + $0x70] sm:$0xf]
  %v52 = vld [vmem:[%s1 + $0x74] sm:$0xf]
  %v53 = vld [vmem:[%s1 + $0x78] sm:$0xf]
  %v54 = vld [vmem:[%s1 + $0x7c] sm:$0xf]
  %v55 = vld [vmem:[%s1 + $0x80] sm:$0xf]
  %v56 = vld [vmem:[%s1 + $0x84] sm:$0xf]
  %v57 = vld [vmem:[%s1 + $0x88] sm:$0xf]
  %v58 = vld [vmem:[%s1 + $0x8c] sm:$0xf]
  %v59 = vld [vmem:[%s1 + $0x90] sm:$0xf]
  %v60 = vld [vmem:[%s1 + $0x94] sm:$0xf]
  %v61 = vld [vmem:[%s1 + $0x98] sm:$0xf]
  %v62 = vld [vmem:[%s1 + $0x9c] sm:$0xf]
  %v63 = vld [vmem:[%s1 + $0xa0] sm:$0xf]
  %v64 = vld [vmem:[%s1 + $0xa4] sm:$0xf]
  %v65 = vld [vmem:[%s1 + $0xa8] sm:$0xf]
  %v66 = vld [vmem:[%s1 + $0xac] sm:$0xf]
  %v67 = vld [vmem:[%s1 + $0xb0] sm:$0xf]
  %v68 = vld [vmem:[%s1 + $0xb4] sm:$0xf]
  %v69 = vld [vmem:[%s1 + $0xb8] sm:$0xf]
  %v70 = vld [vmem:[%s1 + $0xbc] sm:$0xf]
  %v71 = vld [vmem:[%s1 + $0xc0] sm:$0xf]
  %v72 = vld [vmem:[%s1 + $0xc4] sm:$0xf]
  %v73 = vld [vmem:[%s1 + $0xc8] sm:$0xf]
  %v74 = vld [vmem:[%s1 + $0xcc] sm:$0xf]
  %v75 = vld [vmem:[%s1 + $0xd0] sm:$0xf]
  %v76 = vld [vmem:[%s1 + $0xd4] sm:$0xf]
  %v77 = vld [vmem:[%s1 + $0xd8] sm:$0xf]
  %v78 = vld [vmem:[%s1 + $0xdc] sm:$0xf]
  %v79 = vld [vmem:[%s1 + $0xe0] sm:$0xf]
  %v80 = vld [vmem:[%s1 + $0xe4] sm:$0xf]
  %v81 = vld [vmem:[%s1 + $0xe8] sm:$0xf]
  %v82 = vld [vmem:[%s1 + $0xec] sm:$0xf]
  %v83 = vld [vmem:[%s1 + $0xf0] sm:$0xf]
  %v84 = vld [vmem:[%s1 + $0xf4] sm:$0xf]
  %v85 = vld [vmem:[%s1 + $0xf8] sm:$0xf]
  %v86 = vld [vmem:[%s1 + $0xfc] sm:$0xf]
  %v87 = vld [vmem:[%s1 + $0x100] sm:$0xf]
  %v88 = vld [vmem:[%s1 + $0x104] sm:$0xf]
  %v89 = vld [vmem:[%s1 + $0x108] sm:$0xf]
  %v90 = vld [vmem:[%s1 + $0x10c] sm:$0xf]
  %v91 = vld [vmem:[%s1 + $0x110] sm:$0xf]
  %v92 = vld [vmem:[%s1 + $0x114] sm:$0xf]
  %v93 = vld [vmem:[%s1 + $0x118] sm:$0xf]
  %v94 = vld [vmem:[%s1 + $0x11c] sm:$0xf]
  %v95 = vld [vmem:[%s1 + $0x120] sm:$0xf]
  %v96 = vld [vmem:[%s1 + $0x124] sm:$0xf]
  %v97 = vld [vmem:[%s1 + $0x128] sm:$0xf]
  %v98 = vld [vmem:[%s1 + $0x12c] sm:$0xf]
  %v99 = vld [vmem:[%s1 + $0x130] sm:$0xf]
  %v100 = vld [vmem:[%s1 + $0x134] sm:$0xf]
  %v101 = vld [vmem:[%s1 + $0x138] sm:$0xf]
  %v102 = vld [vmem:[%s1 + $0x13c] sm:$0xf]
  %v103 = vld [vmem:[%s1 + $0x140] sm:$0xf]
  %v104 = vld [vmem:[%s1 + $0x144] sm:$0xf]
  %v105 = vld [vmem:[%s1 + $0x148] sm:$0xf]
  %v106 = vld [vmem:[%s1 + $0x14c] sm:$0xf]
  %v107 = vld [vmem:[%s1 + $0x150] sm:$0xf]
  %v108 = vld [vmem:[%s1 + $0x154] sm:$0xf]
  %v109 = vld [vmem:[%s1 + $0x158] sm:$0xf]
  %v110 = vld [vmem:[%s1 + $0x15c] sm:$0xf]
  %v111 = vld [vmem:[%s1 + $0x160] sm:$0xf]
  %v112 = vld [vmem:[%s1 + $0x164] sm:$0xf]
  %v113 = vld [vmem:[%s1 + $0x168] sm:$0xf]
  %v114 = vld [vmem:[%s1 + $0x16c] sm:$0xf]
  %v115 = vld [vmem:[%s1 + $0x170] sm:$0xf]
  %v116 = vld [vmem:[%s1 + $0x174] sm:$0xf]
  %v117 = vld [vmem:[%s1 + $0x178] sm:$0xf]
  %v118 = vld [vmem:[%s1 + $0x17c] sm:$0xf]
  %v119 = vld [vmem:[%s1 + $0x180] sm:$0xf]
  %v120 = vld [vmem:[%s1 + $0x184] sm:$0xf]
  %v121 = vld [vmem:[%s1 + $0x188] sm:$0xf]
  %v122 = vld [vmem:[%s1 + $0x18c] sm:$0xf]
  %v123 = vld [vmem:[%s1 + $0x190] sm:$0xf]
  %v124 = vld [vmem:[%s1 + $0x194] sm:$0xf]
  %v125 = vld [vmem:[%s1 + $0x198] sm:$0xf]
  %v126 = vld [vmem:[%s1 + $0x19c] sm:$0xf]
  %v127 = vld [vmem:[%s1 + $0x1a0] sm:$0xf]
  %v128 = vld [vmem:[%s1 + $0x1a4] sm:$0xf]
  %v129 = vld [vmem:[%s1 + $0x1a8] sm:$0xf]
  %v130 = vld [vmem:[%s1 + $0x1ac] sm:$0xf]
  %v131 = vld [vmem:[%s1 + $0x1b0] sm:$0xf]
  %v132 = vld [vmem:[%s1 + $0x1b4] sm:$0xf]
  %v133 = vld [vmem:[%s1 + $0x1b8] sm:$0xf]
  %v134 = vld [vmem:[%s1 + $0x1bc] sm:$0xf]
  %v135 = vld [vmem:[%s1 + $0x1c0] sm:$0xf]
  %v136 = vld [vmem:[%s1 + $0x1c4] sm:$0xf]
  %v137 = vld [vmem:[%s1 + $0x1c8] sm:$0xf]
  %v138 = vld [vmem:[%s1 + $0x1cc] sm:$0xf]
  %v139 = vld [vmem:[%s1 + $0x1d0] sm:$0xf]
  %v140 = vld [vmem:[%s1 + $0x1d4] sm:$0xf]
  %v141 = vld [vmem:[%s1 + $0x1d8] sm:$0xf]
  %v142 = vld [vmem:[%s1 + $0x1dc] sm:$0xf]
  %v143 = vld [vmem:[%s1 + $0x1e0] sm:$0xf]
  %v144 = vld [vmem:[%s1 + $0x1e4] sm:$0xf]
  %v145 = vld [vmem:[%s1 + $0x1e8] sm:$0xf]
  %v146 = vld [vmem:[%s1 + $0x1ec] sm:$0xf]
  %v147 = vld [vmem:[%s1 + $0x1f0] sm:$0xf]
  %v148 = vld [vmem:[%s1 + $0x1f4] sm:$0xf]
  %v149 = vld [vmem:[%s1 + $0x1f8] sm:$0xf]
  %v150 = vld [vmem:[%s1 + $0x1fc] sm:$0xf]
  %v151 = vld [vmem:[%s2] sm:$0x1]
  %v153 = vlaneseq
  %v154 = vshrl.u32 %v153, 7
  %v155 = vsub.s32 0, %v154
  %v156 = vrot.slane %v151, %v155
  %v166 = vunpack.c.l.b16 %v15
  %v167 = vunpack.c.h.b16 %v15
  %v168 = vunpack.c.l.b16 %v16
  %v169 = vunpack.c.h.b16 %v16
  %v170 = vunpack.c.l.b16 %v17
  %v171 = vunpack.c.h.b16 %v17
  %v172 = vunpack.c.l.b16 %v18
  %v173 = vunpack.c.h.b16 %v18
  %v174 = vunpack.c.l.b16 %v19
  %v175 = vunpack.c.h.b16 %v19
  %v176 = vunpack.c.l.b16 %v20
  %v177 = vunpack.c.h.b16 %v20
  %v178 = vunpack.c.l.b16 %v21
  %v179 = vunpack.c.h.b16 %v21
  %v180 = vunpack.c.l.b16 %v22
  %v181 = vunpack.c.h.b16 %v22
  %v182 = vpack.c.b16 %v174, %v166
  %v183 = vpack.c.b16 %v175, %v167
  %v184 = vpack.c.b16 %v176, %v168
  %v185 = vpack.c.b16 %v177, %v169
  %v186 = vpack.c.b16 %v178, %v170
  %v187 = vpack.c.b16 %v179, %v171
  %v188 = vpack.c.b16 %v180, %v172
  %v189 = vpack.c.b16 %v181, %v173
  %v326 = vunpack.c.l.b16 %v23
  %v327 = vunpack.c.l.b16 %v24
  %v328 = vunpack.c.l.b16 %v25
  %v329 = vunpack.c.l.b16 %v26
  %v330 = vunpack.c.l.b16 %v27
  %v331 = vunpack.c.l.b16 %v28
  %v332 = vunpack.c.l.b16 %v29
  %v333 = vunpack.c.l.b16 %v30
  %v334 = vunpack.c.l.b16 %v31
  %v335 = vunpack.c.l.b16 %v32
  %v336 = vunpack.c.l.b16 %v33
  %v337 = vunpack.c.l.b16 %v34
  %v338 = vunpack.c.l.b16 %v35
  %v339 = vunpack.c.l.b16 %v36
  %v340 = vunpack.c.l.b16 %v37
  %v341 = vunpack.c.l.b16 %v38
  %v342 = vunpack.c.l.b16 %v39
  %v343 = vunpack.c.l.b16 %v40
  %v344 = vunpack.c.l.b16 %v41
  %v345 = vunpack.c.l.b16 %v42
  %v346 = vunpack.c.l.b16 %v43
  %v347 = vunpack.c.l.b16 %v44
  %v348 = vunpack.c.l.b16 %v45
  %v349 = vunpack.c.l.b16 %v46
  %v350 = vunpack.c.l.b16 %v47
  %v351 = vunpack.c.l.b16 %v48
  %v352 = vunpack.c.l.b16 %v49
  %v353 = vunpack.c.l.b16 %v50
  %v354 = vunpack.c.l.b16 %v51
  %v355 = vunpack.c.l.b16 %v52
  %v356 = vunpack.c.l.b16 %v53
  %v357 = vunpack.c.l.b16 %v54
  %v358 = vunpack.c.l.b16 %v55
  %v359 = vunpack.c.l.b16 %v56
  %v360 = vunpack.c.l.b16 %v57
  %v361 = vunpack.c.l.b16 %v58
  %v362 = vunpack.c.l.b16 %v59
  %v363 = vunpack.c.l.b16 %v60
  %v364 = vunpack.c.l.b16 %v61
  %v365 = vunpack.c.l.b16 %v62
  %v366 = vunpack.c.l.b16 %v63
  %v367 = vunpack.c.l.b16 %v64
  %v368 = vunpack.c.l.b16 %v65
  %v369 = vunpack.c.l.b16 %v66
  %v370 = vunpack.c.l.b16 %v67
  %v371 = vunpack.c.l.b16 %v68
  %v372 = vunpack.c.l.b16 %v69
  %v373 = vunpack.c.l.b16 %v70
  %v374 = vunpack.c.l.b16 %v71
  %v375 = vunpack.c.l.b16 %v72
  %v376 = vunpack.c.l.b16 %v73
  %v377 = vunpack.c.l.b16 %v74
  %v378 = vunpack.c.l.b16 %v75
  %v379 = vunpack.c.l.b16 %v76
  %v380 = vunpack.c.l.b16 %v77
  %v381 = vunpack.c.l.b16 %v78
  %v382 = vunpack.c.l.b16 %v79
  %v383 = vunpack.c.l.b16 %v80
  %v384 = vunpack.c.l.b16 %v81
  %v385 = vunpack.c.l.b16 %v82
  %v386 = vunpack.c.l.b16 %v83
  %v387 = vunpack.c.l.b16 %v84
  %v388 = vunpack.c.l.b16 %v85
  %v389 = vunpack.c.l.b16 %v86
  %v390 = vunpack.c.l.b16 %v87
  %v391 = vunpack.c.l.b16 %v88
  %v392 = vunpack.c.l.b16 %v89
  %v393 = vunpack.c.l.b16 %v90
  %v394 = vunpack.c.l.b16 %v91
  %v395 = vunpack.c.l.b16 %v92
  %v396 = vunpack.c.l.b16 %v93
  %v397 = vunpack.c.l.b16 %v94
  %v398 = vunpack.c.l.b16 %v95
  %v399 = vunpack.c.l.b16 %v96
  %v400 = vunpack.c.l.b16 %v97
  %v401 = vunpack.c.l.b16 %v98
  %v402 = vunpack.c.l.b16 %v99
  %v403 = vunpack.c.l.b16 %v100
  %v404 = vunpack.c.l.b16 %v101
  %v405 = vunpack.c.l.b16 %v102
  %v406 = vunpack.c.l.b16 %v103
  %v407 = vunpack.c.l.b16 %v104
  %v408 = vunpack.c.l.b16 %v105
  %v409 = vunpack.c.l.b16 %v106
  %v410 = vunpack.c.l.b16 %v107
  %v411 = vunpack.c.l.b16 %v108
  %v412 = vunpack.c.l.b16 %v109
  %v413 = vunpack.c.l.b16 %v110
  %v414 = vunpack.c.l.b16 %v111
  %v415 = vunpack.c.l.b16 %v112
  %v416 = vunpack.c.l.b16 %v113
  %v417 = vunpack.c.l.b16 %v114
  %v418 = vunpack.c.l.b16 %v115
  %v419 = vunpack.c.l.b16 %v116
  %v420 = vunpack.c.l.b16 %v117
  %v421 = vunpack.c.l.b16 %v118
  %v422 = vunpack.c.l.b16 %v119
  %v423 = vunpack.c.l.b16 %v120
  %v424 = vunpack.c.l.b16 %v121
  %v425 = vunpack.c.l.b16 %v122
  %v426 = vunpack.c.l.b16 %v123
  %v427 = vunpack.c.l.b16 %v124
  %v428 = vunpack.c.l.b16 %v125
  %v429 = vunpack.c.l.b16 %v126
  %v430 = vunpack.c.l.b16 %v127
  %v431 = vunpack.c.l.b16 %v128
  %v432 = vunpack.c.l.b16 %v129
  %v433 = vunpack.c.l.b16 %v130
  %v434 = vunpack.c.l.b16 %v131
  %v435 = vunpack.c.l.b16 %v132
  %v436 = vunpack.c.l.b16 %v133
  %v437 = vunpack.c.l.b16 %v134
  %v438 = vunpack.c.l.b16 %v135
  %v439 = vunpack.c.l.b16 %v136
  %v440 = vunpack.c.l.b16 %v137
  %v441 = vunpack.c.l.b16 %v138
  %v442 = vunpack.c.l.b16 %v139
  %v443 = vunpack.c.l.b16 %v140
  %v444 = vunpack.c.l.b16 %v141
  %v445 = vunpack.c.l.b16 %v142
  %v446 = vunpack.c.l.b16 %v143
  %v447 = vunpack.c.l.b16 %v144
  %v448 = vunpack.c.l.b16 %v145
  %v449 = vunpack.c.l.b16 %v146
  %v450 = vunpack.c.l.b16 %v147
  %v451 = vunpack.c.l.b16 %v148
  %v452 = vunpack.c.l.b16 %v149
  %v453 = vunpack.c.l.b16 %v150
  %v454 = vpack.c.b16 %v327, %v326
  %v455 = vpack.c.b16 %v329, %v328
  %v456 = vpack.c.b16 %v331, %v330
  %v457 = vpack.c.b16 %v333, %v332
  %v458 = vpack.c.b16 %v335, %v334
  %v459 = vpack.c.b16 %v337, %v336
  %v460 = vpack.c.b16 %v339, %v338
  %v461 = vpack.c.b16 %v341, %v340
  %v462 = vpack.c.b16 %v343, %v342
  %v463 = vpack.c.b16 %v345, %v344
  %v464 = vpack.c.b16 %v347, %v346
  %v465 = vpack.c.b16 %v349, %v348
  %v466 = vpack.c.b16 %v351, %v350
  %v467 = vpack.c.b16 %v353, %v352
  %v468 = vpack.c.b16 %v355, %v354
  %v469 = vpack.c.b16 %v357, %v356
  %v470 = vpack.c.b16 %v359, %v358
  %v471 = vpack.c.b16 %v361, %v360
  %v472 = vpack.c.b16 %v363, %v362
  %v473 = vpack.c.b16 %v365, %v364
  %v474 = vpack.c.b16 %v367, %v366
  %v475 = vpack.c.b16 %v369, %v368
  %v476 = vpack.c.b16 %v371, %v370
  %v477 = vpack.c.b16 %v373, %v372
  %v478 = vpack.c.b16 %v375, %v374
  %v479 = vpack.c.b16 %v377, %v376
  %v480 = vpack.c.b16 %v379, %v378
  %v481 = vpack.c.b16 %v381, %v380
  %v482 = vpack.c.b16 %v383, %v382
  %v483 = vpack.c.b16 %v385, %v384
  %v484 = vpack.c.b16 %v387, %v386
  %v485 = vpack.c.b16 %v389, %v388
  %v486 = vpack.c.b16 %v391, %v390
  %v487 = vpack.c.b16 %v393, %v392
  %v488 = vpack.c.b16 %v395, %v394
  %v489 = vpack.c.b16 %v397, %v396
  %v490 = vpack.c.b16 %v399, %v398
  %v491 = vpack.c.b16 %v401, %v400
  %v492 = vpack.c.b16 %v403, %v402
  %v493 = vpack.c.b16 %v405, %v404
  %v494 = vpack.c.b16 %v407, %v406
  %v495 = vpack.c.b16 %v409, %v408
  %v496 = vpack.c.b16 %v411, %v410
  %v497 = vpack.c.b16 %v413, %v412
  %v498 = vpack.c.b16 %v415, %v414
  %v499 = vpack.c.b16 %v417, %v416
  %v500 = vpack.c.b16 %v419, %v418
  %v501 = vpack.c.b16 %v421, %v420
  %v502 = vpack.c.b16 %v423, %v422
  %v503 = vpack.c.b16 %v425, %v424
  %v504 = vpack.c.b16 %v427, %v426
  %v505 = vpack.c.b16 %v429, %v428
  %v506 = vpack.c.b16 %v431, %v430
  %v507 = vpack.c.b16 %v433, %v432
  %v508 = vpack.c.b16 %v435, %v434
  %v509 = vpack.c.b16 %v437, %v436
  %v510 = vpack.c.b16 %v439, %v438
  %v511 = vpack.c.b16 %v441, %v440
  %v512 = vpack.c.b16 %v443, %v442
  %v513 = vpack.c.b16 %v445, %v444
  %v514 = vpack.c.b16 %v447, %v446
  %v515 = vpack.c.b16 %v449, %v448
  %v516 = vpack.c.b16 %v451, %v450
  %v517 = vpack.c.b16 %v453, %v452
  %582 = vmatprep.subr.bf16.mxu0 0
  %583 = vmatpush1.bf16.msra.mxu0 %v454
  %584 = vmatprep.subr.bf16.mxu0 0
  %585 = vmatpush1.bf16.msra.mxu0 %v455
  %586 = vmatprep.subr.bf16.mxu0 0
  %587 = vmatpush1.bf16.msra.mxu0 %v456
  %588 = vmatprep.subr.bf16.mxu0 0
  %589 = vmatpush1.bf16.msra.mxu0 %v457
  %590 = vmatprep.subr.bf16.mxu0 0
  %591 = vmatpush1.bf16.msra.mxu0 %v458
  %592 = vmatprep.subr.bf16.mxu0 0
  %593 = vmatpush1.bf16.msra.mxu0 %v459
  %594 = vmatprep.subr.bf16.mxu0 0
  %595 = vmatpush1.bf16.msra.mxu0 %v460
  %596 = vmatprep.subr.bf16.mxu0 0
  %597 = vmatpush1.bf16.msra.mxu0 %v461
  %598 = vmatprep.subr.bf16.mxu0 0
  %599 = vmatpush1.bf16.msra.mxu0 %v462
  %600 = vmatprep.subr.bf16.mxu0 0
  %601 = vmatpush1.bf16.msra.mxu0 %v463
  %602 = vmatprep.subr.bf16.mxu0 0
  %603 = vmatpush1.bf16.msra.mxu0 %v464
  %604 = vmatprep.subr.bf16.mxu0 0
  %605 = vmatpush1.bf16.msra.mxu0 %v465
  %606 = vmatprep.subr.bf16.mxu0 0
  %607 = vmatpush1.bf16.msra.mxu0 %v466
  %608 = vmatprep.subr.bf16.mxu0 0
  %609 = vmatpush1.bf16.msra.mxu0 %v467
  %610 = vmatprep.subr.bf16.mxu0 0
  %611 = vmatpush1.bf16.msra.mxu0 %v468
  %612 = vmatprep.subr.bf16.mxu0 0
  %613 = vmatpush1.bf16.msra.mxu0 %v469
  %614 = vmatprep.mubr.bf16.mxu0 %v183
  %615 = vmatmul.mubr.bf16.gmra.mrb[0].mxu0 %v182
  %v616 = vpop.f32.mrb[0].mxu0
  %v617 = vadd.f32 %v156, %v616
  %v618 = vpop.f32.mrb[0].mxu0
  %v619 = vpop.f32.mrb[0].mxu0
  %v620 = vadd.f32 %v156, %v619
  %v621 = vpop.f32.mrb[0].mxu0
  %622 = vdwg.mxu0
  %623 = vmatprep.subr.bf16.mxu0 0
  %624 = vmatpush1.bf16.msra.mxu0 %v470
  %625 = vmatprep.subr.bf16.mxu0 0
  %626 = vmatpush1.bf16.msra.mxu0 %v471
  %627 = vmatprep.subr.bf16.mxu0 0
  %628 = vmatpush1.bf16.msra.mxu0 %v472
  %629 = vmatprep.subr.bf16.mxu0 0
  %630 = vmatpush1.bf16.msra.mxu0 %v473
  %631 = vmatprep.subr.bf16.mxu0 0
  %632 = vmatpush1.bf16.msra.mxu0 %v474
  %633 = vmatprep.subr.bf16.mxu0 0
  %634 = vmatpush1.bf16.msra.mxu0 %v475
  %635 = vmatprep.subr.bf16.mxu0 0
  %636 = vmatpush1.bf16.msra.mxu0 %v476
  %637 = vmatprep.subr.bf16.mxu0 0
  %638 = vmatpush1.bf16.msra.mxu0 %v477
  %639 = vmatprep.subr.bf16.mxu0 0
  %640 = vmatpush1.bf16.msra.mxu0 %v478
  %641 = vmatprep.subr.bf16.mxu0 0
  %642 = vmatpush1.bf16.msra.mxu0 %v479
  %643 = vmatprep.subr.bf16.mxu0 0
  %644 = vmatpush1.bf16.msra.mxu0 %v480
  %645 = vmatprep.subr.bf16.mxu0 0
  %646 = vmatpush1.bf16.msra.mxu0 %v481
  %647 = vmatprep.subr.bf16.mxu0 0
  %648 = vmatpush1.bf16.msra.mxu0 %v482
  %649 = vmatprep.subr.bf16.mxu0 0
  %650 = vmatpush1.bf16.msra.mxu0 %v483
  %651 = vmatprep.subr.bf16.mxu0 0
  %652 = vmatpush1.bf16.msra.mxu0 %v484
  %653 = vmatprep.subr.bf16.mxu0 0
  %654 = vmatpush1.bf16.msra.mxu0 %v485
  %655 = vmatprep.mubr.bf16.mxu0 %v185
  %656 = vmatmul.mubr.bf16.gmra.mrb[0].mxu0 %v184
  %v657 = vpop.f32.mrb[0].mxu0
  %v658 = vadd.f32 %v617, %v657
  %v659 = vpop.f32.mrb[0].mxu0
  %v660 = vpop.f32.mrb[0].mxu0
  %v661 = vadd.f32 %v620, %v660
  %v662 = vpop.f32.mrb[0].mxu0
  %663 = vdwg.mxu0
  %664 = vmatprep.subr.bf16.mxu0 0
  %665 = vmatpush1.bf16.msra.mxu0 %v486
  %666 = vmatprep.subr.bf16.mxu0 0
  %667 = vmatpush1.bf16.msra.mxu0 %v487
  %668 = vmatprep.subr.bf16.mxu0 0
  %669 = vmatpush1.bf16.msra.mxu0 %v488
  %670 = vmatprep.subr.bf16.mxu0 0
  %671 = vmatpush1.bf16.msra.mxu0 %v489
  %672 = vmatprep.subr.bf16.mxu0 0
  %673 = vmatpush1.bf16.msra.mxu0 %v490
  %674 = vmatprep.subr.bf16.mxu0 0
  %675 = vmatpush1.bf16.msra.mxu0 %v491
  %676 = vmatprep.subr.bf16.mxu0 0
  %677 = vmatpush1.bf16.msra.mxu0 %v492
  %678 = vmatprep.subr.bf16.mxu0 0
  %679 = vmatpush1.bf16.msra.mxu0 %v493
  %680 = vmatprep.subr.bf16.mxu0 0
  %681 = vmatpush1.bf16.msra.mxu0 %v494
  %682 = vmatprep.subr.bf16.mxu0 0
  %683 = vmatpush1.bf16.msra.mxu0 %v495
  %684 = vmatprep.subr.bf16.mxu0 0
  %685 = vmatpush1.bf16.msra.mxu0 %v496
  %686 = vmatprep.subr.bf16.mxu0 0
  %687 = vmatpush1.bf16.msra.mxu0 %v497
  %688 = vmatprep.subr.bf16.mxu0 0
  %689 = vmatpush1.bf16.msra.mxu0 %v498
  %690 = vmatprep.subr.bf16.mxu0 0
  %691 = vmatpush1.bf16.msra.mxu0 %v499
  %692 = vmatprep.subr.bf16.mxu0 0
  %693 = vmatpush1.bf16.msra.mxu0 %v500
  %694 = vmatprep.subr.bf16.mxu0 0
  %695 = vmatpush1.bf16.msra.mxu0 %v501
  %696 = vmatprep.mubr.bf16.mxu0 %v187
  %697 = vmatmul.mubr.bf16.gmra.mrb[0].mxu0 %v186
  %v698 = vpop.f32.mrb[0].mxu0
  %v699 = vadd.f32 %v658, %v698
  %v700 = vpop.f32.mrb[0].mxu0
  %v701 = vpop.f32.mrb[0].mxu0
  %v702 = vadd.f32 %v661, %v701
  %v703 = vpop.f32.mrb[0].mxu0
  %704 = vdwg.mxu0
  %705 = vmatprep.subr.bf16.mxu0 0
  %706 = vmatpush1.bf16.msra.mxu0 %v502
  %707 = vmatprep.subr.bf16.mxu0 0
  %708 = vmatpush1.bf16.msra.mxu0 %v503
  %709 = vmatprep.subr.bf16.mxu0 0
  %710 = vmatpush1.bf16.msra.mxu0 %v504
  %711 = vmatprep.subr.bf16.mxu0 0
  %712 = vmatpush1.bf16.msra.mxu0 %v505
  %713 = vmatprep.subr.bf16.mxu0 0
  %714 = vmatpush1.bf16.msra.mxu0 %v506
  %715 = vmatprep.subr.bf16.mxu0 0
  %716 = vmatpush1.bf16.msra.mxu0 %v507
  %717 = vmatprep.subr.bf16.mxu0 0
  %718 = vmatpush1.bf16.msra.mxu0 %v508
  %719 = vmatprep.subr.bf16.mxu0 0
  %720 = vmatpush1.bf16.msra.mxu0 %v509
  %721 = vmatprep.subr.bf16.mxu0 0
  %722 = vmatpush1.bf16.msra.mxu0 %v510
  %723 = vmatprep.subr.bf16.mxu0 0
  %724 = vmatpush1.bf16.msra.mxu0 %v511
  %725 = vmatprep.subr.bf16.mxu0 0
  %726 = vmatpush1.bf16.msra.mxu0 %v512
  %727 = vmatprep.subr.bf16.mxu0 0
  %728 = vmatpush1.bf16.msra.mxu0 %v513
  %729 = vmatprep.subr.bf16.mxu0 0
  %730 = vmatpush1.bf16.msra.mxu0 %v514
  %731 = vmatprep.subr.bf16.mxu0 0
  %732 = vmatpush1.bf16.msra.mxu0 %v515
  %733 = vmatprep.subr.bf16.mxu0 0
  %734 = vmatpush1.bf16.msra.mxu0 %v516
  %735 = vmatprep.subr.bf16.mxu0 0
  %736 = vmatpush1.bf16.msra.mxu0 %v517
  %737 = vmatprep.mubr.bf16.mxu0 %v189
  %738 = vmatmul.mubr.bf16.gmra.mrb[0].mxu0 %v188
  %v739 = vpop.f32.mrb[0].mxu0
  %v740 = vadd.f32 %v699, %v739
  %v741 = vpop.f32.mrb[0].mxu0
  %v742 = vpop.f32.mrb[0].mxu0
  %v743 = vadd.f32 %v702, %v742
  %v744 = vpop.f32.mrb[0].mxu0
  %745 = vdwg.mxu0
  %746 = vst [vmem:[%s3] sm:$0xff] %v740
  %747 = vst [vmem:[%s3 + $0x8] sm:$0xff] %v743
  // Predicated region
  $region14: #{_lambda_.9} parent=0 // pred_check
    _
  $region15: #{_lambda_.9} parent=0 // pred_check_branch
    %749 = sbr.rel (0) target = $region17
  $region16: #{_lambda_.9} parent=0 // pred_region
    _
  $region17: #{_lambda_.9} parent=0 // pred_fallthru
    _
  // Predicated region
  $region18: #{_lambda_.9} parent=0 // pred_check
    _
  $region19: #{_lambda_.9} parent=0 // pred_check_branch
    %751 = sbr.rel (0) target = $region21
  $region20: #{_lambda_.9} parent=0 // pred_region
    _
  $region21: #{_lambda_.9} parent=0 // pred_fallthru
    _

</llo_original>
